<compile_context>
chip_gen: v6e
topology: v6e:2x2x1
jax: 0.10.0
libtpu: 0.0.40
codegen_flags: <defaults>
</compile_context>

<pallas_src>
import math

import jax
import jax.numpy as jnp
from jax import lax
from jax.experimental import pallas as pl
from jax.experimental.pallas import tpu as pltpu

# ----------------------------- model hyper-params -----------------------------
D_MODEL = 32
NUM_HEADS = 4
D_FF = 64
DEPTH = D_MODEL // NUM_HEADS
LN_EPS = 1e-5
SCALE = 1.0 / math.sqrt(DEPTH)
NEG_INF = -1e30       # large finite negative: avoids exp(-inf - (-inf)) = NaN


# ----------------------------- in-kernel helpers ------------------------------
def _softmax_rows(s):
    """Row-wise softmax; the divide is replaced by an EUP reciprocal (+1 Newton
    step for fp32-level accuracy), freeing VALU slots."""
    m = jnp.max(s, axis=-1, keepdims=True)
    e = jnp.exp(s - m)
    denom = jnp.sum(e, axis=-1, keepdims=True)
    inv = pl.reciprocal(denom, approx=True)
    inv = inv * (2.0 - denom * inv)          # one Newton-Raphson refinement
    return e * inv


def _layer_norm(x, gamma, beta):
    """x: (M, D); gamma/beta: (1, D). No divides (mul by 1/D + rsqrt)."""
    inv_d = 1.0 / x.shape[-1]
    mu = jnp.sum(x, axis=-1, keepdims=True) * inv_d
    xc = x - mu
    var = jnp.sum(xc * xc, axis=-1, keepdims=True) * inv_d
    return xc * lax.rsqrt(var + LN_EPS) * gamma + beta


def _attention(q, k, v, bias, wo, bo):
    """Multi-head attention on batch-folded slabs.

    q: (M, D) already scaled by 1/sqrt(depth); k, v: (Mk, D); bias: (M, Mk)
    additive mask (0 = attend, NEG_INF = masked; block-diagonal over the folded
    batch tile). wo: (D, D); bo: (1, D).

    The per-head accumulation `out += ctx_h @ wo[h*depth:(h+1)*depth, :]`
    replaces concat(head_outs) @ wo, avoiding the lane-relayout concatenate.
    """
    out = jnp.zeros((q.shape[0], D_MODEL), jnp.float32)
    for h in range(NUM_HEADS):               # static unroll, H = 4
        sl = slice(h * DEPTH, (h + 1) * DEPTH)
        s = lax.dot_general(q[:, sl], k[:, sl], (((1,), (1,)), ((), ())),
                            preferred_element_type=jnp.float32) + bias
        p = _softmax_rows(s)
        ctx = jnp.dot(p, v[:, sl], preferred_element_type=jnp.float32)
        out = out + jnp.dot(ctx, wo[sl, :], preferred_element_type=jnp.float32)
    return out + bo


# --------------------------------- the kernel ---------------------------------
def decoder_layer_kernel(x_ref, enc_ref, sbias_ref, cbias_ref,
                         w_qkv_ref, b_qkv_ref, w_o_ref,
                         w_ff1_ref, b_ff1_ref, w_ff2_ref, vec_ref,
                         out_ref):
    bt, s, d = x_ref.shape
    se = enc_ref.shape[1]

    # Fold the batch tile into the matmul M dimension (leading-dims-only reshape).
    x = x_ref[...].astype(jnp.float32).reshape(bt * s, d)        # (M,  D)
    enc = enc_ref[...].astype(jnp.float32).reshape(bt * se, d)   # (Me, D)
    sbias = sbias_ref[...]            # (M, M)  additive, block-diag over batch
    cbias = cbias_ref[...]            # (M, Me)

    # Bind every packed parameter exactly once.
    vecs = vec_ref[...]               # (9, D): bo_self, bo_cross, b_ff2, (g,b)x3
    bo_s, bo_c, b_ff2 = vecs[0:1, :], vecs[1:2, :], vecs[2:3, :]
    g1, be1 = vecs[3:4, :], vecs[4:5, :]
    g2, be2 = vecs[5:6, :], vecs[6:7, :]
    g3, be3 = vecs[7:8, :], vecs[8:9, :]
    b_ff1 = b_ff1_ref[...]

    # ---- self attention (fused QKV projection) + residual + norm1 ----
    qkv = jnp.dot(x, w_qkv_ref[0],
                  preferred_element_type=jnp.float32) + b_qkv_ref[0]     # (M, 3D)
    q = qkv[:, :D_MODEL] * SCALE
    k = qkv[:, D_MODEL:2 * D_MODEL]
    v = qkv[:, 2 * D_MODEL:]
    attn1 = _attention(q, k, v, sbias, w_o_ref[0], bo_s)
    x = _layer_norm(x + attn1, g1, be1)

    # ---- cross attention (fused KV projection) + residual + norm2 ----
    w_c = w_qkv_ref[1]                # (D, 3D) = [wq | wk | wv]
    b_c = b_qkv_ref[1]                # (1, 3D)
    q = (jnp.dot(x, w_c[:, :D_MODEL], preferred_element_type=jnp.float32)
         + b_c[:, :D_MODEL]) * SCALE
    kv = (jnp.dot(enc, w_c[:, D_MODEL:], preferred_element_type=jnp.float32)
          + b_c[:, D_MODEL:])                                            # (Me, 2D)
    k = kv[:, :D_MODEL]
    v = kv[:, D_MODEL:]
    attn2 = _attention(q, k, v, cbias, w_o_ref[1], bo_c)
    x = _layer_norm(x + attn2, g2, be2)

    # ---- feed-forward + residual + norm3 (dropout == identity in eval) ----
    h = jnp.maximum(
        jnp.dot(x, w_ff1_ref[...], preferred_element_type=jnp.float32) + b_ff1,
        0.0)
    f = jnp.dot(h, w_ff2_ref[...], preferred_element_type=jnp.float32) + b_ff2
    x = _layer_norm(x + f, g3, be3)

    # Single full-block store per program.
    # TODO(synk): a fully lane-dense (…,128) output repack would need an
    # in-kernel lane-dim reshape; skipped to keep lowering robust at D=32.
    out_ref[...] = x.reshape(bt, s, d).astype(out_ref.dtype)


# --------------------------------- wrapper ------------------------------------
def _block_diag_bias(mask, bt):
    """(Sq,Sk) int mask (0 == masked) -> (bt*Sq, bt*Sk) f32 additive bias that is
    block-diagonal over the folded batch tile (cross-batch scores masked)."""
    sq, sk = mask.shape
    bias = jnp.where(mask == 0, NEG_INF, 0.0).astype(jnp.float32)
    if bt == 1:
        return bias
    same = jnp.eye(bt, dtype=bool)
    full = jnp.where(same[:, None, :, None], bias[None, :, None, :], NEG_INF)
    return full.reshape(bt * sq, bt * sk).astype(jnp.float32)


def _full_spec(arr):
    return pl.BlockSpec(arr.shape, lambda b, _nd=arr.ndim: (0,) * _nd)


def decoder_layer(x, enc, la_mask, pad_mask, params, *, batch_tile=None):
    B, S, D = x.shape
    Se = enc.shape[1]

    if batch_tile is None:
        # Fold batch into the matmul M dimension, targeting ~128 rows/program.
        # NOTE(v7x): with 2 TensorCores/chip and a small B, batch_tile=ceil(B/2)
        # keeps both cores busy (grid axis is marked "parallel").
        batch_tile = max(1, min(B, 128 // max(S, 1)))
        while B % batch_tile:
            batch_tile -= 1
    bt = batch_tile
    assert B % bt == 0
    grid_b = B // bt

    # Host-side additive mask biases (finite -1e30, never -inf), shared by all
    # grid steps; computed once instead of per-head compare/select in-kernel.
    self_bias = _block_diag_bias(la_mask, bt)     # (bt*S, bt*S)
    cross_bias = _block_diag_bias(pad_mask, bt)   # (bt*S, bt*Se)

    w_qkv, b_qkv, w_o, w_ff1, b_ff1, w_ff2, vec_d = params

    in_specs = [
        pl.BlockSpec((bt, S, D), lambda b: (b, 0, 0)),
        pl.BlockSpec((bt, Se, D), lambda b: (b, 0, 0)),
    ] + [_full_spec(a) for a in
         (self_bias, cross_bias, w_qkv, b_qkv, w_o, w_ff1, b_ff1, w_ff2, vec_d)]

    return pl.pallas_call(
        decoder_layer_kernel,
        out_shape=jax.ShapeDtypeStruct((B, S, D), x.dtype),
        grid=(grid_b,),
        in_specs=in_specs,
        out_specs=pl.BlockSpec((bt, S, D), lambda b: (b, 0, 0)),
        compiler_params=pltpu.CompilerParams(
            dimension_semantics=("parallel",)),
    )(x, enc, self_bias, cross_bias,
      w_qkv, b_qkv, w_o, w_ff1, b_ff1, w_ff2, vec_d)


# ----------------------- deterministic parameter init -------------------------
def init_params(key):
    """Packed parameters (7 arrays instead of 26 tiny ones):
      w_qkv (2, D, 3D) : [self, cross] x [wq | wk | wv]
      b_qkv (2, 1, 3D)
      w_o   (2, D, D)  : [self, cross] fc_out weights
      w_ff1 (D, D_FF), b_ff1 (1, D_FF), w_ff2 (D_FF, D)
      vec_d (9, D)     : bo_self, bo_cross, b_ff2, (gamma, beta) x 3
    """
    def linear(k, d_in, d_out):
        kw, kb = jax.random.split(k)
        bound = 1.0 / math.sqrt(d_in)
        w = jax.random.uniform(kw, (d_in, d_out), jnp.float32, -bound, bound)
        b = jax.random.uniform(kb, (d_out,), jnp.float32, -bound, bound)
        return w, b

    keys = jax.random.split(key, 10)
    sa = [linear(keys[i], D_MODEL, D_MODEL) for i in range(4)]        # wq wk wv wo
    ca = [linear(keys[4 + i], D_MODEL, D_MODEL) for i in range(4)]
    w1, b1 = linear(keys[8], D_MODEL, D_FF)
    w2, b2 = linear(keys[9], D_FF, D_MODEL)

    w_qkv = jnp.stack([jnp.concatenate([sa[0][0], sa[1][0], sa[2][0]], axis=1),
                       jnp.concatenate([ca[0][0], ca[1][0], ca[2][0]], axis=1)])
    b_qkv = jnp.stack([jnp.concatenate([sa[0][1], sa[1][1], sa[2][1]])[None, :],
                       jnp.concatenate([ca[0][1], ca[1][1], ca[2][1]])[None, :]])
    w_o = jnp.stack([sa[3][0], ca[3][0]])

    ones = jnp.ones((D_MODEL,), jnp.float32)
    zeros = jnp.zeros((D_MODEL,), jnp.float32)
    vec_d = jnp.stack([sa[3][1], ca[3][1], b2,
                       ones, zeros, ones, zeros, ones, zeros])

    return (w_qkv, b_qkv, w_o, w1, b1[None, :], w2, vec_d)


# ------------------------- pure-JAX reference (checking) ----------------------
def decoder_layer_ref(x, enc, la_mask, pad_mask, params):
    w_qkv, b_qkv, w_o, w_ff1, b_ff1, w_ff2, vec_d = params
    D = D_MODEL

    def mha(xq, xkv, mask, w3, b3, wo, bo):
        B, Sq, _ = xq.shape
        Sk = xkv.shape[1]

        def heads(y, w, b):
            return (y @ w + b).reshape(y.shape[0], y.shape[1], NUM_HEADS,
                                       DEPTH).transpose(0, 2, 1, 3)

        q = heads(xq, w3[:, :D], b3[0, :D])
        k = heads(xkv, w3[:, D:2 * D], b3[0, D:2 * D])
        v = heads(xkv, w3[:, 2 * D:], b3[0, 2 * D:])
        s = jnp.einsum("bhqd,bhkd->bhqk", q, k) / math.sqrt(DEPTH)
        s = jnp.where(mask[None, None] == 0, -jnp.inf, s)
        p = jax.nn.softmax(s, axis=-1)
        o = jnp.einsum("bhqk,bhkd->bhqd", p, v).transpose(0, 2, 1, 3)
        return o.reshape(B, Sq, D) @ wo + bo

    def ln(y, g, b):
        mu = jnp.mean(y, axis=-1, keepdims=True)
        var = jnp.mean((y - mu) ** 2, axis=-1, keepdims=True)
        return (y - mu) * lax.rsqrt(var + LN_EPS) * g + b

    bo_s, bo_c, b_ff2 = vec_d[0], vec_d[1], vec_d[2]
    g1, be1, g2, be2, g3, be3 = (vec_d[3], vec_d[4], vec_d[5],
                                 vec_d[6], vec_d[7], vec_d[8])

    a1 = mha(x, x, la_mask, w_qkv[0], b_qkv[0], w_o[0], bo_s)
    x = ln(x + a1, g1, be1)
    a2 = mha(x, enc, pad_mask, w_qkv[1], b_qkv[1], w_o[1], bo_c)
    x = ln(x + a2, g2, be2)
    ffn = jnp.maximum(x @ w_ff1 + b_ff1, 0.0) @ w_ff2 + b_ff2
    x = ln(x + ffn, g3, be3)
    return x


# ------------------------------------ main -------------------------------------
if __name__ == "__main__":
    B, S, SE = 2, 8, 12
    key = jax.random.PRNGKey(0)
    kx, kenc, kparam = jax.random.split(key, 3)

    x = jax.random.normal(kx, (B, S, D_MODEL), jnp.float32)
    enc_out = jax.random.normal(kenc, (B, SE, D_MODEL), jnp.float32)

    # look-ahead (causal) mask: 1 = attend, 0 = masked
    look_ahead_mask = jnp.tril(jnp.ones((S, S), jnp.int32))
    # padding mask over encoder keys: mask out the last 2 encoder positions
    padding_mask = jnp.concatenate(
        [jnp.ones((S, SE - 2), jnp.int32), jnp.zeros((S, 2), jnp.int32)], axis=-1)

    params = init_params(kparam)

    out = decoder_layer(x, enc_out, look_ahead_mask, padding_mask, params)
    out = jax.block_until_ready(out)

    ref = decoder_layer_ref(x, enc_out, look_ahead_mask, padding_mask, params)
    assert out.shape == (B, S, D_MODEL)
    assert jnp.allclose(out, ref, rtol=2e-3, atol=2e-3), \
        f"max abs diff = {jnp.max(jnp.abs(out - ref))}"

    # TODO(synk): dropout implemented as identity (eval mode); training-mode RNG
    # dropout would use pltpu.prng_seed/prng_random_bits.
    print("KERNEL_OK")
</pallas_src>

<mosaic_0001>
module attributes {stable_mosaic.version = 11 : i64} {
  func.func @decoder_layer_kernel(%arg0: i32, %arg1: memref<2x8x32xf32, #tpu.memory_space<vmem>>, %arg2: memref<2x12x32xf32, #tpu.memory_space<vmem>>, %arg3: memref<16x16xf32, #tpu.memory_space<vmem>>, %arg4: memref<16x24xf32, #tpu.memory_space<vmem>>, %arg5: memref<2x32x96xf32, #tpu.memory_space<vmem>>, %arg6: memref<2x1x96xf32, #tpu.memory_space<vmem>>, %arg7: memref<2x32x32xf32, #tpu.memory_space<vmem>>, %arg8: memref<32x64xf32, #tpu.memory_space<vmem>>, %arg9: memref<1x64xf32, #tpu.memory_space<vmem>>, %arg10: memref<64x32xf32, #tpu.memory_space<vmem>>, %arg11: memref<9x32xf32, #tpu.memory_space<vmem>>, %arg12: memref<2x8x32xf32, #tpu.memory_space<vmem>>) attributes {dimension_semantics = [#tpu.dimension_semantics<parallel>], iteration_bounds = array<i64: 1>, scalar_prefetch = 0 : i64, scratch_operands = 0 : i64, tpu.core_type = #tpu.core_type<tc>, window_params = [{transform_indices = @transform_0, window_bounds = array<i64: 2, 8, 32>}, {transform_indices = @transform_1, window_bounds = array<i64: 2, 12, 32>}, {pipeline_mode = #tpu.pipeline_mode<synchronous>, transform_indices = @transform_2, window_bounds = array<i64: 16, 16>}, {pipeline_mode = #tpu.pipeline_mode<synchronous>, transform_indices = @transform_3, window_bounds = array<i64: 16, 24>}, {pipeline_mode = #tpu.pipeline_mode<synchronous>, transform_indices = @transform_4, window_bounds = array<i64: 2, 32, 96>}, {pipeline_mode = #tpu.pipeline_mode<synchronous>, transform_indices = @transform_5, window_bounds = array<i64: 2, 1, 96>}, {pipeline_mode = #tpu.pipeline_mode<synchronous>, transform_indices = @transform_6, window_bounds = array<i64: 2, 32, 32>}, {pipeline_mode = #tpu.pipeline_mode<synchronous>, transform_indices = @transform_7, window_bounds = array<i64: 32, 64>}, {pipeline_mode = #tpu.pipeline_mode<synchronous>, transform_indices = @transform_8, window_bounds = array<i64: 1, 64>}, {pipeline_mode = #tpu.pipeline_mode<synchronous>, transform_indices = @transform_9, window_bounds = array<i64: 64, 32>}, {pipeline_mode = #tpu.pipeline_mode<synchronous>, transform_indices = @transform_10, window_bounds = array<i64: 9, 32>}, {transform_indices = @transform_11, window_bounds = array<i64: 2, 8, 32>}]} {
    %c0 = arith.constant 0 : index
    %c0_0 = arith.constant 0 : index
    %c0_1 = arith.constant 0 : index
    %0 = vector.load %arg1[%c0, %c0_0, %c0_1] : memref<2x8x32xf32, #tpu.memory_space<vmem>>, vector<2x8x32xf32>
    %1 = vector.shape_cast %0 : vector<2x8x32xf32> to vector<16x32xf32>
    %c0_2 = arith.constant 0 : index
    %c0_3 = arith.constant 0 : index
    %c0_4 = arith.constant 0 : index
    %2 = vector.load %arg2[%c0_2, %c0_3, %c0_4] : memref<2x12x32xf32, #tpu.memory_space<vmem>>, vector<2x12x32xf32>
    %3 = vector.shape_cast %2 : vector<2x12x32xf32> to vector<24x32xf32>
    %c0_5 = arith.constant 0 : index
    %c0_6 = arith.constant 0 : index
    %4 = vector.load %arg3[%c0_5, %c0_6] : memref<16x16xf32, #tpu.memory_space<vmem>>, vector<16x16xf32>
    %c0_7 = arith.constant 0 : index
    %c0_8 = arith.constant 0 : index
    %5 = vector.load %arg4[%c0_7, %c0_8] : memref<16x24xf32, #tpu.memory_space<vmem>>, vector<16x24xf32>
    %c0_9 = arith.constant 0 : index
    %c0_10 = arith.constant 0 : index
    %6 = vector.load %arg11[%c0_9, %c0_10] : memref<9x32xf32, #tpu.memory_space<vmem>>, vector<9x32xf32>
    %7 = vector.extract_strided_slice %6 {offsets = [0, 0], sizes = [1, 32], strides = [1, 1]} : vector<9x32xf32> to vector<1x32xf32>
    %8 = vector.extract_strided_slice %6 {offsets = [1, 0], sizes = [1, 32], strides = [1, 1]} : vector<9x32xf32> to vector<1x32xf32>
    %9 = vector.extract_strided_slice %6 {offsets = [2, 0], sizes = [1, 32], strides = [1, 1]} : vector<9x32xf32> to vector<1x32xf32>
    %10 = vector.extract_strided_slice %6 {offsets = [3, 0], sizes = [1, 32], strides = [1, 1]} : vector<9x32xf32> to vector<1x32xf32>
    %11 = vector.extract_strided_slice %6 {offsets = [4, 0], sizes = [1, 32], strides = [1, 1]} : vector<9x32xf32> to vector<1x32xf32>
    %12 = vector.extract_strided_slice %6 {offsets = [5, 0], sizes = [1, 32], strides = [1, 1]} : vector<9x32xf32> to vector<1x32xf32>
    %13 = vector.extract_strided_slice %6 {offsets = [6, 0], sizes = [1, 32], strides = [1, 1]} : vector<9x32xf32> to vector<1x32xf32>
    %14 = vector.extract_strided_slice %6 {offsets = [7, 0], sizes = [1, 32], strides = [1, 1]} : vector<9x32xf32> to vector<1x32xf32>
    %15 = vector.extract_strided_slice %6 {offsets = [8, 0], sizes = [1, 32], strides = [1, 1]} : vector<9x32xf32> to vector<1x32xf32>
    %c0_11 = arith.constant 0 : index
    %c0_12 = arith.constant 0 : index
    %16 = vector.load %arg9[%c0_11, %c0_12] : memref<1x64xf32, #tpu.memory_space<vmem>>, vector<1x64xf32>
    %c0_13 = arith.constant 0 : index
    %c0_14 = arith.constant 0 : index
    %c0_15 = arith.constant 0 : index
    %17 = vector.load %arg5[%c0_13, %c0_14, %c0_15] : memref<2x32x96xf32, #tpu.memory_space<vmem>>, vector<1x32x96xf32>
    %18 = vector.shape_cast %17 : vector<1x32x96xf32> to vector<32x96xf32>
    %cst = arith.constant dense<0.000000e+00> : vector<16x96xf32>
    %19 = tpu.matmul %1, %18, %cst {dimension_numbers = #tpu.dot_dimension_numbers<[1], [0], [0], [1], [0, 0, 1, 1], [], []>} : vector<16x32xf32>, vector<32x96xf32>, vector<16x96xf32> -> vector<16x96xf32>
    %c0_16 = arith.constant 0 : index
    %c0_17 = arith.constant 0 : index
    %c0_18 = arith.constant 0 : index
    %20 = vector.load %arg6[%c0_16, %c0_17, %c0_18] : memref<2x1x96xf32, #tpu.memory_space<vmem>>, vector<1x1x96xf32>
    %21 = vector.shape_cast %20 : vector<1x1x96xf32> to vector<1x96xf32>
    %22 = vector.broadcast %21 : vector<1x96xf32> to vector<16x96xf32>
    %23 = arith.addf %19, %22 : vector<16x96xf32>
    %24 = vector.extract_strided_slice %23 {offsets = [0, 0], sizes = [16, 32], strides = [1, 1]} : vector<16x96xf32> to vector<16x32xf32>
    %cst_19 = arith.constant 0.353553385 : f32
    %25 = vector.broadcast %cst_19 : f32 to vector<16x32xf32>
    %26 = arith.mulf %24, %25 : vector<16x32xf32>
    %27 = vector.extract_strided_slice %23 {offsets = [0, 32], sizes = [16, 32], strides = [1, 1]} : vector<16x96xf32> to vector<16x32xf32>
    %28 = vector.extract_strided_slice %23 {offsets = [0, 64], sizes = [16, 32], strides = [1, 1]} : vector<16x96xf32> to vector<16x32xf32>
    %c0_20 = arith.constant 0 : index
    %c0_21 = arith.constant 0 : index
    %c0_22 = arith.constant 0 : index
    %29 = vector.load %arg7[%c0_20, %c0_21, %c0_22] : memref<2x32x32xf32, #tpu.memory_space<vmem>>, vector<1x32x32xf32>
    %30 = vector.shape_cast %29 : vector<1x32x32xf32> to vector<32x32xf32>
    %cst_23 = arith.constant 0.000000e+00 : f32
    %31 = vector.broadcast %cst_23 : f32 to vector<16x32xf32>
    %32 = vector.extract_strided_slice %26 {offsets = [0, 0], sizes = [16, 8], strides = [1, 1]} : vector<16x32xf32> to vector<16x8xf32>
    %33 = vector.extract_strided_slice %27 {offsets = [0, 0], sizes = [16, 8], strides = [1, 1]} : vector<16x32xf32> to vector<16x8xf32>
    %cst_24 = arith.constant dense<0.000000e+00> : vector<16x16xf32>
    %34 = tpu.matmul %32, %33, %cst_24 {dimension_numbers = #tpu.dot_dimension_numbers<[1], [1], [0], [0], [0, 0, 1, 0], [], []>} : vector<16x8xf32>, vector<16x8xf32>, vector<16x16xf32> -> vector<16x16xf32>
    %35 = arith.addf %34, %4 : vector<16x16xf32>
    %cst_25 = arith.constant dense<0xFF800000> : vector<16xf32>
    %36 = vector.multi_reduction <maximumf>, %35, %cst_25 [1] : vector<16x16xf32> to vector<16xf32>
    %37 = vector.shape_cast %36 : vector<16xf32> to vector<16x1xf32>
    %38 = vector.broadcast %37 : vector<16x1xf32> to vector<16x16xf32>
    %39 = arith.subf %35, %38 : vector<16x16xf32>
    %40 = math.exp %39 : vector<16x16xf32>
    %cst_26 = arith.constant dense<0.000000e+00> : vector<16xf32>
    %41 = vector.multi_reduction <add>, %40, %cst_26 [1] : vector<16x16xf32> to vector<16xf32>
    %42 = vector.shape_cast %41 : vector<16xf32> to vector<16x1xf32>
    %43 = tpu.reciprocal %42 {approx = true} : vector<16x1xf32> -> vector<16x1xf32>
    %44 = arith.mulf %42, %43 : vector<16x1xf32>
    %cst_27 = arith.constant 2.000000e+00 : f32
    %45 = vector.broadcast %cst_27 : f32 to vector<16x1xf32>
    %46 = arith.subf %45, %44 : vector<16x1xf32>
    %47 = arith.mulf %43, %46 : vector<16x1xf32>
    %48 = vector.broadcast %47 : vector<16x1xf32> to vector<16x16xf32>
    %49 = arith.mulf %40, %48 : vector<16x16xf32>
    %50 = vector.extract_strided_slice %28 {offsets = [0, 0], sizes = [16, 8], strides = [1, 1]} : vector<16x32xf32> to vector<16x8xf32>
    %cst_28 = arith.constant dense<0.000000e+00> : vector<16x8xf32>
    %51 = tpu.matmul %49, %50, %cst_28 {dimension_numbers = #tpu.dot_dimension_numbers<[1], [0], [0], [1], [0, 0, 1, 1], [], []>} : vector<16x16xf32>, vector<16x8xf32>, vector<16x8xf32> -> vector<16x8xf32>
    %52 = vector.extract_strided_slice %30 {offsets = [0, 0], sizes = [8, 32], strides = [1, 1]} : vector<32x32xf32> to vector<8x32xf32>
    %cst_29 = arith.constant dense<0.000000e+00> : vector<16x32xf32>
    %53 = tpu.matmul %51, %52, %cst_29 {dimension_numbers = #tpu.dot_dimension_numbers<[1], [0], [0], [1], [0, 0, 1, 1], [], []>} : vector<16x8xf32>, vector<8x32xf32>, vector<16x32xf32> -> vector<16x32xf32>
    %54 = arith.addf %31, %53 : vector<16x32xf32>
    %55 = vector.extract_strided_slice %26 {offsets = [0, 8], sizes = [16, 8], strides = [1, 1]} : vector<16x32xf32> to vector<16x8xf32>
    %56 = vector.extract_strided_slice %27 {offsets = [0, 8], sizes = [16, 8], strides = [1, 1]} : vector<16x32xf32> to vector<16x8xf32>
    %cst_30 = arith.constant dense<0.000000e+00> : vector<16x16xf32>
    %57 = tpu.matmul %55, %56, %cst_30 {dimension_numbers = #tpu.dot_dimension_numbers<[1], [1], [0], [0], [0, 0, 1, 0], [], []>} : vector<16x8xf32>, vector<16x8xf32>, vector<16x16xf32> -> vector<16x16xf32>
    %58 = arith.addf %57, %4 : vector<16x16xf32>
    %cst_31 = arith.constant dense<0xFF800000> : vector<16xf32>
    %59 = vector.multi_reduction <maximumf>, %58, %cst_31 [1] : vector<16x16xf32> to vector<16xf32>
    %60 = vector.shape_cast %59 : vector<16xf32> to vector<16x1xf32>
    %61 = vector.broadcast %60 : vector<16x1xf32> to vector<16x16xf32>
    %62 = arith.subf %58, %61 : vector<16x16xf32>
    %63 = math.exp %62 : vector<16x16xf32>
    %cst_32 = arith.constant dense<0.000000e+00> : vector<16xf32>
    %64 = vector.multi_reduction <add>, %63, %cst_32 [1] : vector<16x16xf32> to vector<16xf32>
    %65 = vector.shape_cast %64 : vector<16xf32> to vector<16x1xf32>
    %66 = tpu.reciprocal %65 {approx = true} : vector<16x1xf32> -> vector<16x1xf32>
    %67 = arith.mulf %65, %66 : vector<16x1xf32>
    %cst_33 = arith.constant 2.000000e+00 : f32
    %68 = vector.broadcast %cst_33 : f32 to vector<16x1xf32>
    %69 = arith.subf %68, %67 : vector<16x1xf32>
    %70 = arith.mulf %66, %69 : vector<16x1xf32>
    %71 = vector.broadcast %70 : vector<16x1xf32> to vector<16x16xf32>
    %72 = arith.mulf %63, %71 : vector<16x16xf32>
    %73 = vector.extract_strided_slice %28 {offsets = [0, 8], sizes = [16, 8], strides = [1, 1]} : vector<16x32xf32> to vector<16x8xf32>
    %cst_34 = arith.constant dense<0.000000e+00> : vector<16x8xf32>
    %74 = tpu.matmul %72, %73, %cst_34 {dimension_numbers = #tpu.dot_dimension_numbers<[1], [0], [0], [1], [0, 0, 1, 1], [], []>} : vector<16x16xf32>, vector<16x8xf32>, vector<16x8xf32> -> vector<16x8xf32>
    %75 = vector.extract_strided_slice %30 {offsets = [8, 0], sizes = [8, 32], strides = [1, 1]} : vector<32x32xf32> to vector<8x32xf32>
    %cst_35 = arith.constant dense<0.000000e+00> : vector<16x32xf32>
    %76 = tpu.matmul %74, %75, %cst_35 {dimension_numbers = #tpu.dot_dimension_numbers<[1], [0], [0], [1], [0, 0, 1, 1], [], []>} : vector<16x8xf32>, vector<8x32xf32>, vector<16x32xf32> -> vector<16x32xf32>
    %77 = arith.addf %54, %76 : vector<16x32xf32>
    %78 = vector.extract_strided_slice %26 {offsets = [0, 16], sizes = [16, 8], strides = [1, 1]} : vector<16x32xf32> to vector<16x8xf32>
    %79 = vector.extract_strided_slice %27 {offsets = [0, 16], sizes = [16, 8], strides = [1, 1]} : vector<16x32xf32> to vector<16x8xf32>
    %cst_36 = arith.constant dense<0.000000e+00> : vector<16x16xf32>
    %80 = tpu.matmul %78, %79, %cst_36 {dimension_numbers = #tpu.dot_dimension_numbers<[1], [1], [0], [0], [0, 0, 1, 0], [], []>} : vector<16x8xf32>, vector<16x8xf32>, vector<16x16xf32> -> vector<16x16xf32>
    %81 = arith.addf %80, %4 : vector<16x16xf32>
    %cst_37 = arith.constant dense<0xFF800000> : vector<16xf32>
    %82 = vector.multi_reduction <maximumf>, %81, %cst_37 [1] : vector<16x16xf32> to vector<16xf32>
    %83 = vector.shape_cast %82 : vector<16xf32> to vector<16x1xf32>
    %84 = vector.broadcast %83 : vector<16x1xf32> to vector<16x16xf32>
    %85 = arith.subf %81, %84 : vector<16x16xf32>
    %86 = math.exp %85 : vector<16x16xf32>
    %cst_38 = arith.constant dense<0.000000e+00> : vector<16xf32>
    %87 = vector.multi_reduction <add>, %86, %cst_38 [1] : vector<16x16xf32> to vector<16xf32>
    %88 = vector.shape_cast %87 : vector<16xf32> to vector<16x1xf32>
    %89 = tpu.reciprocal %88 {approx = true} : vector<16x1xf32> -> vector<16x1xf32>
    %90 = arith.mulf %88, %89 : vector<16x1xf32>
    %cst_39 = arith.constant 2.000000e+00 : f32
    %91 = vector.broadcast %cst_39 : f32 to vector<16x1xf32>
    %92 = arith.subf %91, %90 : vector<16x1xf32>
    %93 = arith.mulf %89, %92 : vector<16x1xf32>
    %94 = vector.broadcast %93 : vector<16x1xf32> to vector<16x16xf32>
    %95 = arith.mulf %86, %94 : vector<16x16xf32>
    %96 = vector.extract_strided_slice %28 {offsets = [0, 16], sizes = [16, 8], strides = [1, 1]} : vector<16x32xf32> to vector<16x8xf32>
    %cst_40 = arith.constant dense<0.000000e+00> : vector<16x8xf32>
    %97 = tpu.matmul %95, %96, %cst_40 {dimension_numbers = #tpu.dot_dimension_numbers<[1], [0], [0], [1], [0, 0, 1, 1], [], []>} : vector<16x16xf32>, vector<16x8xf32>, vector<16x8xf32> -> vector<16x8xf32>
    %98 = vector.extract_strided_slice %30 {offsets = [16, 0], sizes = [8, 32], strides = [1, 1]} : vector<32x32xf32> to vector<8x32xf32>
    %cst_41 = arith.constant dense<0.000000e+00> : vector<16x32xf32>
    %99 = tpu.matmul %97, %98, %cst_41 {dimension_numbers = #tpu.dot_dimension_numbers<[1], [0], [0], [1], [0, 0, 1, 1], [], []>} : vector<16x8xf32>, vector<8x32xf32>, vector<16x32xf32> -> vector<16x32xf32>
    %100 = arith.addf %77, %99 : vector<16x32xf32>
    %101 = vector.extract_strided_slice %26 {offsets = [0, 24], sizes = [16, 8], strides = [1, 1]} : vector<16x32xf32> to vector<16x8xf32>
    %102 = vector.extract_strided_slice %27 {offsets = [0, 24], sizes = [16, 8], strides = [1, 1]} : vector<16x32xf32> to vector<16x8xf32>
    %cst_42 = arith.constant dense<0.000000e+00> : vector<16x16xf32>
    %103 = tpu.matmul %101, %102, %cst_42 {dimension_numbers = #tpu.dot_dimension_numbers<[1], [1], [0], [0], [0, 0, 1, 0], [], []>} : vector<16x8xf32>, vector<16x8xf32>, vector<16x16xf32> -> vector<16x16xf32>
    %104 = arith.addf %103, %4 : vector<16x16xf32>
    %cst_43 = arith.constant dense<0xFF800000> : vector<16xf32>
    %105 = vector.multi_reduction <maximumf>, %104, %cst_43 [1] : vector<16x16xf32> to vector<16xf32>
    %106 = vector.shape_cast %105 : vector<16xf32> to vector<16x1xf32>
    %107 = vector.broadcast %106 : vector<16x1xf32> to vector<16x16xf32>
    %108 = arith.subf %104, %107 : vector<16x16xf32>
    %109 = math.exp %108 : vector<16x16xf32>
    %cst_44 = arith.constant dense<0.000000e+00> : vector<16xf32>
    %110 = vector.multi_reduction <add>, %109, %cst_44 [1] : vector<16x16xf32> to vector<16xf32>
    %111 = vector.shape_cast %110 : vector<16xf32> to vector<16x1xf32>
    %112 = tpu.reciprocal %111 {approx = true} : vector<16x1xf32> -> vector<16x1xf32>
    %113 = arith.mulf %111, %112 : vector<16x1xf32>
    %cst_45 = arith.constant 2.000000e+00 : f32
    %114 = vector.broadcast %cst_45 : f32 to vector<16x1xf32>
    %115 = arith.subf %114, %113 : vector<16x1xf32>
    %116 = arith.mulf %112, %115 : vector<16x1xf32>
    %117 = vector.broadcast %116 : vector<16x1xf32> to vector<16x16xf32>
    %118 = arith.mulf %109, %117 : vector<16x16xf32>
    %119 = vector.extract_strided_slice %28 {offsets = [0, 24], sizes = [16, 8], strides = [1, 1]} : vector<16x32xf32> to vector<16x8xf32>
    %cst_46 = arith.constant dense<0.000000e+00> : vector<16x8xf32>
    %120 = tpu.matmul %118, %119, %cst_46 {dimension_numbers = #tpu.dot_dimension_numbers<[1], [0], [0], [1], [0, 0, 1, 1], [], []>} : vector<16x16xf32>, vector<16x8xf32>, vector<16x8xf32> -> vector<16x8xf32>
    %121 = vector.extract_strided_slice %30 {offsets = [24, 0], sizes = [8, 32], strides = [1, 1]} : vector<32x32xf32> to vector<8x32xf32>
    %cst_47 = arith.constant dense<0.000000e+00> : vector<16x32xf32>
    %122 = tpu.matmul %120, %121, %cst_47 {dimension_numbers = #tpu.dot_dimension_numbers<[1], [0], [0], [1], [0, 0, 1, 1], [], []>} : vector<16x8xf32>, vector<8x32xf32>, vector<16x32xf32> -> vector<16x32xf32>
    %123 = arith.addf %100, %122 : vector<16x32xf32>
    %124 = vector.broadcast %7 : vector<1x32xf32> to vector<16x32xf32>
    %125 = arith.addf %123, %124 : vector<16x32xf32>
    %126 = arith.addf %1, %125 : vector<16x32xf32>
    %cst_48 = arith.constant dense<0.000000e+00> : vector<16xf32>
    %127 = vector.multi_reduction <add>, %126, %cst_48 [1] : vector<16x32xf32> to vector<16xf32>
    %128 = vector.shape_cast %127 : vector<16xf32> to vector<16x1xf32>
    %cst_49 = arith.constant 3.125000e-02 : f32
    %129 = vector.broadcast %cst_49 : f32 to vector<16x1xf32>
    %130 = arith.mulf %128, %129 : vector<16x1xf32>
    %131 = vector.broadcast %130 : vector<16x1xf32> to vector<16x32xf32>
    %132 = arith.subf %126, %131 : vector<16x32xf32>
    %133 = arith.mulf %132, %132 : vector<16x32xf32>
    %cst_50 = arith.constant dense<0.000000e+00> : vector<16xf32>
    %134 = vector.multi_reduction <add>, %133, %cst_50 [1] : vector<16x32xf32> to vector<16xf32>
    %135 = vector.shape_cast %134 : vector<16xf32> to vector<16x1xf32>
    %cst_51 = arith.constant 3.125000e-02 : f32
    %136 = vector.broadcast %cst_51 : f32 to vector<16x1xf32>
    %137 = arith.mulf %135, %136 : vector<16x1xf32>
    %cst_52 = arith.constant 9.99999974E-6 : f32
    %138 = vector.broadcast %cst_52 : f32 to vector<16x1xf32>
    %139 = arith.addf %137, %138 : vector<16x1xf32>
    %140 = math.rsqrt %139 : vector<16x1xf32>
    %141 = vector.broadcast %140 : vector<16x1xf32> to vector<16x32xf32>
    %142 = arith.mulf %132, %141 : vector<16x32xf32>
    %143 = vector.broadcast %10 : vector<1x32xf32> to vector<16x32xf32>
    %144 = arith.mulf %142, %143 : vector<16x32xf32>
    %145 = vector.broadcast %11 : vector<1x32xf32> to vector<16x32xf32>
    %146 = arith.addf %144, %145 : vector<16x32xf32>
    %c1 = arith.constant 1 : index
    %c0_53 = arith.constant 0 : index
    %c0_54 = arith.constant 0 : index
    %147 = vector.load %arg5[%c1, %c0_53, %c0_54] : memref<2x32x96xf32, #tpu.memory_space<vmem>>, vector<1x32x96xf32>
    %148 = vector.shape_cast %147 : vector<1x32x96xf32> to vector<32x96xf32>
    %c1_55 = arith.constant 1 : index
    %c0_56 = arith.constant 0 : index
    %c0_57 = arith.constant 0 : index
    %149 = vector.load %arg6[%c1_55, %c0_56, %c0_57] : memref<2x1x96xf32, #tpu.memory_space<vmem>>, vector<1x1x96xf32>
    %150 = vector.shape_cast %149 : vector<1x1x96xf32> to vector<1x96xf32>
    %151 = vector.extract_strided_slice %148 {offsets = [0, 0], sizes = [32, 32], strides = [1, 1]} : vector<32x96xf32> to vector<32x32xf32>
    %cst_58 = arith.constant dense<0.000000e+00> : vector<16x32xf32>
    %152 = tpu.matmul %146, %151, %cst_58 {dimension_numbers = #tpu.dot_dimension_numbers<[1], [0], [0], [1], [0, 0, 1, 1], [], []>} : vector<16x32xf32>, vector<32x32xf32>, vector<16x32xf32> -> vector<16x32xf32>
    %153 = vector.extract_strided_slice %150 {offsets = [0, 0], sizes = [1, 32], strides = [1, 1]} : vector<1x96xf32> to vector<1x32xf32>
    %154 = vector.broadcast %153 : vector<1x32xf32> to vector<16x32xf32>
    %155 = arith.addf %152, %154 : vector<16x32xf32>
    %cst_59 = arith.constant 0.353553385 : f32
    %156 = vector.broadcast %cst_59 : f32 to vector<16x32xf32>
    %157 = arith.mulf %155, %156 : vector<16x32xf32>
    %158 = vector.extract_strided_slice %148 {offsets = [0, 32], sizes = [32, 64], strides = [1, 1]} : vector<32x96xf32> to vector<32x64xf32>
    %cst_60 = arith.constant dense<0.000000e+00> : vector<24x64xf32>
    %159 = tpu.matmul %3, %158, %cst_60 {dimension_numbers = #tpu.dot_dimension_numbers<[1], [0], [0], [1], [0, 0, 1, 1], [], []>} : vector<24x32xf32>, vector<32x64xf32>, vector<24x64xf32> -> vector<24x64xf32>
    %160 = vector.extract_strided_slice %150 {offsets = [0, 32], sizes = [1, 64], strides = [1, 1]} : vector<1x96xf32> to vector<1x64xf32>
    %161 = vector.broadcast %160 : vector<1x64xf32> to vector<24x64xf32>
    %162 = arith.addf %159, %161 : vector<24x64xf32>
    %163 = vector.extract_strided_slice %162 {offsets = [0, 0], sizes = [24, 32], strides = [1, 1]} : vector<24x64xf32> to vector<24x32xf32>
    %164 = vector.extract_strided_slice %162 {offsets = [0, 32], sizes = [24, 32], strides = [1, 1]} : vector<24x64xf32> to vector<24x32xf32>
    %c1_61 = arith.constant 1 : index
    %c0_62 = arith.constant 0 : index
    %c0_63 = arith.constant 0 : index
    %165 = vector.load %arg7[%c1_61, %c0_62, %c0_63] : memref<2x32x32xf32, #tpu.memory_space<vmem>>, vector<1x32x32xf32>
    %166 = vector.shape_cast %165 : vector<1x32x32xf32> to vector<32x32xf32>
    %cst_64 = arith.constant 0.000000e+00 : f32
    %167 = vector.broadcast %cst_64 : f32 to vector<16x32xf32>
    %168 = vector.extract_strided_slice %157 {offsets = [0, 0], sizes = [16, 8], strides = [1, 1]} : vector<16x32xf32> to vector<16x8xf32>
    %169 = vector.extract_strided_slice %163 {offsets = [0, 0], sizes = [24, 8], strides = [1, 1]} : vector<24x32xf32> to vector<24x8xf32>
    %cst_65 = arith.constant dense<0.000000e+00> : vector<16x24xf32>
    %170 = tpu.matmul %168, %169, %cst_65 {dimension_numbers = #tpu.dot_dimension_numbers<[1], [1], [0], [0], [0, 0, 1, 0], [], []>} : vector<16x8xf32>, vector<24x8xf32>, vector<16x24xf32> -> vector<16x24xf32>
    %171 = arith.addf %170, %5 : vector<16x24xf32>
    %cst_66 = arith.constant dense<0xFF800000> : vector<16xf32>
    %172 = vector.multi_reduction <maximumf>, %171, %cst_66 [1] : vector<16x24xf32> to vector<16xf32>
    %173 = vector.shape_cast %172 : vector<16xf32> to vector<16x1xf32>
    %174 = vector.broadcast %173 : vector<16x1xf32> to vector<16x24xf32>
    %175 = arith.subf %171, %174 : vector<16x24xf32>
    %176 = math.exp %175 : vector<16x24xf32>
    %cst_67 = arith.constant dense<0.000000e+00> : vector<16xf32>
    %177 = vector.multi_reduction <add>, %176, %cst_67 [1] : vector<16x24xf32> to vector<16xf32>
    %178 = vector.shape_cast %177 : vector<16xf32> to vector<16x1xf32>
    %179 = tpu.reciprocal %178 {approx = true} : vector<16x1xf32> -> vector<16x1xf32>
    %180 = arith.mulf %178, %179 : vector<16x1xf32>
    %cst_68 = arith.constant 2.000000e+00 : f32
    %181 = vector.broadcast %cst_68 : f32 to vector<16x1xf32>
    %182 = arith.subf %181, %180 : vector<16x1xf32>
    %183 = arith.mulf %179, %182 : vector<16x1xf32>
    %184 = vector.broadcast %183 : vector<16x1xf32> to vector<16x24xf32>
    %185 = arith.mulf %176, %184 : vector<16x24xf32>
    %186 = vector.extract_strided_slice %164 {offsets = [0, 0], sizes = [24, 8], strides = [1, 1]} : vector<24x32xf32> to vector<24x8xf32>
    %cst_69 = arith.constant dense<0.000000e+00> : vector<16x8xf32>
    %187 = tpu.matmul %185, %186, %cst_69 {dimension_numbers = #tpu.dot_dimension_numbers<[1], [0], [0], [1], [0, 0, 1, 1], [], []>} : vector<16x24xf32>, vector<24x8xf32>, vector<16x8xf32> -> vector<16x8xf32>
    %188 = vector.extract_strided_slice %166 {offsets = [0, 0], sizes = [8, 32], strides = [1, 1]} : vector<32x32xf32> to vector<8x32xf32>
    %cst_70 = arith.constant dense<0.000000e+00> : vector<16x32xf32>
    %189 = tpu.matmul %187, %188, %cst_70 {dimension_numbers = #tpu.dot_dimension_numbers<[1], [0], [0], [1], [0, 0, 1, 1], [], []>} : vector<16x8xf32>, vector<8x32xf32>, vector<16x32xf32> -> vector<16x32xf32>
    %190 = arith.addf %167, %189 : vector<16x32xf32>
    %191 = vector.extract_strided_slice %157 {offsets = [0, 8], sizes = [16, 8], strides = [1, 1]} : vector<16x32xf32> to vector<16x8xf32>
    %192 = vector.extract_strided_slice %163 {offsets = [0, 8], sizes = [24, 8], strides = [1, 1]} : vector<24x32xf32> to vector<24x8xf32>
    %cst_71 = arith.constant dense<0.000000e+00> : vector<16x24xf32>
    %193 = tpu.matmul %191, %192, %cst_71 {dimension_numbers = #tpu.dot_dimension_numbers<[1], [1], [0], [0], [0, 0, 1, 0], [], []>} : vector<16x8xf32>, vector<24x8xf32>, vector<16x24xf32> -> vector<16x24xf32>
    %194 = arith.addf %193, %5 : vector<16x24xf32>
    %cst_72 = arith.constant dense<0xFF800000> : vector<16xf32>
    %195 = vector.multi_reduction <maximumf>, %194, %cst_72 [1] : vector<16x24xf32> to vector<16xf32>
    %196 = vector.shape_cast %195 : vector<16xf32> to vector<16x1xf32>
    %197 = vector.broadcast %196 : vector<16x1xf32> to vector<16x24xf32>
    %198 = arith.subf %194, %197 : vector<16x24xf32>
    %199 = math.exp %198 : vector<16x24xf32>
    %cst_73 = arith.constant dense<0.000000e+00> : vector<16xf32>
    %200 = vector.multi_reduction <add>, %199, %cst_73 [1] : vector<16x24xf32> to vector<16xf32>
    %201 = vector.shape_cast %200 : vector<16xf32> to vector<16x1xf32>
    %202 = tpu.reciprocal %201 {approx = true} : vector<16x1xf32> -> vector<16x1xf32>
    %203 = arith.mulf %201, %202 : vector<16x1xf32>
    %cst_74 = arith.constant 2.000000e+00 : f32
    %204 = vector.broadcast %cst_74 : f32 to vector<16x1xf32>
    %205 = arith.subf %204, %203 : vector<16x1xf32>
    %206 = arith.mulf %202, %205 : vector<16x1xf32>
    %207 = vector.broadcast %206 : vector<16x1xf32> to vector<16x24xf32>
    %208 = arith.mulf %199, %207 : vector<16x24xf32>
    %209 = vector.extract_strided_slice %164 {offsets = [0, 8], sizes = [24, 8], strides = [1, 1]} : vector<24x32xf32> to vector<24x8xf32>
    %cst_75 = arith.constant dense<0.000000e+00> : vector<16x8xf32>
    %210 = tpu.matmul %208, %209, %cst_75 {dimension_numbers = #tpu.dot_dimension_numbers<[1], [0], [0], [1], [0, 0, 1, 1], [], []>} : vector<16x24xf32>, vector<24x8xf32>, vector<16x8xf32> -> vector<16x8xf32>
    %211 = vector.extract_strided_slice %166 {offsets = [8, 0], sizes = [8, 32], strides = [1, 1]} : vector<32x32xf32> to vector<8x32xf32>
    %cst_76 = arith.constant dense<0.000000e+00> : vector<16x32xf32>
    %212 = tpu.matmul %210, %211, %cst_76 {dimension_numbers = #tpu.dot_dimension_numbers<[1], [0], [0], [1], [0, 0, 1, 1], [], []>} : vector<16x8xf32>, vector<8x32xf32>, vector<16x32xf32> -> vector<16x32xf32>
    %213 = arith.addf %190, %212 : vector<16x32xf32>
    %214 = vector.extract_strided_slice %157 {offsets = [0, 16], sizes = [16, 8], strides = [1, 1]} : vector<16x32xf32> to vector<16x8xf32>
    %215 = vector.extract_strided_slice %163 {offsets = [0, 16], sizes = [24, 8], strides = [1, 1]} : vector<24x32xf32> to vector<24x8xf32>
    %cst_77 = arith.constant dense<0.000000e+00> : vector<16x24xf32>
    %216 = tpu.matmul %214, %215, %cst_77 {dimension_numbers = #tpu.dot_dimension_numbers<[1], [1], [0], [0], [0, 0, 1, 0], [], []>} : vector<16x8xf32>, vector<24x8xf32>, vector<16x24xf32> -> vector<16x24xf32>
    %217 = arith.addf %216, %5 : vector<16x24xf32>
    %cst_78 = arith.constant dense<0xFF800000> : vector<16xf32>
    %218 = vector.multi_reduction <maximumf>, %217, %cst_78 [1] : vector<16x24xf32> to vector<16xf32>
    %219 = vector.shape_cast %218 : vector<16xf32> to vector<16x1xf32>
    %220 = vector.broadcast %219 : vector<16x1xf32> to vector<16x24xf32>
    %221 = arith.subf %217, %220 : vector<16x24xf32>
    %222 = math.exp %221 : vector<16x24xf32>
    %cst_79 = arith.constant dense<0.000000e+00> : vector<16xf32>
    %223 = vector.multi_reduction <add>, %222, %cst_79 [1] : vector<16x24xf32> to vector<16xf32>
    %224 = vector.shape_cast %223 : vector<16xf32> to vector<16x1xf32>
    %225 = tpu.reciprocal %224 {approx = true} : vector<16x1xf32> -> vector<16x1xf32>
    %226 = arith.mulf %224, %225 : vector<16x1xf32>
    %cst_80 = arith.constant 2.000000e+00 : f32
    %227 = vector.broadcast %cst_80 : f32 to vector<16x1xf32>
    %228 = arith.subf %227, %226 : vector<16x1xf32>
    %229 = arith.mulf %225, %228 : vector<16x1xf32>
    %230 = vector.broadcast %229 : vector<16x1xf32> to vector<16x24xf32>
    %231 = arith.mulf %222, %230 : vector<16x24xf32>
    %232 = vector.extract_strided_slice %164 {offsets = [0, 16], sizes = [24, 8], strides = [1, 1]} : vector<24x32xf32> to vector<24x8xf32>
    %cst_81 = arith.constant dense<0.000000e+00> : vector<16x8xf32>
    %233 = tpu.matmul %231, %232, %cst_81 {dimension_numbers = #tpu.dot_dimension_numbers<[1], [0], [0], [1], [0, 0, 1, 1], [], []>} : vector<16x24xf32>, vector<24x8xf32>, vector<16x8xf32> -> vector<16x8xf32>
    %234 = vector.extract_strided_slice %166 {offsets = [16, 0], sizes = [8, 32], strides = [1, 1]} : vector<32x32xf32> to vector<8x32xf32>
    %cst_82 = arith.constant dense<0.000000e+00> : vector<16x32xf32>
    %235 = tpu.matmul %233, %234, %cst_82 {dimension_numbers = #tpu.dot_dimension_numbers<[1], [0], [0], [1], [0, 0, 1, 1], [], []>} : vector<16x8xf32>, vector<8x32xf32>, vector<16x32xf32> -> vector<16x32xf32>
    %236 = arith.addf %213, %235 : vector<16x32xf32>
    %237 = vector.extract_strided_slice %157 {offsets = [0, 24], sizes = [16, 8], strides = [1, 1]} : vector<16x32xf32> to vector<16x8xf32>
    %238 = vector.extract_strided_slice %163 {offsets = [0, 24], sizes = [24, 8], strides = [1, 1]} : vector<24x32xf32> to vector<24x8xf32>
    %cst_83 = arith.constant dense<0.000000e+00> : vector<16x24xf32>
    %239 = tpu.matmul %237, %238, %cst_83 {dimension_numbers = #tpu.dot_dimension_numbers<[1], [1], [0], [0], [0, 0, 1, 0], [], []>} : vector<16x8xf32>, vector<24x8xf32>, vector<16x24xf32> -> vector<16x24xf32>
    %240 = arith.addf %239, %5 : vector<16x24xf32>
    %cst_84 = arith.constant dense<0xFF800000> : vector<16xf32>
    %241 = vector.multi_reduction <maximumf>, %240, %cst_84 [1] : vector<16x24xf32> to vector<16xf32>
    %242 = vector.shape_cast %241 : vector<16xf32> to vector<16x1xf32>
    %243 = vector.broadcast %242 : vector<16x1xf32> to vector<16x24xf32>
    %244 = arith.subf %240, %243 : vector<16x24xf32>
    %245 = math.exp %244 : vector<16x24xf32>
    %cst_85 = arith.constant dense<0.000000e+00> : vector<16xf32>
    %246 = vector.multi_reduction <add>, %245, %cst_85 [1] : vector<16x24xf32> to vector<16xf32>
    %247 = vector.shape_cast %246 : vector<16xf32> to vector<16x1xf32>
    %248 = tpu.reciprocal %247 {approx = true} : vector<16x1xf32> -> vector<16x1xf32>
    %249 = arith.mulf %247, %248 : vector<16x1xf32>
    %cst_86 = arith.constant 2.000000e+00 : f32
    %250 = vector.broadcast %cst_86 : f32 to vector<16x1xf32>
    %251 = arith.subf %250, %249 : vector<16x1xf32>
    %252 = arith.mulf %248, %251 : vector<16x1xf32>
    %253 = vector.broadcast %252 : vector<16x1xf32> to vector<16x24xf32>
    %254 = arith.mulf %245, %253 : vector<16x24xf32>
    %255 = vector.extract_strided_slice %164 {offsets = [0, 24], sizes = [24, 8], strides = [1, 1]} : vector<24x32xf32> to vector<24x8xf32>
    %cst_87 = arith.constant dense<0.000000e+00> : vector<16x8xf32>
    %256 = tpu.matmul %254, %255, %cst_87 {dimension_numbers = #tpu.dot_dimension_numbers<[1], [0], [0], [1], [0, 0, 1, 1], [], []>} : vector<16x24xf32>, vector<24x8xf32>, vector<16x8xf32> -> vector<16x8xf32>
    %257 = vector.extract_strided_slice %166 {offsets = [24, 0], sizes = [8, 32], strides = [1, 1]} : vector<32x32xf32> to vector<8x32xf32>
    %cst_88 = arith.constant dense<0.000000e+00> : vector<16x32xf32>
    %258 = tpu.matmul %256, %257, %cst_88 {dimension_numbers = #tpu.dot_dimension_numbers<[1], [0], [0], [1], [0, 0, 1, 1], [], []>} : vector<16x8xf32>, vector<8x32xf32>, vector<16x32xf32> -> vector<16x32xf32>
    %259 = arith.addf %236, %258 : vector<16x32xf32>
    %260 = vector.broadcast %8 : vector<1x32xf32> to vector<16x32xf32>
    %261 = arith.addf %259, %260 : vector<16x32xf32>
    %262 = arith.addf %146, %261 : vector<16x32xf32>
    %cst_89 = arith.constant dense<0.000000e+00> : vector<16xf32>
    %263 = vector.multi_reduction <add>, %262, %cst_89 [1] : vector<16x32xf32> to vector<16xf32>
    %264 = vector.shape_cast %263 : vector<16xf32> to vector<16x1xf32>
    %cst_90 = arith.constant 3.125000e-02 : f32
    %265 = vector.broadcast %cst_90 : f32 to vector<16x1xf32>
    %266 = arith.mulf %264, %265 : vector<16x1xf32>
    %267 = vector.broadcast %266 : vector<16x1xf32> to vector<16x32xf32>
    %268 = arith.subf %262, %267 : vector<16x32xf32>
    %269 = arith.mulf %268, %268 : vector<16x32xf32>
    %cst_91 = arith.constant dense<0.000000e+00> : vector<16xf32>
    %270 = vector.multi_reduction <add>, %269, %cst_91 [1] : vector<16x32xf32> to vector<16xf32>
    %271 = vector.shape_cast %270 : vector<16xf32> to vector<16x1xf32>
    %cst_92 = arith.constant 3.125000e-02 : f32
    %272 = vector.broadcast %cst_92 : f32 to vector<16x1xf32>
    %273 = arith.mulf %271, %272 : vector<16x1xf32>
    %cst_93 = arith.constant 9.99999974E-6 : f32
    %274 = vector.broadcast %cst_93 : f32 to vector<16x1xf32>
    %275 = arith.addf %273, %274 : vector<16x1xf32>
    %276 = math.rsqrt %275 : vector<16x1xf32>
    %277 = vector.broadcast %276 : vector<16x1xf32> to vector<16x32xf32>
    %278 = arith.mulf %268, %277 : vector<16x32xf32>
    %279 = vector.broadcast %12 : vector<1x32xf32> to vector<16x32xf32>
    %280 = arith.mulf %278, %279 : vector<16x32xf32>
    %281 = vector.broadcast %13 : vector<1x32xf32> to vector<16x32xf32>
    %282 = arith.addf %280, %281 : vector<16x32xf32>
    %c0_94 = arith.constant 0 : index
    %c0_95 = arith.constant 0 : index
    %283 = vector.load %arg8[%c0_94, %c0_95] : memref<32x64xf32, #tpu.memory_space<vmem>>, vector<32x64xf32>
    %cst_96 = arith.constant dense<0.000000e+00> : vector<16x64xf32>
    %284 = tpu.matmul %282, %283, %cst_96 {dimension_numbers = #tpu.dot_dimension_numbers<[1], [0], [0], [1], [0, 0, 1, 1], [], []>} : vector<16x32xf32>, vector<32x64xf32>, vector<16x64xf32> -> vector<16x64xf32>
    %285 = vector.broadcast %16 : vector<1x64xf32> to vector<16x64xf32>
    %286 = arith.addf %284, %285 : vector<16x64xf32>
    %cst_97 = arith.constant 0.000000e+00 : f32
    %287 = vector.broadcast %cst_97 : f32 to vector<16x64xf32>
    %288 = arith.maximumf %286, %287 : vector<16x64xf32>
    %c0_98 = arith.constant 0 : index
    %c0_99 = arith.constant 0 : index
    %289 = vector.load %arg10[%c0_98, %c0_99] : memref<64x32xf32, #tpu.memory_space<vmem>>, vector<64x32xf32>
    %cst_100 = arith.constant dense<0.000000e+00> : vector<16x32xf32>
    %290 = tpu.matmul %288, %289, %cst_100 {dimension_numbers = #tpu.dot_dimension_numbers<[1], [0], [0], [1], [0, 0, 1, 1], [], []>} : vector<16x64xf32>, vector<64x32xf32>, vector<16x32xf32> -> vector<16x32xf32>
    %291 = vector.broadcast %9 : vector<1x32xf32> to vector<16x32xf32>
    %292 = arith.addf %290, %291 : vector<16x32xf32>
    %293 = arith.addf %282, %292 : vector<16x32xf32>
    %cst_101 = arith.constant dense<0.000000e+00> : vector<16xf32>
    %294 = vector.multi_reduction <add>, %293, %cst_101 [1] : vector<16x32xf32> to vector<16xf32>
    %295 = vector.shape_cast %294 : vector<16xf32> to vector<16x1xf32>
    %cst_102 = arith.constant 3.125000e-02 : f32
    %296 = vector.broadcast %cst_102 : f32 to vector<16x1xf32>
    %297 = arith.mulf %295, %296 : vector<16x1xf32>
    %298 = vector.broadcast %297 : vector<16x1xf32> to vector<16x32xf32>
    %299 = arith.subf %293, %298 : vector<16x32xf32>
    %300 = arith.mulf %299, %299 : vector<16x32xf32>
    %cst_103 = arith.constant dense<0.000000e+00> : vector<16xf32>
    %301 = vector.multi_reduction <add>, %300, %cst_103 [1] : vector<16x32xf32> to vector<16xf32>
    %302 = vector.shape_cast %301 : vector<16xf32> to vector<16x1xf32>
    %cst_104 = arith.constant 3.125000e-02 : f32
    %303 = vector.broadcast %cst_104 : f32 to vector<16x1xf32>
    %304 = arith.mulf %302, %303 : vector<16x1xf32>
    %cst_105 = arith.constant 9.99999974E-6 : f32
    %305 = vector.broadcast %cst_105 : f32 to vector<16x1xf32>
    %306 = arith.addf %304, %305 : vector<16x1xf32>
    %307 = math.rsqrt %306 : vector<16x1xf32>
    %308 = vector.broadcast %307 : vector<16x1xf32> to vector<16x32xf32>
    %309 = arith.mulf %299, %308 : vector<16x32xf32>
    %310 = vector.broadcast %14 : vector<1x32xf32> to vector<16x32xf32>
    %311 = arith.mulf %309, %310 : vector<16x32xf32>
    %312 = vector.broadcast %15 : vector<1x32xf32> to vector<16x32xf32>
    %313 = arith.addf %311, %312 : vector<16x32xf32>
    %314 = vector.shape_cast %313 : vector<16x32xf32> to vector<2x8x32xf32>
    %c0_106 = arith.constant 0 : index
    %c0_107 = arith.constant 0 : index
    %c0_108 = arith.constant 0 : index
    %315 = vector.load %arg12[%c0_106, %c0_107, %c0_108] : memref<2x8x32xf32, #tpu.memory_space<vmem>>, vector<2x8x32xf32>
    tpu.vector_store %arg12[%c0_106, %c0_107, %c0_108], %314 {strides = array<i32>} : memref<2x8x32xf32, #tpu.memory_space<vmem>>, vector<2x8x32xf32>,
    return
  }
  func.func @transform_0(%arg0: i32) -> (i32, i32, i32) {
    %c0_i32 = arith.constant 0 : i32
    %c0_i32_0 = arith.constant 0 : i32
    %c0_i32_1 = arith.constant 0 : i32
    return %arg0, %c0_i32, %c0_i32_0 : i32, i32, i32
  }
  func.func @transform_1(%arg0: i32) -> (i32, i32, i32) {
    %c0_i32 = arith.constant 0 : i32
    %c0_i32_0 = arith.constant 0 : i32
    %c0_i32_1 = arith.constant 0 : i32
    return %arg0, %c0_i32, %c0_i32_0 : i32, i32, i32
  }
  func.func @transform_2(%arg0: i32) -> (i32, i32) {
    %c0_i32 = arith.constant 0 : i32
    %c0_i32_0 = arith.constant 0 : i32
    %c0_i32_1 = arith.constant 0 : i32
    return %c0_i32, %c0_i32_0 : i32, i32
  }
  func.func @transform_3(%arg0: i32) -> (i32, i32) {
    %c0_i32 = arith.constant 0 : i32
    %c0_i32_0 = arith.constant 0 : i32
    %c0_i32_1 = arith.constant 0 : i32
    return %c0_i32, %c0_i32_0 : i32, i32
  }
  func.func @transform_4(%arg0: i32) -> (i32, i32, i32) {
    %c0_i32 = arith.constant 0 : i32
    %c0_i32_0 = arith.constant 0 : i32
    %c0_i32_1 = arith.constant 0 : i32
    %c0_i32_2 = arith.constant 0 : i32
    return %c0_i32, %c0_i32_0, %c0_i32_1 : i32, i32, i32
  }
  func.func @transform_5(%arg0: i32) -> (i32, i32, i32) {
    %c0_i32 = arith.constant 0 : i32
    %c0_i32_0 = arith.constant 0 : i32
    %c0_i32_1 = arith.constant 0 : i32
    %c0_i32_2 = arith.constant 0 : i32
    return %c0_i32, %c0_i32_0, %c0_i32_1 : i32, i32, i32
  }
  func.func @transform_6(%arg0: i32) -> (i32, i32, i32) {
    %c0_i32 = arith.constant 0 : i32
    %c0_i32_0 = arith.constant 0 : i32
    %c0_i32_1 = arith.constant 0 : i32
    %c0_i32_2 = arith.constant 0 : i32
    return %c0_i32, %c0_i32_0, %c0_i32_1 : i32, i32, i32
  }
  func.func @transform_7(%arg0: i32) -> (i32, i32) {
    %c0_i32 = arith.constant 0 : i32
    %c0_i32_0 = arith.constant 0 : i32
    %c0_i32_1 = arith.constant 0 : i32
    return %c0_i32, %c0_i32_0 : i32, i32
  }
  func.func @transform_8(%arg0: i32) -> (i32, i32) {
    %c0_i32 = arith.constant 0 : i32
    %c0_i32_0 = arith.constant 0 : i32
    %c0_i32_1 = arith.constant 0 : i32
    return %c0_i32, %c0_i32_0 : i32, i32
  }
  func.func @transform_9(%arg0: i32) -> (i32, i32) {
    %c0_i32 = arith.constant 0 : i32
    %c0_i32_0 = arith.constant 0 : i32
    %c0_i32_1 = arith.constant 0 : i32
    return %c0_i32, %c0_i32_0 : i32, i32
  }
  func.func @transform_10(%arg0: i32) -> (i32, i32) {
    %c0_i32 = arith.constant 0 : i32
    %c0_i32_0 = arith.constant 0 : i32
    %c0_i32_1 = arith.constant 0 : i32
    return %c0_i32, %c0_i32_0 : i32, i32
  }
  func.func @transform_11(%arg0: i32) -> (i32, i32, i32) {
    %c0_i32 = arith.constant 0 : i32
    %c0_i32_0 = arith.constant 0 : i32
    %c0_i32_1 = arith.constant 0 : i32
    return %arg0, %c0_i32, %c0_i32_0 : i32, i32, i32
  }
}

</mosaic_0001>

<llo_original>
// kernel: tpu_custom_call.1
$region0: #{tpu_custom_call.1}
  #allocation0 [shape = 'u32[]', space=smem, size = 0x4, offset = 0x4, fixed_abs, tag = 'smem constant byte address 0x4 - core index']
  #allocation1 [shape = 'u32[144,128]{1,0:T(1,128)}', space=vmem, size = 0x12000, scoped, tag = 'internal scratch']
  %s0 = inlined_call_operand.hbm [shape: f32[2,8,32], index: 0, kind: input, shape index: {}]
  %s1 = inlined_call_operand.vmem [shape: f32[2,12,32], index: 1, kind: input, shape index: {}]
  %s2 = inlined_call_operand.hbm [shape: f32[16,16], index: 2, kind: input, shape index: {}]
  %s3 = inlined_call_operand.hbm [shape: f32[16,24], index: 3, kind: input, shape index: {}]
  %s4 = inlined_call_operand.vmem [shape: f32[2,32,96], index: 4, kind: input, shape index: {}]
  %s5 = inlined_call_operand.hbm [shape: f32[2,1,96], index: 5, kind: input, shape index: {}]
  %s6 = inlined_call_operand.vmem [shape: f32[2,32,32], index: 6, kind: input, shape index: {}]
  %s7 = inlined_call_operand.vmem [shape: f32[32,64], index: 7, kind: input, shape index: {}]
  %s8 = inlined_call_operand.vmem [shape: f32[1,64], index: 8, kind: input, shape index: {}]
  %s9 = inlined_call_operand.vmem [shape: f32[64,32], index: 9, kind: input, shape index: {}]
  %s10 = inlined_call_operand.hbm [shape: f32[9,32], index: 10, kind: input, shape index: {}]
  %s11 = inlined_call_operand.hbm [shape: f32[2,8,32], index: 11, kind: output, shape index: {}]
  %s12 = sld [smem:[#allocation0]]
  $region74: #{tpu_custom_call.1} parent=0
    _
  %s14 = ssub.s32 1, %s12
  %s15 = scalar_select 0, %s14, %s12
  $region1: #{tpu_custom_call.1} parent=0
    #allocation2 [shape = 'u8[8192]{0}', space=vmem, size = 0x2000, scoped, tag = 'input window, operand 0, single buffered']
    #allocation3 [shape = 's32[1]{0}', space=sflag, size = 0x4, scoped, tag = 'scoped memory for tpu_custom_call.1']
    #allocation4 [shape = 's32[1]{0}', space=sflag, size = 0x4, scoped, tag = 'scoped memory for tpu_custom_call.1']
    #allocation5 [shape = 'u8[8192]{0}', space=vmem, size = 0x2000, scoped, tag = 'input window, operand 2, single buffered']
    #allocation6 [shape = 's32[1]{0}', space=sflag, size = 0x4, scoped, tag = 'scoped memory for tpu_custom_call.1']
    #allocation7 [shape = 'u8[8192]{0}', space=vmem, size = 0x2000, scoped, tag = 'input window, operand 3, single buffered']
    #allocation8 [shape = 'u8[1024]{0}', space=vmem, size = 0x400, scoped, tag = 'input window, operand 5, single buffered']
    #allocation9 [shape = 's32[1]{0}', space=sflag, size = 0x4, scoped, tag = 'scoped memory for tpu_custom_call.1']
    #allocation10 [shape = 'u8[8192]{0}', space=vmem, size = 0x2000, scoped, tag = 'input window, operand 10, single buffered']
    #allocation11 [shape = 'u8[8192]{0}', space=vmem, size = 0x2000, scoped, tag = 'output window, operand 0, single buffered']
    %16 = vsyncpa [#allocation3], 0
    %17 = vsyncpa [#allocation6], 0
    %18 = vsyncpa [#allocation9], 0
    %19 = vsyncpa [#allocation4], 0
    // Predicated region
    $region2: #{tpu_custom_call.1} parent=1 // pred_check
      _
    $region3: #{tpu_custom_call.1} parent=1 // pred_check_branch
      %21 = sbr.rel (0) target = $region5
    $region4: #{tpu_custom_call.1} parent=1 // pred_region
      %s23 = ssub.s32 256, 256
      %24 = vsyncadd [#allocation3], %s23
      %s25 = sshll.u32 [#allocation2], 4
      %s26 = int_to_ptr.vmem [resolvable:$true] %s25
      %31 = dma.hbm_to_vmem [thread:$0]  %s0, 256, %s26, [#allocation3], 128, 128, 8
    $region5: #{tpu_custom_call.1} parent=1 // pred_fallthru
      _
    // Predicated region
    $region6: #{tpu_custom_call.1} parent=1 // pred_check
      _
    $region7: #{tpu_custom_call.1} parent=1 // pred_check_branch
      %33 = sbr.rel (0) target = $region9
    $region8: #{tpu_custom_call.1} parent=1 // pred_region
      _
    $region9: #{tpu_custom_call.1} parent=1 // pred_fallthru
      _
    // Predicated region
    $region10: #{tpu_custom_call.1} parent=1 // pred_check
      _
    $region11: #{tpu_custom_call.1} parent=1 // pred_check_branch
      %35 = sbr.rel (0) target = $region13
    $region12: #{tpu_custom_call.1} parent=1 // pred_region
      %s37 = ssub.s32 256, 256
      %38 = vsyncadd [#allocation6], %s37
      %s39 = sshll.u32 [#allocation5], 4
      %s40 = int_to_ptr.vmem [resolvable:$true] %s39
      %45 = dma.hbm_to_vmem [thread:$0]  %s2, 256, %s40, [#allocation6], 128, 128, 8
    $region13: #{tpu_custom_call.1} parent=1 // pred_fallthru
      _
    // Predicated region
    $region14: #{tpu_custom_call.1} parent=1 // pred_check
      _
    $region15: #{tpu_custom_call.1} parent=1 // pred_check_branch
      %47 = sbr.rel (0) target = $region17
    $region16: #{tpu_custom_call.1} parent=1 // pred_region
      %s49 = ssub.s32 256, 256
      %50 = vsyncadd [#allocation6], %s49
      %s51 = sshll.u32 [#allocation7], 4
      %s52 = int_to_ptr.vmem [resolvable:$true] %s51
      %57 = dma.hbm_to_vmem [thread:$0]  %s3, 256, %s52, [#allocation6], 128, 128, 8
    $region17: #{tpu_custom_call.1} parent=1 // pred_fallthru
      _
    // Predicated region
    $region18: #{tpu_custom_call.1} parent=1 // pred_check
      _
    $region19: #{tpu_custom_call.1} parent=1 // pred_check_branch
      %59 = sbr.rel (0) target = $region21
    $region20: #{tpu_custom_call.1} parent=1 // pred_region
      _
    $region21: #{tpu_custom_call.1} parent=1 // pred_fallthru
      _
    // Predicated region
    $region22: #{tpu_custom_call.1} parent=1 // pred_check
      _
    $region23: #{tpu_custom_call.1} parent=1 // pred_check_branch
      %61 = sbr.rel (0) target = $region25
    $region24: #{tpu_custom_call.1} parent=1 // pred_region
      %s63 = ssub.s32 32, 32
      %64 = vsyncadd [#allocation9], %s63
      %s65 = sshll.u32 [#allocation8], 4
      %s66 = int_to_ptr.vmem [resolvable:$true] %s65
      %71 = dma.hbm_to_vmem [thread:$0]  %s5, 32, %s66, [#allocation9], 16, 16, 1
    $region25: #{tpu_custom_call.1} parent=1 // pred_fallthru
      _
    // Predicated region
    $region26: #{tpu_custom_call.1} parent=1 // pred_check
      _
    $region27: #{tpu_custom_call.1} parent=1 // pred_check_branch
      %73 = sbr.rel (0) target = $region29
    $region28: #{tpu_custom_call.1} parent=1 // pred_region
      _
    $region29: #{tpu_custom_call.1} parent=1 // pred_fallthru
      _
    // Predicated region
    $region30: #{tpu_custom_call.1} parent=1 // pred_check
      _
    $region31: #{tpu_custom_call.1} parent=1 // pred_check_branch
      %75 = sbr.rel (0) target = $region33
    $region32: #{tpu_custom_call.1} parent=1 // pred_region
      _
    $region33: #{tpu_custom_call.1} parent=1 // pred_fallthru
      _
    // Predicated region
    $region34: #{tpu_custom_call.1} parent=1 // pred_check
      _
    $region35: #{tpu_custom_call.1} parent=1 // pred_check_branch
      %77 = sbr.rel (0) target = $region37
    $region36: #{tpu_custom_call.1} parent=1 // pred_region
      _
    $region37: #{tpu_custom_call.1} parent=1 // pred_fallthru
      _
    // Predicated region
    $region38: #{tpu_custom_call.1} parent=1 // pred_check
      _
    $region39: #{tpu_custom_call.1} parent=1 // pred_check_branch
      %79 = sbr.rel (0) target = $region41
    $region40: #{tpu_custom_call.1} parent=1 // pred_region
      _
    $region41: #{tpu_custom_call.1} parent=1 // pred_fallthru
      _
    // Predicated region
    $region42: #{tpu_custom_call.1} parent=1 // pred_check
      _
    $region43: #{tpu_custom_call.1} parent=1 // pred_check_branch
      %81 = sbr.rel (0) target = $region45
    $region44: #{tpu_custom_call.1} parent=1 // pred_region
      %s83 = ssub.s32 256, 256
      %84 = vsyncadd [#allocation9], %s83
      %s85 = sshll.u32 [#allocation10], 4
      %s86 = int_to_ptr.vmem [resolvable:$true] %s85
      %91 = dma.hbm_to_vmem [thread:$0]  %s10, 256, %s86, [#allocation9], 128, 128, 8
    $region45: #{tpu_custom_call.1} parent=1 // pred_fallthru
      _
    // Predicated region
    $region46: #{tpu_custom_call.1} parent=1 // pred_check
      _
    $region47: #{tpu_custom_call.1} parent=1 // pred_check_branch
      %93 = sbr.rel (0) target = $region49
    $region48: #{tpu_custom_call.1} parent=1 // pred_region
      %94 = dma.done [#allocation3], 256
    $region49: #{tpu_custom_call.1} parent=1 // pred_fallthru
      _
    // Predicated region
    $region50: #{tpu_custom_call.1} parent=1 // pred_check
      _
    $region51: #{tpu_custom_call.1} parent=1 // pred_check_branch
      %96 = sbr.rel (0) target = $region53
    $region52: #{tpu_custom_call.1} parent=1 // pred_region
      %97 = dma.done [#allocation6], 256
    $region53: #{tpu_custom_call.1} parent=1 // pred_fallthru
      _
    // Predicated region
    $region54: #{tpu_custom_call.1} parent=1 // pred_check
      _
    $region55: #{tpu_custom_call.1} parent=1 // pred_check_branch
      %99 = sbr.rel (0) target = $region57
    $region56: #{tpu_custom_call.1} parent=1 // pred_region
      %100 = dma.done [#allocation6], 256
    $region57: #{tpu_custom_call.1} parent=1 // pred_fallthru
      _
    // Predicated region
    $region58: #{tpu_custom_call.1} parent=1 // pred_check
      _
    $region59: #{tpu_custom_call.1} parent=1 // pred_check_branch
      %102 = sbr.rel (0) target = $region61
    $region60: #{tpu_custom_call.1} parent=1 // pred_region
      %103 = dma.done [#allocation9], 32
    $region61: #{tpu_custom_call.1} parent=1 // pred_fallthru
      _
    // Predicated region
    $region62: #{tpu_custom_call.1} parent=1 // pred_check
      _
    $region63: #{tpu_custom_call.1} parent=1 // pred_check_branch
      %105 = sbr.rel (0) target = $region65
    $region64: #{tpu_custom_call.1} parent=1 // pred_region
      %106 = dma.done [#allocation9], 256
    $region65: #{tpu_custom_call.1} parent=1 // pred_fallthru
      _
    %v107 = vld [vmem:[#allocation2] sm:$0xff]
    %v108 = vld [vmem:[#allocation2 + $0x8] sm:$0xff]
    %v109 = vld [vmem:[%s1] sm:$0xff]
    %v110 = vld [vmem:[%s1 + $0x8] sm:$0xf]
    %v111 = vld [vmem:[%s1 + $0x10] sm:$0xff]
    %v112 = vld [vmem:[%s1 + $0x18] sm:$0xf]
    %v117 = vcombine.high %v109, %v109
    %v118 = vcombine.high %v111, %v111
    %v119 = vld [vmem:[#allocation5] sm:$0xff]
    %v120 = vld [vmem:[#allocation5 + $0x8] sm:$0xff]
    %v121 = vld [vmem:[#allocation7] sm:$0xff]
    %v122 = vld [vmem:[#allocation7 + $0x8] sm:$0xff]
    %v123 = vld [vmem:[#allocation10] sm:$0xff]
    %v124 = vld [vmem:[#allocation10 + $0x8] sm:$0x1]
    %v125 = vld [vmem:[%s8] sm:$0x1]
    %v126 = vld [vmem:[%s4] sm:$0xff]
    %v127 = vld [vmem:[%s4 + $0x8] sm:$0xff]
    %v128 = vld [vmem:[%s4 + $0x10] sm:$0xff]
    %v129 = vld [vmem:[%s4 + $0x18] sm:$0xff]
    %v130 = vld [vmem:[#allocation8] sm:$0x1]
    %v132 = vlaneseq
    %v133 = vshrl.u32 %v132, 7
    %v134 = vsub.s32 0, %v133
    %v135 = vrot.slane %v130, %v134
    %vm137 = vcmask 261120
    %v139 = vsel %vm137, %v107, 0
    %v142 = vsel %vm137, %v108, 0
    %144 = vmatprep.subr.mxu0 0.0
    %145 = vmatpush1.msra.mxu0 0.0
    %146 = vmatprep.subr.mxu0 0.0
    %147 = vmatpush1.msra.mxu0 0.0
    %148 = vmatprep.subr.mxu0 0.0
    %149 = vmatpush1.msra.mxu0 0.0
    %150 = vmatprep.subr.mxu0 0.0
    %151 = vmatpush1.msra.mxu0 0.0
    %152 = vmatprep.subr.mxu0 0.0
    %153 = vmatpush1.msra.mxu0 0.0
    %154 = vmatprep.subr.mxu0 0.0
    %155 = vmatpush1.msra.mxu0 0.0
    %156 = vmatprep.subr.mxu0 0.0
    %157 = vmatpush1.msra.mxu0 0.0
    %158 = vmatprep.subr.mxu0 0.0
    %159 = vmatpush1.msra.mxu0 0.0
    %160 = vmatprep.subr.mxu0 0.0
    %161 = vmatpush1.msra.mxu0 0.0
    %162 = vmatprep.subr.mxu0 0.0
    %163 = vmatpush1.msra.mxu0 0.0
    %164 = vmatprep.subr.mxu0 0.0
    %165 = vmatpush1.msra.mxu0 0.0
    %166 = vmatprep.subr.mxu0 0.0
    %167 = vmatpush1.msra.mxu0 0.0
    %168 = vmatprep.subr.mxu0 0.0
    %169 = vmatpush1.msra.mxu0 %v129
    %170 = vmatprep.subr.mxu0 0.0
    %171 = vmatpush1.msra.mxu0 %v128
    %172 = vmatprep.subr.mxu0 0.0
    %173 = vmatpush1.msra.mxu0 %v127
    %174 = vmatprep.subr.mxu0 0.0
    %175 = vmatpush1.msra.mxu0 %v126
    %176 = vmatprep.subr.mxu0 0.0
    %177 = vmatpush2.msra.mxu0 0.0
    %178 = vmatprep.subr.mxu0 0.0
    %179 = vmatpush2.msra.mxu0 0.0
    %180 = vmatprep.subr.mxu0 0.0
    %181 = vmatpush2.msra.mxu0 0.0
    %182 = vmatprep.subr.mxu0 0.0
    %183 = vmatpush2.msra.mxu0 0.0
    %184 = vmatprep.subr.mxu0 0.0
    %185 = vmatpush2.msra.mxu0 0.0
    %186 = vmatprep.subr.mxu0 0.0
    %187 = vmatpush2.msra.mxu0 0.0
    %188 = vmatprep.subr.mxu0 0.0
    %189 = vmatpush2.msra.mxu0 0.0
    %190 = vmatprep.subr.mxu0 0.0
    %191 = vmatpush2.msra.mxu0 0.0
    %192 = vmatprep.subr.mxu0 0.0
    %193 = vmatpush2.msra.mxu0 0.0
    %194 = vmatprep.subr.mxu0 0.0
    %195 = vmatpush2.msra.mxu0 0.0
    %196 = vmatprep.subr.mxu0 0.0
    %197 = vmatpush2.msra.mxu0 0.0
    %198 = vmatprep.subr.mxu0 0.0
    %199 = vmatpush2.msra.mxu0 0.0
    %200 = vmatprep.subr.mxu0 0.0
    %201 = vmatpush2.msra.mxu0 0.0
    %202 = vmatprep.subr.mxu0 0.0
    %203 = vmatpush2.msra.mxu0 0.0
    %204 = vmatprep.subr.mxu0 0.0
    %205 = vmatpush2.msra.mxu0 0.0
    %206 = vmatprep.subr.mxu0 0.0
    %207 = vmatpush2.msra.mxu0 0.0
    %208 = vmatprep.mubr.f32.mxu0 0.0
    %209 = vmatmul.mubr.f32.gmra.mxu0 %v139
    %v210 = vpop.f32.mrf.mxu0
    %v211 = vadd.f32 %v135, %v210
    %v212 = vpop.f32.mrf.mxu0
    %213 = vmatprep.mubr.f32.mxu0 0.0
    %214 = vmatmul.mubr.f32.gmra.mxu0 %v142
    %v215 = vpop.f32.mrf.mxu0
    %v216 = vadd.f32 %v135, %v215
    %v217 = vpop.f32.mrf.mxu0
    %218 = vdwg.mxu0
    %v219 = vmul.f32 %v211, 0.35355338
    %v220 = vmul.f32 %v216, 0.35355338
    %v221 = vld [vmem:[%s6] sm:$0xff]
    %v222 = vld [vmem:[%s6 + $0x8] sm:$0xff]
    %v223 = vld [vmem:[%s6 + $0x10] sm:$0xff]
    %v224 = vld [vmem:[%s6 + $0x18] sm:$0xff]
    %227 = vrot.lane.b32.xlu0 %v211, 96
    %v228 = vpop.permute.xlu0 %227
    %229 = vrot.lane.b32.xlu0 %v216, 96
    %v230 = vpop.permute.xlu0 %229
    %vm231 = vcmask 64512
    %v233 = vsel %vm231, %v219, 0
    %v236 = vsel %vm231, %v220, 0
    %v238 = vsel %vm231, %v228, 0
    %v240 = vsel %vm231, %v230, 0
    %242 = vmatprep.subr.mxu0 0.0
    %243 = vmatpush1.xpose.msra.mxu0 0.0
    %244 = vmatprep.subr.mxu0 0.0
    %245 = vmatpush1.xpose.msra.mxu0 0.0
    %246 = vmatprep.subr.mxu0 0.0
    %247 = vmatpush1.xpose.msra.mxu0 0.0
    %248 = vmatprep.subr.mxu0 0.0
    %249 = vmatpush1.xpose.msra.mxu0 0.0
    %250 = vmatprep.subr.mxu0 0.0
    %251 = vmatpush1.xpose.msra.mxu0 0.0
    %252 = vmatprep.subr.mxu0 0.0
    %253 = vmatpush1.xpose.msra.mxu0 0.0
    %254 = vmatprep.subr.mxu0 0.0
    %255 = vmatpush1.xpose.msra.mxu0 0.0
    %256 = vmatprep.subr.mxu0 0.0
    %257 = vmatpush1.xpose.msra.mxu0 0.0
    %258 = vmatprep.subr.mxu0 0.0
    %259 = vmatpush1.xpose.msra.mxu0 0.0
    %260 = vmatprep.subr.mxu0 0.0
    %261 = vmatpush1.xpose.msra.mxu0 0.0
    %262 = vmatprep.subr.mxu0 0.0
    %263 = vmatpush1.xpose.msra.mxu0 0.0
    %264 = vmatprep.subr.mxu0 0.0
    %265 = vmatpush1.xpose.msra.mxu0 0.0
    %266 = vmatprep.subr.mxu0 0.0
    %267 = vmatpush1.xpose.msra.mxu0 0.0
    %268 = vmatprep.subr.mxu0 0.0
    %269 = vmatpush1.xpose.msra.mxu0 0.0
    %270 = vmatprep.subr.mxu0 0.0
    %271 = vmatpush1.xpose.msra.mxu0 %v240
    %272 = vmatprep.subr.mxu0 0.0
    %273 = vmatpush1.xpose.msra.mxu0 %v238
    %274 = vmatprep.subr.mxu0 0.0
    %275 = vmatpush2.xpose.msra.mxu0 0.0
    %276 = vmatprep.subr.mxu0 0.0
    %277 = vmatpush2.xpose.msra.mxu0 0.0
    %278 = vmatprep.subr.mxu0 0.0
    %279 = vmatpush2.xpose.msra.mxu0 0.0
    %280 = vmatprep.subr.mxu0 0.0
    %281 = vmatpush2.xpose.msra.mxu0 0.0
    %282 = vmatprep.subr.mxu0 0.0
    %283 = vmatpush2.xpose.msra.mxu0 0.0
    %284 = vmatprep.subr.mxu0 0.0
    %285 = vmatpush2.xpose.msra.mxu0 0.0
    %286 = vmatprep.subr.mxu0 0.0
    %287 = vmatpush2.xpose.msra.mxu0 0.0
    %288 = vmatprep.subr.mxu0 0.0
    %289 = vmatpush2.xpose.msra.mxu0 0.0
    %290 = vmatprep.subr.mxu0 0.0
    %291 = vmatpush2.xpose.msra.mxu0 0.0
    %292 = vmatprep.subr.mxu0 0.0
    %293 = vmatpush2.xpose.msra.mxu0 0.0
    %294 = vmatprep.subr.mxu0 0.0
    %295 = vmatpush2.xpose.msra.mxu0 0.0
    %296 = vmatprep.subr.mxu0 0.0
    %297 = vmatpush2.xpose.msra.mxu0 0.0
    %298 = vmatprep.subr.mxu0 0.0
    %299 = vmatpush2.xpose.msra.mxu0 0.0
    %300 = vmatprep.subr.mxu0 0.0
    %301 = vmatpush2.xpose.msra.mxu0 0.0
    %302 = vmatprep.subr.mxu0 0.0
    %303 = vmatpush2.xpose.msra.mxu0 0.0
    %304 = vmatprep.subr.mxu0 0.0
    %305 = vmatpush2.xpose.msra.mxu0 0.0
    %306 = vmatprep.mubr.f32.mxu0 0.0
    %307 = vmatmul.mubr.f32.gmra.mxu0 %v233
    %v308 = vpop.f32.mrf.mxu0
    %v309 = vadd.f32 %v119, %v308
    %v310 = vpop.f32.mrf.mxu0
    %311 = vmatprep.mubr.f32.mxu0 0.0
    %312 = vmatmul.mubr.f32.gmra.mxu0 %v236
    %v313 = vpop.f32.mrf.mxu0
    %v314 = vadd.f32 %v120, %v313
    %v315 = vpop.f32.mrf.mxu0
    %316 = vdwg.mxu0
    %vm317 = vcmask 130048
    %v318 = vsel %vm317, %v309, -inf
    %319 = vmax.xlane.f32.xlu0 %v318
    %v320 = vpop.xlane.xlu0 %319
    %v321 = vsel %vm317, %v314, -inf
    %322 = vmax.xlane.f32.xlu0 %v321
    %v323 = vpop.xlane.xlu0 %322
    %v324 = vsub.f32 %v309, %v320
    %v325 = vsub.f32 %v314, %v323
    %v326 = vmul.f32 %v324, 1.442695
    %v327 = vpow.pop %v326
    %v328 = vmul.f32 %v325, 1.442695
    %v329 = vpow.pop %v328
    %v330 = vsel %vm317, %v327, 0.0
    %331 = vadd.xlane.f32.xlu0 %v330
    %v332 = vpop.xlane.xlu0 %331
    %v333 = vsel %vm317, %v329, 0.0
    %334 = vadd.xlane.f32.xlu0 %v333
    %v335 = vpop.xlane.xlu0 %334
    %v336 = vrcp.pop %v332
    %v337 = vrcp.pop %v335
    %v338 = vmul.f32 %v332, %v336
    %v339 = vmul.f32 %v335, %v337
    %v340 = vsub.f32 2.0, %v338
    %v341 = vsub.f32 2.0, %v339
    %v342 = vmul.f32 %v336, %v340
    %v343 = vmul.f32 %v337, %v341
    %v344 = vmul.f32 %v327, %v342
    %v345 = vmul.f32 %v329, %v343
    %346 = vrot.lane.b32.xlu0 %v211, 64
    %v347 = vpop.permute.xlu0 %346
    %348 = vrot.lane.b32.xlu0 %v216, 64
    %v349 = vpop.permute.xlu0 %348
    %v353 = vsel %vm317, %v344, 0
    %v356 = vsel %vm317, %v345, 0
    %358 = vmatprep.subr.mxu0 0.0
    %359 = vmatpush1.msra.mxu0 0.0
    %360 = vmatprep.subr.mxu0 0.0
    %361 = vmatpush1.msra.mxu0 0.0
    %362 = vmatprep.subr.mxu0 0.0
    %363 = vmatpush1.msra.mxu0 0.0
    %364 = vmatprep.subr.mxu0 0.0
    %365 = vmatpush1.msra.mxu0 0.0
    %366 = vmatprep.subr.mxu0 0.0
    %367 = vmatpush1.msra.mxu0 0.0
    %368 = vmatprep.subr.mxu0 0.0
    %369 = vmatpush1.msra.mxu0 0.0
    %370 = vmatprep.subr.mxu0 0.0
    %371 = vmatpush1.msra.mxu0 0.0
    %372 = vmatprep.subr.mxu0 0.0
    %373 = vmatpush1.msra.mxu0 0.0
    %374 = vmatprep.subr.mxu0 0.0
    %375 = vmatpush1.msra.mxu0 0.0
    %376 = vmatprep.subr.mxu0 0.0
    %377 = vmatpush1.msra.mxu0 0.0
    %378 = vmatprep.subr.mxu0 0.0
    %379 = vmatpush1.msra.mxu0 0.0
    %380 = vmatprep.subr.mxu0 0.0
    %381 = vmatpush1.msra.mxu0 0.0
    %382 = vmatprep.subr.mxu0 0.0
    %383 = vmatpush1.msra.mxu0 0.0
    %384 = vmatprep.subr.mxu0 0.0
    %385 = vmatpush1.msra.mxu0 0.0
    %386 = vmatprep.subr.mxu0 0.0
    %387 = vmatpush1.msra.mxu0 %v349
    %388 = vmatprep.subr.mxu0 0.0
    %389 = vmatpush1.msra.mxu0 %v347
    %390 = vmatprep.subr.mxu0 0.0
    %391 = vmatpush2.msra.mxu0 0.0
    %392 = vmatprep.subr.mxu0 0.0
    %393 = vmatpush2.msra.mxu0 0.0
    %394 = vmatprep.subr.mxu0 0.0
    %395 = vmatpush2.msra.mxu0 0.0
    %396 = vmatprep.subr.mxu0 0.0
    %397 = vmatpush2.msra.mxu0 0.0
    %398 = vmatprep.subr.mxu0 0.0
    %399 = vmatpush2.msra.mxu0 0.0
    %400 = vmatprep.subr.mxu0 0.0
    %401 = vmatpush2.msra.mxu0 0.0
    %402 = vmatprep.subr.mxu0 0.0
    %403 = vmatpush2.msra.mxu0 0.0
    %404 = vmatprep.subr.mxu0 0.0
    %405 = vmatpush2.msra.mxu0 0.0
    %406 = vmatprep.subr.mxu0 0.0
    %407 = vmatpush2.msra.mxu0 0.0
    %408 = vmatprep.subr.mxu0 0.0
    %409 = vmatpush2.msra.mxu0 0.0
    %410 = vmatprep.subr.mxu0 0.0
    %411 = vmatpush2.msra.mxu0 0.0
    %412 = vmatprep.subr.mxu0 0.0
    %413 = vmatpush2.msra.mxu0 0.0
    %414 = vmatprep.subr.mxu0 0.0
    %415 = vmatpush2.msra.mxu0 0.0
    %416 = vmatprep.subr.mxu0 0.0
    %417 = vmatpush2.msra.mxu0 0.0
    %418 = vmatprep.subr.mxu0 0.0
    %419 = vmatpush2.msra.mxu0 0.0
    %420 = vmatprep.subr.mxu0 0.0
    %421 = vmatpush2.msra.mxu0 0.0
    %422 = vmatprep.mubr.f32.mxu0 0.0
    %423 = vmatmul.mubr.f32.gmra.mxu0 %v353
    %v424 = vpop.f32.mrf.mxu0
    %v425 = vadd.f32 0.0, %v424
    %v426 = vpop.f32.mrf.mxu0
    %427 = vmatprep.mubr.f32.mxu0 0.0
    %428 = vmatmul.mubr.f32.gmra.mxu0 %v356
    %v429 = vpop.f32.mrf.mxu0
    %v430 = vadd.f32 0.0, %v429
    %v431 = vpop.f32.mrf.mxu0
    %432 = vdwg.mxu0
    %433 = vrot.lane.b32.xlu0 %v219, 120
    %v434 = vpop.permute.xlu0 %433
    %435 = vrot.lane.b32.xlu0 %v220, 120
    %v436 = vpop.permute.xlu0 %435
    %437 = vrot.lane.b32.xlu0 %v211, 88
    %v438 = vpop.permute.xlu0 %437
    %439 = vrot.lane.b32.xlu0 %v216, 88
    %v440 = vpop.permute.xlu0 %439
    %v441 = vsel %vm231, %v434, 0
    %v443 = vsel %vm231, %v436, 0
    %v445 = vsel %vm231, %v438, 0
    %v447 = vsel %vm231, %v440, 0
    %449 = vmatprep.subr.mxu0 0.0
    %450 = vmatpush1.xpose.msra.mxu0 0.0
    %451 = vmatprep.subr.mxu0 0.0
    %452 = vmatpush1.xpose.msra.mxu0 0.0
    %453 = vmatprep.subr.mxu0 0.0
    %454 = vmatpush1.xpose.msra.mxu0 0.0
    %455 = vmatprep.subr.mxu0 0.0
    %456 = vmatpush1.xpose.msra.mxu0 0.0
    %457 = vmatprep.subr.mxu0 0.0
    %458 = vmatpush1.xpose.msra.mxu0 0.0
    %459 = vmatprep.subr.mxu0 0.0
    %460 = vmatpush1.xpose.msra.mxu0 0.0
    %461 = vmatprep.subr.mxu0 0.0
    %462 = vmatpush1.xpose.msra.mxu0 0.0
    %463 = vmatprep.subr.mxu0 0.0
    %464 = vmatpush1.xpose.msra.mxu0 0.0
    %465 = vmatprep.subr.mxu0 0.0
    %466 = vmatpush1.xpose.msra.mxu0 0.0
    %467 = vmatprep.subr.mxu0 0.0
    %468 = vmatpush1.xpose.msra.mxu0 0.0
    %469 = vmatprep.subr.mxu0 0.0
    %470 = vmatpush1.xpose.msra.mxu0 0.0
    %471 = vmatprep.subr.mxu0 0.0
    %472 = vmatpush1.xpose.msra.mxu0 0.0
    %473 = vmatprep.subr.mxu0 0.0
    %474 = vmatpush1.xpose.msra.mxu0 0.0
    %475 = vmatprep.subr.mxu0 0.0
    %476 = vmatpush1.xpose.msra.mxu0 0.0
    %477 = vmatprep.subr.mxu0 0.0
    %478 = vmatpush1.xpose.msra.mxu0 %v447
    %479 = vmatprep.subr.mxu0 0.0
    %480 = vmatpush1.xpose.msra.mxu0 %v445
    %481 = vmatprep.subr.mxu0 0.0
    %482 = vmatpush2.xpose.msra.mxu0 0.0
    %483 = vmatprep.subr.mxu0 0.0
    %484 = vmatpush2.xpose.msra.mxu0 0.0
    %485 = vmatprep.subr.mxu0 0.0
    %486 = vmatpush2.xpose.msra.mxu0 0.0
    %487 = vmatprep.subr.mxu0 0.0
    %488 = vmatpush2.xpose.msra.mxu0 0.0
    %489 = vmatprep.subr.mxu0 0.0
    %490 = vmatpush2.xpose.msra.mxu0 0.0
    %491 = vmatprep.subr.mxu0 0.0
    %492 = vmatpush2.xpose.msra.mxu0 0.0
    %493 = vmatprep.subr.mxu0 0.0
    %494 = vmatpush2.xpose.msra.mxu0 0.0
    %495 = vmatprep.subr.mxu0 0.0
    %496 = vmatpush2.xpose.msra.mxu0 0.0
    %497 = vmatprep.subr.mxu0 0.0
    %498 = vmatpush2.xpose.msra.mxu0 0.0
    %499 = vmatprep.subr.mxu0 0.0
    %500 = vmatpush2.xpose.msra.mxu0 0.0
    %501 = vmatprep.subr.mxu0 0.0
    %502 = vmatpush2.xpose.msra.mxu0 0.0
    %503 = vmatprep.subr.mxu0 0.0
    %504 = vmatpush2.xpose.msra.mxu0 0.0
    %505 = vmatprep.subr.mxu0 0.0
    %506 = vmatpush2.xpose.msra.mxu0 0.0
    %507 = vmatprep.subr.mxu0 0.0
    %508 = vmatpush2.xpose.msra.mxu0 0.0
    %509 = vmatprep.subr.mxu0 0.0
    %510 = vmatpush2.xpose.msra.mxu0 0.0
    %511 = vmatprep.subr.mxu0 0.0
    %512 = vmatpush2.xpose.msra.mxu0 0.0
    %513 = vmatprep.mubr.f32.mxu0 0.0
    %514 = vmatmul.mubr.f32.gmra.mxu0 %v441
    %v515 = vpop.f32.mrf.mxu0
    %v516 = vadd.f32 %v119, %v515
    %v517 = vpop.f32.mrf.mxu0
    %518 = vmatprep.mubr.f32.mxu0 0.0
    %519 = vmatmul.mubr.f32.gmra.mxu0 %v443
    %v520 = vpop.f32.mrf.mxu0
    %v521 = vadd.f32 %v120, %v520
    %v522 = vpop.f32.mrf.mxu0
    %523 = vdwg.mxu0
    %v524 = vsel %vm317, %v516, -inf
    %525 = vmax.xlane.f32.xlu0 %v524
    %v526 = vpop.xlane.xlu0 %525
    %v527 = vsel %vm317, %v521, -inf
    %528 = vmax.xlane.f32.xlu0 %v527
    %v529 = vpop.xlane.xlu0 %528
    %v530 = vsub.f32 %v516, %v526
    %v531 = vsub.f32 %v521, %v529
    %v532 = vmul.f32 %v530, 1.442695
    %v533 = vpow.pop %v532
    %v534 = vmul.f32 %v531, 1.442695
    %v535 = vpow.pop %v534
    %v536 = vsel %vm317, %v533, 0.0
    %537 = vadd.xlane.f32.xlu0 %v536
    %v538 = vpop.xlane.xlu0 %537
    %v539 = vsel %vm317, %v535, 0.0
    %540 = vadd.xlane.f32.xlu0 %v539
    %v541 = vpop.xlane.xlu0 %540
    %v542 = vrcp.pop %v538
    %v543 = vrcp.pop %v541
    %v544 = vmul.f32 %v538, %v542
    %v545 = vmul.f32 %v541, %v543
    %v546 = vsub.f32 2.0, %v544
    %v547 = vsub.f32 2.0, %v545
    %v548 = vmul.f32 %v542, %v546
    %v549 = vmul.f32 %v543, %v547
    %v550 = vmul.f32 %v533, %v548
    %v551 = vmul.f32 %v535, %v549
    %552 = vrot.lane.b32.xlu0 %v211, 56
    %v553 = vpop.permute.xlu0 %552
    %554 = vrot.lane.b32.xlu0 %v216, 56
    %v555 = vpop.permute.xlu0 %554
    %v559 = vsel %vm317, %v550, 0
    %v562 = vsel %vm317, %v551, 0
    %564 = vmatprep.subr.mxu0 0.0
    %565 = vmatpush1.msra.mxu0 0.0
    %566 = vmatprep.subr.mxu0 0.0
    %567 = vmatpush1.msra.mxu0 0.0
    %568 = vmatprep.subr.mxu0 0.0
    %569 = vmatpush1.msra.mxu0 0.0
    %570 = vmatprep.subr.mxu0 0.0
    %571 = vmatpush1.msra.mxu0 0.0
    %572 = vmatprep.subr.mxu0 0.0
    %573 = vmatpush1.msra.mxu0 0.0
    %574 = vmatprep.subr.mxu0 0.0
    %575 = vmatpush1.msra.mxu0 0.0
    %576 = vmatprep.subr.mxu0 0.0
    %577 = vmatpush1.msra.mxu0 0.0
    %578 = vmatprep.subr.mxu0 0.0
    %579 = vmatpush1.msra.mxu0 0.0
    %580 = vmatprep.subr.mxu0 0.0
    %581 = vmatpush1.msra.mxu0 0.0
    %582 = vmatprep.subr.mxu0 0.0
    %583 = vmatpush1.msra.mxu0 0.0
    %584 = vmatprep.subr.mxu0 0.0
    %585 = vmatpush1.msra.mxu0 0.0
    %586 = vmatprep.subr.mxu0 0.0
    %587 = vmatpush1.msra.mxu0 0.0
    %588 = vmatprep.subr.mxu0 0.0
    %589 = vmatpush1.msra.mxu0 0.0
    %590 = vmatprep.subr.mxu0 0.0
    %591 = vmatpush1.msra.mxu0 0.0
    %592 = vmatprep.subr.mxu0 0.0
    %593 = vmatpush1.msra.mxu0 %v555
    %594 = vmatprep.subr.mxu0 0.0
    %595 = vmatpush1.msra.mxu0 %v553
    %596 = vmatprep.subr.mxu0 0.0
    %597 = vmatpush2.msra.mxu0 0.0
    %598 = vmatprep.subr.mxu0 0.0
    %599 = vmatpush2.msra.mxu0 0.0
    %600 = vmatprep.subr.mxu0 0.0
    %601 = vmatpush2.msra.mxu0 0.0
    %602 = vmatprep.subr.mxu0 0.0
    %603 = vmatpush2.msra.mxu0 0.0
    %604 = vmatprep.subr.mxu0 0.0
    %605 = vmatpush2.msra.mxu0 0.0
    %606 = vmatprep.subr.mxu0 0.0
    %607 = vmatpush2.msra.mxu0 0.0
    %608 = vmatprep.subr.mxu0 0.0
    %609 = vmatpush2.msra.mxu0 0.0
    %610 = vmatprep.subr.mxu0 0.0
    %611 = vmatpush2.msra.mxu0 0.0
    %612 = vmatprep.subr.mxu0 0.0
    %613 = vmatpush2.msra.mxu0 0.0
    %614 = vmatprep.subr.mxu0 0.0
    %615 = vmatpush2.msra.mxu0 0.0
    %616 = vmatprep.subr.mxu0 0.0
    %617 = vmatpush2.msra.mxu0 0.0
    %618 = vmatprep.subr.mxu0 0.0
    %619 = vmatpush2.msra.mxu0 0.0
    %620 = vmatprep.subr.mxu0 0.0
    %621 = vmatpush2.msra.mxu0 0.0
    %622 = vmatprep.subr.mxu0 0.0
    %623 = vmatpush2.msra.mxu0 0.0
    %624 = vmatprep.subr.mxu0 0.0
    %625 = vmatpush2.msra.mxu0 0.0
    %626 = vmatprep.subr.mxu0 0.0
    %627 = vmatpush2.msra.mxu0 0.0
    %628 = vmatprep.mubr.f32.mxu0 0.0
    %629 = vmatmul.mubr.f32.gmra.mxu0 %v559
    %v630 = vpop.f32.mrf.mxu0
    %v631 = vadd.f32 0.0, %v630
    %v632 = vpop.f32.mrf.mxu0
    %633 = vmatprep.mubr.f32.mxu0 0.0
    %634 = vmatmul.mubr.f32.gmra.mxu0 %v562
    %v635 = vpop.f32.mrf.mxu0
    %v636 = vadd.f32 0.0, %v635
    %v637 = vpop.f32.mrf.mxu0
    %638 = vdwg.mxu0
    %v640 = vsel %vm231, %v631, 0
    %v643 = vsel %vm231, %v636, 0
    %645 = vmatprep.subr.mxu0 0.0
    %646 = vmatpush1.msra.mxu0 0.0
    %647 = vmatprep.subr.mxu0 0.0
    %648 = vmatpush1.msra.mxu0 0.0
    %649 = vmatprep.subr.mxu0 0.0
    %650 = vmatpush1.msra.mxu0 0.0
    %651 = vmatprep.subr.mxu0 0.0
    %652 = vmatpush1.msra.mxu0 0.0
    %653 = vmatprep.subr.mxu0 0.0
    %654 = vmatpush1.msra.mxu0 0.0
    %655 = vmatprep.subr.mxu0 0.0
    %656 = vmatpush1.msra.mxu0 0.0
    %657 = vmatprep.subr.mxu0 0.0
    %658 = vmatpush1.msra.mxu0 0.0
    %659 = vmatprep.subr.mxu0 0.0
    %660 = vmatpush1.msra.mxu0 0.0
    %661 = vmatprep.subr.mxu0 0.0
    %662 = vmatpush1.msra.mxu0 0.0
    %663 = vmatprep.subr.mxu0 0.0
    %664 = vmatpush1.msra.mxu0 0.0
    %665 = vmatprep.subr.mxu0 0.0
    %666 = vmatpush1.msra.mxu0 0.0
    %667 = vmatprep.subr.mxu0 0.0
    %668 = vmatpush1.msra.mxu0 0.0
    %669 = vmatprep.subr.mxu0 0.0
    %670 = vmatpush1.msra.mxu0 0.0
    %671 = vmatprep.subr.mxu0 0.0
    %672 = vmatpush1.msra.mxu0 0.0
    %673 = vmatprep.subr.mxu0 0.0
    %674 = vmatpush1.msra.mxu0 0.0
    %675 = vmatprep.subr.mxu0 0.0
    %676 = vmatpush1.msra.mxu0 %v222
    %677 = vmatprep.subr.mxu0 0.0
    %678 = vmatpush2.msra.mxu0 0.0
    %679 = vmatprep.subr.mxu0 0.0
    %680 = vmatpush2.msra.mxu0 0.0
    %681 = vmatprep.subr.mxu0 0.0
    %682 = vmatpush2.msra.mxu0 0.0
    %683 = vmatprep.subr.mxu0 0.0
    %684 = vmatpush2.msra.mxu0 0.0
    %685 = vmatprep.subr.mxu0 0.0
    %686 = vmatpush2.msra.mxu0 0.0
    %687 = vmatprep.subr.mxu0 0.0
    %688 = vmatpush2.msra.mxu0 0.0
    %689 = vmatprep.subr.mxu0 0.0
    %690 = vmatpush2.msra.mxu0 0.0
    %691 = vmatprep.subr.mxu0 0.0
    %692 = vmatpush2.msra.mxu0 0.0
    %693 = vmatprep.subr.mxu0 0.0
    %694 = vmatpush2.msra.mxu0 0.0
    %695 = vmatprep.subr.mxu0 0.0
    %696 = vmatpush2.msra.mxu0 0.0
    %697 = vmatprep.subr.mxu0 0.0
    %698 = vmatpush2.msra.mxu0 0.0
    %699 = vmatprep.subr.mxu0 0.0
    %700 = vmatpush2.msra.mxu0 0.0
    %701 = vmatprep.subr.mxu0 0.0
    %702 = vmatpush2.msra.mxu0 0.0
    %703 = vmatprep.subr.mxu0 0.0
    %704 = vmatpush2.msra.mxu0 0.0
    %705 = vmatprep.subr.mxu0 0.0
    %706 = vmatpush2.msra.mxu0 0.0
    %707 = vmatprep.subr.mxu0 0.0
    %708 = vmatpush2.msra.mxu0 0.0
    %709 = vmatprep.mubr.f32.mxu0 0.0
    %710 = vmatmul.mubr.f32.gmra.mxu0 %v640
    %v711 = vpop.f32.mrf.mxu0
    %v712 = vadd.f32 0.0, %v711
    %v713 = vpop.f32.mrf.mxu0
    %714 = vmatprep.mubr.f32.mxu0 0.0
    %715 = vmatmul.mubr.f32.gmra.mxu0 %v643
    %v716 = vpop.f32.mrf.mxu0
    %v717 = vadd.f32 0.0, %v716
    %v718 = vpop.f32.mrf.mxu0
    %719 = vdwg.mxu0
    %v721 = vsel %vm231, %v425, 0
    %v724 = vsel %vm231, %v430, 0
    %726 = vmatprep.subr.mxu0 0.0
    %727 = vmatpush1.msra.mxu0 0.0
    %728 = vmatprep.subr.mxu0 0.0
    %729 = vmatpush1.msra.mxu0 0.0
    %730 = vmatprep.subr.mxu0 0.0
    %731 = vmatpush1.msra.mxu0 0.0
    %732 = vmatprep.subr.mxu0 0.0
    %733 = vmatpush1.msra.mxu0 0.0
    %734 = vmatprep.subr.mxu0 0.0
    %735 = vmatpush1.msra.mxu0 0.0
    %736 = vmatprep.subr.mxu0 0.0
    %737 = vmatpush1.msra.mxu0 0.0
    %738 = vmatprep.subr.mxu0 0.0
    %739 = vmatpush1.msra.mxu0 0.0
    %740 = vmatprep.subr.mxu0 0.0
    %741 = vmatpush1.msra.mxu0 0.0
    %742 = vmatprep.subr.mxu0 0.0
    %743 = vmatpush1.msra.mxu0 0.0
    %744 = vmatprep.subr.mxu0 0.0
    %745 = vmatpush1.msra.mxu0 0.0
    %746 = vmatprep.subr.mxu0 0.0
    %747 = vmatpush1.msra.mxu0 0.0
    %748 = vmatprep.subr.mxu0 0.0
    %749 = vmatpush1.msra.mxu0 0.0
    %750 = vmatprep.subr.mxu0 0.0
    %751 = vmatpush1.msra.mxu0 0.0
    %752 = vmatprep.subr.mxu0 0.0
    %753 = vmatpush1.msra.mxu0 0.0
    %754 = vmatprep.subr.mxu0 0.0
    %755 = vmatpush1.msra.mxu0 0.0
    %756 = vmatprep.subr.mxu0 0.0
    %757 = vmatpush1.msra.mxu0 %v221
    %758 = vmatprep.subr.mxu0 0.0
    %759 = vmatpush2.msra.mxu0 0.0
    %760 = vmatprep.subr.mxu0 0.0
    %761 = vmatpush2.msra.mxu0 0.0
    %762 = vmatprep.subr.mxu0 0.0
    %763 = vmatpush2.msra.mxu0 0.0
    %764 = vmatprep.subr.mxu0 0.0
    %765 = vmatpush2.msra.mxu0 0.0
    %766 = vmatprep.subr.mxu0 0.0
    %767 = vmatpush2.msra.mxu0 0.0
    %768 = vmatprep.subr.mxu0 0.0
    %769 = vmatpush2.msra.mxu0 0.0
    %770 = vmatprep.subr.mxu0 0.0
    %771 = vmatpush2.msra.mxu0 0.0
    %772 = vmatprep.subr.mxu0 0.0
    %773 = vmatpush2.msra.mxu0 0.0
    %774 = vmatprep.subr.mxu0 0.0
    %775 = vmatpush2.msra.mxu0 0.0
    %776 = vmatprep.subr.mxu0 0.0
    %777 = vmatpush2.msra.mxu0 0.0
    %778 = vmatprep.subr.mxu0 0.0
    %779 = vmatpush2.msra.mxu0 0.0
    %780 = vmatprep.subr.mxu0 0.0
    %781 = vmatpush2.msra.mxu0 0.0
    %782 = vmatprep.subr.mxu0 0.0
    %783 = vmatpush2.msra.mxu0 0.0
    %784 = vmatprep.subr.mxu0 0.0
    %785 = vmatpush2.msra.mxu0 0.0
    %786 = vmatprep.subr.mxu0 0.0
    %787 = vmatpush2.msra.mxu0 0.0
    %788 = vmatprep.subr.mxu0 0.0
    %789 = vmatpush2.msra.mxu0 0.0
    %790 = vmatprep.mubr.f32.mxu0 0.0
    %791 = vmatmul.mubr.f32.gmra.mxu0 %v721
    %v792 = vpop.f32.mrf.mxu0
    %v793 = vadd.f32 %v712, %v792
    %v794 = vpop.f32.mrf.mxu0
    %795 = vmatprep.mubr.f32.mxu0 0.0
    %796 = vmatmul.mubr.f32.gmra.mxu0 %v724
    %v797 = vpop.f32.mrf.mxu0
    %v798 = vadd.f32 %v717, %v797
    %v799 = vpop.f32.mrf.mxu0
    %800 = vdwg.mxu0
    %801 = vrot.lane.b32.xlu0 %v219, 112
    %v802 = vpop.permute.xlu0 %801
    %803 = vrot.lane.b32.xlu0 %v220, 112
    %v804 = vpop.permute.xlu0 %803
    %805 = vrot.lane.b32.xlu0 %v211, 80
    %v806 = vpop.permute.xlu0 %805
    %807 = vrot.lane.b32.xlu0 %v216, 80
    %v808 = vpop.permute.xlu0 %807
    %v809 = vsel %vm231, %v802, 0
    %v811 = vsel %vm231, %v804, 0
    %v813 = vsel %vm231, %v806, 0
    %v815 = vsel %vm231, %v808, 0
    %817 = vmatprep.subr.mxu0 0.0
    %818 = vmatpush1.xpose.msra.mxu0 0.0
    %819 = vmatprep.subr.mxu0 0.0
    %820 = vmatpush1.xpose.msra.mxu0 0.0
    %821 = vmatprep.subr.mxu0 0.0
    %822 = vmatpush1.xpose.msra.mxu0 0.0
    %823 = vmatprep.subr.mxu0 0.0
    %824 = vmatpush1.xpose.msra.mxu0 0.0
    %825 = vmatprep.subr.mxu0 0.0
    %826 = vmatpush1.xpose.msra.mxu0 0.0
    %827 = vmatprep.subr.mxu0 0.0
    %828 = vmatpush1.xpose.msra.mxu0 0.0
    %829 = vmatprep.subr.mxu0 0.0
    %830 = vmatpush1.xpose.msra.mxu0 0.0
    %831 = vmatprep.subr.mxu0 0.0
    %832 = vmatpush1.xpose.msra.mxu0 0.0
    %833 = vmatprep.subr.mxu0 0.0
    %834 = vmatpush1.xpose.msra.mxu0 0.0
    %835 = vmatprep.subr.mxu0 0.0
    %836 = vmatpush1.xpose.msra.mxu0 0.0
    %837 = vmatprep.subr.mxu0 0.0
    %838 = vmatpush1.xpose.msra.mxu0 0.0
    %839 = vmatprep.subr.mxu0 0.0
    %840 = vmatpush1.xpose.msra.mxu0 0.0
    %841 = vmatprep.subr.mxu0 0.0
    %842 = vmatpush1.xpose.msra.mxu0 0.0
    %843 = vmatprep.subr.mxu0 0.0
    %844 = vmatpush1.xpose.msra.mxu0 0.0
    %845 = vmatprep.subr.mxu0 0.0
    %846 = vmatpush1.xpose.msra.mxu0 %v815
    %847 = vmatprep.subr.mxu0 0.0
    %848 = vmatpush1.xpose.msra.mxu0 %v813
    %849 = vmatprep.subr.mxu0 0.0
    %850 = vmatpush2.xpose.msra.mxu0 0.0
    %851 = vmatprep.subr.mxu0 0.0
    %852 = vmatpush2.xpose.msra.mxu0 0.0
    %853 = vmatprep.subr.mxu0 0.0
    %854 = vmatpush2.xpose.msra.mxu0 0.0
    %855 = vmatprep.subr.mxu0 0.0
    %856 = vmatpush2.xpose.msra.mxu0 0.0
    %857 = vmatprep.subr.mxu0 0.0
    %858 = vmatpush2.xpose.msra.mxu0 0.0
    %859 = vmatprep.subr.mxu0 0.0
    %860 = vmatpush2.xpose.msra.mxu0 0.0
    %861 = vmatprep.subr.mxu0 0.0
    %862 = vmatpush2.xpose.msra.mxu0 0.0
    %863 = vmatprep.subr.mxu0 0.0
    %864 = vmatpush2.xpose.msra.mxu0 0.0
    %865 = vmatprep.subr.mxu0 0.0
    %866 = vmatpush2.xpose.msra.mxu0 0.0
    %867 = vmatprep.subr.mxu0 0.0
    %868 = vmatpush2.xpose.msra.mxu0 0.0
    %869 = vmatprep.subr.mxu0 0.0
    %870 = vmatpush2.xpose.msra.mxu0 0.0
    %871 = vmatprep.subr.mxu0 0.0
    %872 = vmatpush2.xpose.msra.mxu0 0.0
    %873 = vmatprep.subr.mxu0 0.0
    %874 = vmatpush2.xpose.msra.mxu0 0.0
    %875 = vmatprep.subr.mxu0 0.0
    %876 = vmatpush2.xpose.msra.mxu0 0.0
    %877 = vmatprep.subr.mxu0 0.0
    %878 = vmatpush2.xpose.msra.mxu0 0.0
    %879 = vmatprep.subr.mxu0 0.0
    %880 = vmatpush2.xpose.msra.mxu0 0.0
    %881 = vmatprep.mubr.f32.mxu0 0.0
    %882 = vmatmul.mubr.f32.gmra.mxu0 %v809
    %v883 = vpop.f32.mrf.mxu0
    %v884 = vadd.f32 %v119, %v883
    %v885 = vpop.f32.mrf.mxu0
    %886 = vmatprep.mubr.f32.mxu0 0.0
    %887 = vmatmul.mubr.f32.gmra.mxu0 %v811
    %v888 = vpop.f32.mrf.mxu0
    %v889 = vadd.f32 %v120, %v888
    %v890 = vpop.f32.mrf.mxu0
    %891 = vdwg.mxu0
    %v892 = vsel %vm317, %v884, -inf
    %893 = vmax.xlane.f32.xlu0 %v892
    %v894 = vpop.xlane.xlu0 %893
    %v895 = vsel %vm317, %v889, -inf
    %896 = vmax.xlane.f32.xlu0 %v895
    %v897 = vpop.xlane.xlu0 %896
    %v898 = vsub.f32 %v884, %v894
    %v899 = vsub.f32 %v889, %v897
    %v900 = vmul.f32 %v898, 1.442695
    %v901 = vpow.pop %v900
    %v902 = vmul.f32 %v899, 1.442695
    %v903 = vpow.pop %v902
    %v904 = vsel %vm317, %v901, 0.0
    %905 = vadd.xlane.f32.xlu0 %v904
    %v906 = vpop.xlane.xlu0 %905
    %v907 = vsel %vm317, %v903, 0.0
    %908 = vadd.xlane.f32.xlu0 %v907
    %v909 = vpop.xlane.xlu0 %908
    %v910 = vrcp.pop %v906
    %v911 = vrcp.pop %v909
    %v912 = vmul.f32 %v906, %v910
    %v913 = vmul.f32 %v909, %v911
    %v914 = vsub.f32 2.0, %v912
    %v915 = vsub.f32 2.0, %v913
    %v916 = vmul.f32 %v910, %v914
    %v917 = vmul.f32 %v911, %v915
    %v918 = vmul.f32 %v901, %v916
    %v919 = vmul.f32 %v903, %v917
    %920 = vrot.lane.b32.xlu0 %v211, 48
    %v921 = vpop.permute.xlu0 %920
    %922 = vrot.lane.b32.xlu0 %v216, 48
    %v923 = vpop.permute.xlu0 %922
    %v927 = vsel %vm317, %v918, 0
    %v930 = vsel %vm317, %v919, 0
    %932 = vmatprep.subr.mxu0 0.0
    %933 = vmatpush1.msra.mxu0 0.0
    %934 = vmatprep.subr.mxu0 0.0
    %935 = vmatpush1.msra.mxu0 0.0
    %936 = vmatprep.subr.mxu0 0.0
    %937 = vmatpush1.msra.mxu0 0.0
    %938 = vmatprep.subr.mxu0 0.0
    %939 = vmatpush1.msra.mxu0 0.0
    %940 = vmatprep.subr.mxu0 0.0
    %941 = vmatpush1.msra.mxu0 0.0
    %942 = vmatprep.subr.mxu0 0.0
    %943 = vmatpush1.msra.mxu0 0.0
    %944 = vmatprep.subr.mxu0 0.0
    %945 = vmatpush1.msra.mxu0 0.0
    %946 = vmatprep.subr.mxu0 0.0
    %947 = vmatpush1.msra.mxu0 0.0
    %948 = vmatprep.subr.mxu0 0.0
    %949 = vmatpush1.msra.mxu0 0.0
    %950 = vmatprep.subr.mxu0 0.0
    %951 = vmatpush1.msra.mxu0 0.0
    %952 = vmatprep.subr.mxu0 0.0
    %953 = vmatpush1.msra.mxu0 0.0
    %954 = vmatprep.subr.mxu0 0.0
    %955 = vmatpush1.msra.mxu0 0.0
    %956 = vmatprep.subr.mxu0 0.0
    %957 = vmatpush1.msra.mxu0 0.0
    %958 = vmatprep.subr.mxu0 0.0
    %959 = vmatpush1.msra.mxu0 0.0
    %960 = vmatprep.subr.mxu0 0.0
    %961 = vmatpush1.msra.mxu0 %v923
    %962 = vmatprep.subr.mxu0 0.0
    %963 = vmatpush1.msra.mxu0 %v921
    %964 = vmatprep.subr.mxu0 0.0
    %965 = vmatpush2.msra.mxu0 0.0
    %966 = vmatprep.subr.mxu0 0.0
    %967 = vmatpush2.msra.mxu0 0.0
    %968 = vmatprep.subr.mxu0 0.0
    %969 = vmatpush2.msra.mxu0 0.0
    %970 = vmatprep.subr.mxu0 0.0
    %971 = vmatpush2.msra.mxu0 0.0
    %972 = vmatprep.subr.mxu0 0.0
    %973 = vmatpush2.msra.mxu0 0.0
    %974 = vmatprep.subr.mxu0 0.0
    %975 = vmatpush2.msra.mxu0 0.0
    %976 = vmatprep.subr.mxu0 0.0
    %977 = vmatpush2.msra.mxu0 0.0
    %978 = vmatprep.subr.mxu0 0.0
    %979 = vmatpush2.msra.mxu0 0.0
    %980 = vmatprep.subr.mxu0 0.0
    %981 = vmatpush2.msra.mxu0 0.0
    %982 = vmatprep.subr.mxu0 0.0
    %983 = vmatpush2.msra.mxu0 0.0
    %984 = vmatprep.subr.mxu0 0.0
    %985 = vmatpush2.msra.mxu0 0.0
    %986 = vmatprep.subr.mxu0 0.0
    %987 = vmatpush2.msra.mxu0 0.0
    %988 = vmatprep.subr.mxu0 0.0
    %989 = vmatpush2.msra.mxu0 0.0
    %990 = vmatprep.subr.mxu0 0.0
    %991 = vmatpush2.msra.mxu0 0.0
    %992 = vmatprep.subr.mxu0 0.0
    %993 = vmatpush2.msra.mxu0 0.0
    %994 = vmatprep.subr.mxu0 0.0
    %995 = vmatpush2.msra.mxu0 0.0
    %996 = vmatprep.mubr.f32.mxu0 0.0
    %997 = vmatmul.mubr.f32.gmra.mxu0 %v927
    %v998 = vpop.f32.mrf.mxu0
    %v999 = vadd.f32 0.0, %v998
    %v1000 = vpop.f32.mrf.mxu0
    %1001 = vmatprep.mubr.f32.mxu0 0.0
    %1002 = vmatmul.mubr.f32.gmra.mxu0 %v930
    %v1003 = vpop.f32.mrf.mxu0
    %v1004 = vadd.f32 0.0, %v1003
    %v1005 = vpop.f32.mrf.mxu0
    %1006 = vdwg.mxu0
    %v1008 = vsel %vm231, %v999, 0
    %v1011 = vsel %vm231, %v1004, 0
    %1013 = vmatprep.subr.mxu0 0.0
    %1014 = vmatpush1.msra.mxu0 0.0
    %1015 = vmatprep.subr.mxu0 0.0
    %1016 = vmatpush1.msra.mxu0 0.0
    %1017 = vmatprep.subr.mxu0 0.0
    %1018 = vmatpush1.msra.mxu0 0.0
    %1019 = vmatprep.subr.mxu0 0.0
    %1020 = vmatpush1.msra.mxu0 0.0
    %1021 = vmatprep.subr.mxu0 0.0
    %1022 = vmatpush1.msra.mxu0 0.0
    %1023 = vmatprep.subr.mxu0 0.0
    %1024 = vmatpush1.msra.mxu0 0.0
    %1025 = vmatprep.subr.mxu0 0.0
    %1026 = vmatpush1.msra.mxu0 0.0
    %1027 = vmatprep.subr.mxu0 0.0
    %1028 = vmatpush1.msra.mxu0 0.0
    %1029 = vmatprep.subr.mxu0 0.0
    %1030 = vmatpush1.msra.mxu0 0.0
    %1031 = vmatprep.subr.mxu0 0.0
    %1032 = vmatpush1.msra.mxu0 0.0
    %1033 = vmatprep.subr.mxu0 0.0
    %1034 = vmatpush1.msra.mxu0 0.0
    %1035 = vmatprep.subr.mxu0 0.0
    %1036 = vmatpush1.msra.mxu0 0.0
    %1037 = vmatprep.subr.mxu0 0.0
    %1038 = vmatpush1.msra.mxu0 0.0
    %1039 = vmatprep.subr.mxu0 0.0
    %1040 = vmatpush1.msra.mxu0 0.0
    %1041 = vmatprep.subr.mxu0 0.0
    %1042 = vmatpush1.msra.mxu0 0.0
    %1043 = vmatprep.subr.mxu0 0.0
    %1044 = vmatpush1.msra.mxu0 %v223
    %1045 = vmatprep.subr.mxu0 0.0
    %1046 = vmatpush2.msra.mxu0 0.0
    %1047 = vmatprep.subr.mxu0 0.0
    %1048 = vmatpush2.msra.mxu0 0.0
    %1049 = vmatprep.subr.mxu0 0.0
    %1050 = vmatpush2.msra.mxu0 0.0
    %1051 = vmatprep.subr.mxu0 0.0
    %1052 = vmatpush2.msra.mxu0 0.0
    %1053 = vmatprep.subr.mxu0 0.0
    %1054 = vmatpush2.msra.mxu0 0.0
    %1055 = vmatprep.subr.mxu0 0.0
    %1056 = vmatpush2.msra.mxu0 0.0
    %1057 = vmatprep.subr.mxu0 0.0
    %1058 = vmatpush2.msra.mxu0 0.0
    %1059 = vmatprep.subr.mxu0 0.0
    %1060 = vmatpush2.msra.mxu0 0.0
    %1061 = vmatprep.subr.mxu0 0.0
    %1062 = vmatpush2.msra.mxu0 0.0
    %1063 = vmatprep.subr.mxu0 0.0
    %1064 = vmatpush2.msra.mxu0 0.0
    %1065 = vmatprep.subr.mxu0 0.0
    %1066 = vmatpush2.msra.mxu0 0.0
    %1067 = vmatprep.subr.mxu0 0.0
    %1068 = vmatpush2.msra.mxu0 0.0
    %1069 = vmatprep.subr.mxu0 0.0
    %1070 = vmatpush2.msra.mxu0 0.0
    %1071 = vmatprep.subr.mxu0 0.0
    %1072 = vmatpush2.msra.mxu0 0.0
    %1073 = vmatprep.subr.mxu0 0.0
    %1074 = vmatpush2.msra.mxu0 0.0
    %1075 = vmatprep.subr.mxu0 0.0
    %1076 = vmatpush2.msra.mxu0 0.0
    %1077 = vmatprep.mubr.f32.mxu0 0.0
    %1078 = vmatmul.mubr.f32.gmra.mxu0 %v1008
    %v1079 = vpop.f32.mrf.mxu0
    %v1080 = vadd.f32 0.0, %v1079
    %v1081 = vpop.f32.mrf.mxu0
    %1082 = vmatprep.mubr.f32.mxu0 0.0
    %1083 = vmatmul.mubr.f32.gmra.mxu0 %v1011
    %v1084 = vpop.f32.mrf.mxu0
    %v1085 = vadd.f32 0.0, %v1084
    %v1086 = vpop.f32.mrf.mxu0
    %1087 = vdwg.mxu0
    %v1088 = vadd.f32 %v793, %v1080
    %v1089 = vadd.f32 %v798, %v1085
    %1090 = vrot.lane.b32.xlu0 %v219, 104
    %v1091 = vpop.permute.xlu0 %1090
    %1092 = vrot.lane.b32.xlu0 %v220, 104
    %v1093 = vpop.permute.xlu0 %1092
    %1094 = vrot.lane.b32.xlu0 %v211, 72
    %v1095 = vpop.permute.xlu0 %1094
    %1096 = vrot.lane.b32.xlu0 %v216, 72
    %v1097 = vpop.permute.xlu0 %1096
    %v1098 = vsel %vm231, %v1091, 0
    %v1100 = vsel %vm231, %v1093, 0
    %v1102 = vsel %vm231, %v1095, 0
    %v1104 = vsel %vm231, %v1097, 0
    %1106 = vmatprep.subr.mxu0 0.0
    %1107 = vmatpush1.xpose.msra.mxu0 0.0
    %1108 = vmatprep.subr.mxu0 0.0
    %1109 = vmatpush1.xpose.msra.mxu0 0.0
    %1110 = vmatprep.subr.mxu0 0.0
    %1111 = vmatpush1.xpose.msra.mxu0 0.0
    %1112 = vmatprep.subr.mxu0 0.0
    %1113 = vmatpush1.xpose.msra.mxu0 0.0
    %1114 = vmatprep.subr.mxu0 0.0
    %1115 = vmatpush1.xpose.msra.mxu0 0.0
    %1116 = vmatprep.subr.mxu0 0.0
    %1117 = vmatpush1.xpose.msra.mxu0 0.0
    %1118 = vmatprep.subr.mxu0 0.0
    %1119 = vmatpush1.xpose.msra.mxu0 0.0
    %1120 = vmatprep.subr.mxu0 0.0
    %1121 = vmatpush1.xpose.msra.mxu0 0.0
    %1122 = vmatprep.subr.mxu0 0.0
    %1123 = vmatpush1.xpose.msra.mxu0 0.0
    %1124 = vmatprep.subr.mxu0 0.0
    %1125 = vmatpush1.xpose.msra.mxu0 0.0
    %1126 = vmatprep.subr.mxu0 0.0
    %1127 = vmatpush1.xpose.msra.mxu0 0.0
    %1128 = vmatprep.subr.mxu0 0.0
    %1129 = vmatpush1.xpose.msra.mxu0 0.0
    %1130 = vmatprep.subr.mxu0 0.0
    %1131 = vmatpush1.xpose.msra.mxu0 0.0
    %1132 = vmatprep.subr.mxu0 0.0
    %1133 = vmatpush1.xpose.msra.mxu0 0.0
    %1134 = vmatprep.subr.mxu0 0.0
    %1135 = vmatpush1.xpose.msra.mxu0 %v1104
    %1136 = vmatprep.subr.mxu0 0.0
    %1137 = vmatpush1.xpose.msra.mxu0 %v1102
    %1138 = vmatprep.subr.mxu0 0.0
    %1139 = vmatpush2.xpose.msra.mxu0 0.0
    %1140 = vmatprep.subr.mxu0 0.0
    %1141 = vmatpush2.xpose.msra.mxu0 0.0
    %1142 = vmatprep.subr.mxu0 0.0
    %1143 = vmatpush2.xpose.msra.mxu0 0.0
    %1144 = vmatprep.subr.mxu0 0.0
    %1145 = vmatpush2.xpose.msra.mxu0 0.0
    %1146 = vmatprep.subr.mxu0 0.0
    %1147 = vmatpush2.xpose.msra.mxu0 0.0
    %1148 = vmatprep.subr.mxu0 0.0
    %1149 = vmatpush2.xpose.msra.mxu0 0.0
    %1150 = vmatprep.subr.mxu0 0.0
    %1151 = vmatpush2.xpose.msra.mxu0 0.0
    %1152 = vmatprep.subr.mxu0 0.0
    %1153 = vmatpush2.xpose.msra.mxu0 0.0
    %1154 = vmatprep.subr.mxu0 0.0
    %1155 = vmatpush2.xpose.msra.mxu0 0.0
    %1156 = vmatprep.subr.mxu0 0.0
    %1157 = vmatpush2.xpose.msra.mxu0 0.0
    %1158 = vmatprep.subr.mxu0 0.0
    %1159 = vmatpush2.xpose.msra.mxu0 0.0
    %1160 = vmatprep.subr.mxu0 0.0
    %1161 = vmatpush2.xpose.msra.mxu0 0.0
    %1162 = vmatprep.subr.mxu0 0.0
    %1163 = vmatpush2.xpose.msra.mxu0 0.0
    %1164 = vmatprep.subr.mxu0 0.0
    %1165 = vmatpush2.xpose.msra.mxu0 0.0
    %1166 = vmatprep.subr.mxu0 0.0
    %1167 = vmatpush2.xpose.msra.mxu0 0.0
    %1168 = vmatprep.subr.mxu0 0.0
    %1169 = vmatpush2.xpose.msra.mxu0 0.0
    %1170 = vmatprep.mubr.f32.mxu0 0.0
    %1171 = vmatmul.mubr.f32.gmra.mxu0 %v1098
    %v1172 = vpop.f32.mrf.mxu0
    %v1173 = vadd.f32 %v119, %v1172
    %v1174 = vpop.f32.mrf.mxu0
    %1175 = vmatprep.mubr.f32.mxu0 0.0
    %1176 = vmatmul.mubr.f32.gmra.mxu0 %v1100
    %v1177 = vpop.f32.mrf.mxu0
    %v1178 = vadd.f32 %v120, %v1177
    %v1179 = vpop.f32.mrf.mxu0
    %1180 = vdwg.mxu0
    %v1181 = vsel %vm317, %v1173, -inf
    %1182 = vmax.xlane.f32.xlu0 %v1181
    %v1183 = vpop.xlane.xlu0 %1182
    %v1184 = vsel %vm317, %v1178, -inf
    %1185 = vmax.xlane.f32.xlu0 %v1184
    %v1186 = vpop.xlane.xlu0 %1185
    %v1187 = vsub.f32 %v1173, %v1183
    %v1188 = vsub.f32 %v1178, %v1186
    %v1189 = vmul.f32 %v1187, 1.442695
    %v1190 = vpow.pop %v1189
    %v1191 = vmul.f32 %v1188, 1.442695
    %v1192 = vpow.pop %v1191
    %v1193 = vsel %vm317, %v1190, 0.0
    %1194 = vadd.xlane.f32.xlu0 %v1193
    %v1195 = vpop.xlane.xlu0 %1194
    %v1196 = vsel %vm317, %v1192, 0.0
    %1197 = vadd.xlane.f32.xlu0 %v1196
    %v1198 = vpop.xlane.xlu0 %1197
    %v1199 = vrcp.pop %v1195
    %v1200 = vrcp.pop %v1198
    %v1201 = vmul.f32 %v1195, %v1199
    %v1202 = vmul.f32 %v1198, %v1200
    %v1203 = vsub.f32 2.0, %v1201
    %v1204 = vsub.f32 2.0, %v1202
    %v1205 = vmul.f32 %v1199, %v1203
    %v1206 = vmul.f32 %v1200, %v1204
    %v1207 = vmul.f32 %v1190, %v1205
    %v1208 = vmul.f32 %v1192, %v1206
    %1209 = vrot.lane.b32.xlu0 %v211, 40
    %v1210 = vpop.permute.xlu0 %1209
    %1211 = vrot.lane.b32.xlu0 %v216, 40
    %v1212 = vpop.permute.xlu0 %1211
    %v1216 = vsel %vm317, %v1207, 0
    %v1219 = vsel %vm317, %v1208, 0
    %1221 = vmatprep.subr.mxu0 0.0
    %1222 = vmatpush1.msra.mxu0 0.0
    %1223 = vmatprep.subr.mxu0 0.0
    %1224 = vmatpush1.msra.mxu0 0.0
    %1225 = vmatprep.subr.mxu0 0.0
    %1226 = vmatpush1.msra.mxu0 0.0
    %1227 = vmatprep.subr.mxu0 0.0
    %1228 = vmatpush1.msra.mxu0 0.0
    %1229 = vmatprep.subr.mxu0 0.0
    %1230 = vmatpush1.msra.mxu0 0.0
    %1231 = vmatprep.subr.mxu0 0.0
    %1232 = vmatpush1.msra.mxu0 0.0
    %1233 = vmatprep.subr.mxu0 0.0
    %1234 = vmatpush1.msra.mxu0 0.0
    %1235 = vmatprep.subr.mxu0 0.0
    %1236 = vmatpush1.msra.mxu0 0.0
    %1237 = vmatprep.subr.mxu0 0.0
    %1238 = vmatpush1.msra.mxu0 0.0
    %1239 = vmatprep.subr.mxu0 0.0
    %1240 = vmatpush1.msra.mxu0 0.0
    %1241 = vmatprep.subr.mxu0 0.0
    %1242 = vmatpush1.msra.mxu0 0.0
    %1243 = vmatprep.subr.mxu0 0.0
    %1244 = vmatpush1.msra.mxu0 0.0
    %1245 = vmatprep.subr.mxu0 0.0
    %1246 = vmatpush1.msra.mxu0 0.0
    %1247 = vmatprep.subr.mxu0 0.0
    %1248 = vmatpush1.msra.mxu0 0.0
    %1249 = vmatprep.subr.mxu0 0.0
    %1250 = vmatpush1.msra.mxu0 %v1212
    %1251 = vmatprep.subr.mxu0 0.0
    %1252 = vmatpush1.msra.mxu0 %v1210
    %1253 = vmatprep.subr.mxu0 0.0
    %1254 = vmatpush2.msra.mxu0 0.0
    %1255 = vmatprep.subr.mxu0 0.0
    %1256 = vmatpush2.msra.mxu0 0.0
    %1257 = vmatprep.subr.mxu0 0.0
    %1258 = vmatpush2.msra.mxu0 0.0
    %1259 = vmatprep.subr.mxu0 0.0
    %1260 = vmatpush2.msra.mxu0 0.0
    %1261 = vmatprep.subr.mxu0 0.0
    %1262 = vmatpush2.msra.mxu0 0.0
    %1263 = vmatprep.subr.mxu0 0.0
    %1264 = vmatpush2.msra.mxu0 0.0
    %1265 = vmatprep.subr.mxu0 0.0
    %1266 = vmatpush2.msra.mxu0 0.0
    %1267 = vmatprep.subr.mxu0 0.0
    %1268 = vmatpush2.msra.mxu0 0.0
    %1269 = vmatprep.subr.mxu0 0.0
    %1270 = vmatpush2.msra.mxu0 0.0
    %1271 = vmatprep.subr.mxu0 0.0
    %1272 = vmatpush2.msra.mxu0 0.0
    %1273 = vmatprep.subr.mxu0 0.0
    %1274 = vmatpush2.msra.mxu0 0.0
    %1275 = vmatprep.subr.mxu0 0.0
    %1276 = vmatpush2.msra.mxu0 0.0
    %1277 = vmatprep.subr.mxu0 0.0
    %1278 = vmatpush2.msra.mxu0 0.0
    %1279 = vmatprep.subr.mxu0 0.0
    %1280 = vmatpush2.msra.mxu0 0.0
    %1281 = vmatprep.subr.mxu0 0.0
    %1282 = vmatpush2.msra.mxu0 0.0
    %1283 = vmatprep.subr.mxu0 0.0
    %1284 = vmatpush2.msra.mxu0 0.0
    %1285 = vmatprep.mubr.f32.mxu0 0.0
    %1286 = vmatmul.mubr.f32.gmra.mxu0 %v1216
    %v1287 = vpop.f32.mrf.mxu0
    %v1288 = vadd.f32 0.0, %v1287
    %v1289 = vpop.f32.mrf.mxu0
    %1290 = vmatprep.mubr.f32.mxu0 0.0
    %1291 = vmatmul.mubr.f32.gmra.mxu0 %v1219
    %v1292 = vpop.f32.mrf.mxu0
    %v1293 = vadd.f32 0.0, %v1292
    %v1294 = vpop.f32.mrf.mxu0
    %1295 = vdwg.mxu0
    %v1297 = vsel %vm231, %v1288, 0
    %v1300 = vsel %vm231, %v1293, 0
    %1302 = vmatprep.subr.mxu0 0.0
    %1303 = vmatpush1.msra.mxu0 0.0
    %1304 = vmatprep.subr.mxu0 0.0
    %1305 = vmatpush1.msra.mxu0 0.0
    %1306 = vmatprep.subr.mxu0 0.0
    %1307 = vmatpush1.msra.mxu0 0.0
    %1308 = vmatprep.subr.mxu0 0.0
    %1309 = vmatpush1.msra.mxu0 0.0
    %1310 = vmatprep.subr.mxu0 0.0
    %1311 = vmatpush1.msra.mxu0 0.0
    %1312 = vmatprep.subr.mxu0 0.0
    %1313 = vmatpush1.msra.mxu0 0.0
    %1314 = vmatprep.subr.mxu0 0.0
    %1315 = vmatpush1.msra.mxu0 0.0
    %1316 = vmatprep.subr.mxu0 0.0
    %1317 = vmatpush1.msra.mxu0 0.0
    %1318 = vmatprep.subr.mxu0 0.0
    %1319 = vmatpush1.msra.mxu0 0.0
    %1320 = vmatprep.subr.mxu0 0.0
    %1321 = vmatpush1.msra.mxu0 0.0
    %1322 = vmatprep.subr.mxu0 0.0
    %1323 = vmatpush1.msra.mxu0 0.0
    %1324 = vmatprep.subr.mxu0 0.0
    %1325 = vmatpush1.msra.mxu0 0.0
    %1326 = vmatprep.subr.mxu0 0.0
    %1327 = vmatpush1.msra.mxu0 0.0
    %1328 = vmatprep.subr.mxu0 0.0
    %1329 = vmatpush1.msra.mxu0 0.0
    %1330 = vmatprep.subr.mxu0 0.0
    %1331 = vmatpush1.msra.mxu0 0.0
    %1332 = vmatprep.subr.mxu0 0.0
    %1333 = vmatpush1.msra.mxu0 %v224
    %1334 = vmatprep.subr.mxu0 0.0
    %1335 = vmatpush2.msra.mxu0 0.0
    %1336 = vmatprep.subr.mxu0 0.0
    %1337 = vmatpush2.msra.mxu0 0.0
    %1338 = vmatprep.subr.mxu0 0.0
    %1339 = vmatpush2.msra.mxu0 0.0
    %1340 = vmatprep.subr.mxu0 0.0
    %1341 = vmatpush2.msra.mxu0 0.0
    %1342 = vmatprep.subr.mxu0 0.0
    %1343 = vmatpush2.msra.mxu0 0.0
    %1344 = vmatprep.subr.mxu0 0.0
    %1345 = vmatpush2.msra.mxu0 0.0
    %1346 = vmatprep.subr.mxu0 0.0
    %1347 = vmatpush2.msra.mxu0 0.0
    %1348 = vmatprep.subr.mxu0 0.0
    %1349 = vmatpush2.msra.mxu0 0.0
    %1350 = vmatprep.subr.mxu0 0.0
    %1351 = vmatpush2.msra.mxu0 0.0
    %1352 = vmatprep.subr.mxu0 0.0
    %1353 = vmatpush2.msra.mxu0 0.0
    %1354 = vmatprep.subr.mxu0 0.0
    %1355 = vmatpush2.msra.mxu0 0.0
    %1356 = vmatprep.subr.mxu0 0.0
    %1357 = vmatpush2.msra.mxu0 0.0
    %1358 = vmatprep.subr.mxu0 0.0
    %1359 = vmatpush2.msra.mxu0 0.0
    %1360 = vmatprep.subr.mxu0 0.0
    %1361 = vmatpush2.msra.mxu0 0.0
    %1362 = vmatprep.subr.mxu0 0.0
    %1363 = vmatpush2.msra.mxu0 0.0
    %1364 = vmatprep.subr.mxu0 0.0
    %1365 = vmatpush2.msra.mxu0 0.0
    %1366 = vmatprep.mubr.f32.mxu0 0.0
    %1367 = vmatmul.mubr.f32.gmra.mxu0 %v1297
    %v1368 = vpop.f32.mrf.mxu0
    %v1369 = vadd.f32 0.0, %v1368
    %v1370 = vpop.f32.mrf.mxu0
    %1371 = vmatprep.mubr.f32.mxu0 0.0
    %1372 = vmatmul.mubr.f32.gmra.mxu0 %v1300
    %v1373 = vpop.f32.mrf.mxu0
    %v1374 = vadd.f32 0.0, %v1373
    %v1375 = vpop.f32.mrf.mxu0
    %1376 = vdwg.mxu0
    %v1377 = vadd.f32 %v1088, %v1369
    %v1378 = vadd.f32 %v1089, %v1374
    %v1379 = vlaneseq
    %v1380 = vshrl.u32 %v1379, 7
    %v1381 = vsub.s32 0, %v1380
    %v1382 = vrot.slane %v123, %v1381
    %v1383 = vadd.f32 %v1377, %v1382
    %v1384 = vadd.f32 %v1378, %v1382
    %v1385 = vadd.f32 %v107, %v1383
    %v1386 = vadd.f32 %v108, %v1384
    %v1387 = vsel %vm137, %v1385, 0.0
    %1388 = vadd.xlane.f32.xlu0 %v1387
    %v1389 = vpop.xlane.xlu0 %1388
    %v1390 = vsel %vm137, %v1386, 0.0
    %1391 = vadd.xlane.f32.xlu0 %v1390
    %v1392 = vpop.xlane.xlu0 %1391
    %v1393 = vmul.f32 %v1389, 0.03125
    %v1394 = vmul.f32 %v1392, 0.03125
    %v1395 = vsub.f32 %v1385, %v1393
    %v1396 = vsub.f32 %v1386, %v1394
    %v1397 = vmul.f32 %v1395, %v1395
    %v1398 = vmul.f32 %v1396, %v1396
    %v1399 = vsel %vm137, %v1397, 0.0
    %1400 = vadd.xlane.f32.xlu0 %v1399
    %v1401 = vpop.xlane.xlu0 %1400
    %v1402 = vsel %vm137, %v1398, 0.0
    %1403 = vadd.xlane.f32.xlu0 %v1402
    %v1404 = vpop.xlane.xlu0 %1403
    %v1405 = vmul.f32 %v1401, 0.03125
    %v1406 = vmul.f32 %v1404, 0.03125
    %v1407 = vadd.f32 %v1405, 1e-05
    %v1408 = vadd.f32 %v1406, 1e-05
    %v1409 = vrsqrt.pop %v1407
    %v1410 = vrsqrt.pop %v1408
    %v1411 = vmul.f32 %v1395, %v1409
    %v1412 = vmul.f32 %v1396, %v1410
    %v1413 = vlaneseq
    %v1414 = vshrl.u32 %v1413, 7
    %v1415 = vsub.s32 3, %v1414
    %v1416 = vrot.slane %v123, %v1415
    %v1417 = vmul.f32 %v1411, %v1416
    %v1418 = vmul.f32 %v1412, %v1416
    %v1419 = vlaneseq
    %v1420 = vshrl.u32 %v1419, 7
    %v1421 = vsub.s32 4, %v1420
    %v1422 = vrot.slane %v123, %v1421
    %v1423 = vadd.f32 %v1417, %v1422
    %v1424 = vadd.f32 %v1418, %v1422
    %s1425 = scalar_lea.vmem %s4, 32
    %v1426 = vld [vmem:[%s1425] sm:$0xff]
    %v1427 = vld [vmem:[%s1425 + $0x8] sm:$0xff]
    %v1428 = vld [vmem:[%s1425 + $0x10] sm:$0xff]
    %v1429 = vld [vmem:[%s1425 + $0x18] sm:$0xff]
    %s1430 = scalar_lea.vmem [#allocation8], 1
    %v1431 = vld [vmem:[%s1430] sm:$0x1]
    %v1433 = vlaneseq
    %v1434 = vshrl.u32 %v1433, 7
    %v1435 = vsub.s32 0, %v1434
    %v1436 = vrot.slane %v1431, %v1435
    %v1439 = vsel %vm137, %v1423, 0
    %v1442 = vsel %vm137, %v1424, 0
    %1444 = vmatprep.subr.mxu0 0.0
    %1445 = vmatpush1.msra.mxu0 0.0
    %1446 = vmatprep.subr.mxu0 0.0
    %1447 = vmatpush1.msra.mxu0 0.0
    %1448 = vmatprep.subr.mxu0 0.0
    %1449 = vmatpush1.msra.mxu0 0.0
    %1450 = vmatprep.subr.mxu0 0.0
    %1451 = vmatpush1.msra.mxu0 0.0
    %1452 = vmatprep.subr.mxu0 0.0
    %1453 = vmatpush1.msra.mxu0 0.0
    %1454 = vmatprep.subr.mxu0 0.0
    %1455 = vmatpush1.msra.mxu0 0.0
    %1456 = vmatprep.subr.mxu0 0.0
    %1457 = vmatpush1.msra.mxu0 0.0
    %1458 = vmatprep.subr.mxu0 0.0
    %1459 = vmatpush1.msra.mxu0 0.0
    %1460 = vmatprep.subr.mxu0 0.0
    %1461 = vmatpush1.msra.mxu0 0.0
    %1462 = vmatprep.subr.mxu0 0.0
    %1463 = vmatpush1.msra.mxu0 0.0
    %1464 = vmatprep.subr.mxu0 0.0
    %1465 = vmatpush1.msra.mxu0 0.0
    %1466 = vmatprep.subr.mxu0 0.0
    %1467 = vmatpush1.msra.mxu0 0.0
    %1468 = vmatprep.subr.mxu0 0.0
    %1469 = vmatpush1.msra.mxu0 %v1429
    %1470 = vmatprep.subr.mxu0 0.0
    %1471 = vmatpush1.msra.mxu0 %v1428
    %1472 = vmatprep.subr.mxu0 0.0
    %1473 = vmatpush1.msra.mxu0 %v1427
    %1474 = vmatprep.subr.mxu0 0.0
    %1475 = vmatpush1.msra.mxu0 %v1426
    %1476 = vmatprep.subr.mxu0 0.0
    %1477 = vmatpush2.msra.mxu0 0.0
    %1478 = vmatprep.subr.mxu0 0.0
    %1479 = vmatpush2.msra.mxu0 0.0
    %1480 = vmatprep.subr.mxu0 0.0
    %1481 = vmatpush2.msra.mxu0 0.0
    %1482 = vmatprep.subr.mxu0 0.0
    %1483 = vmatpush2.msra.mxu0 0.0
    %1484 = vmatprep.subr.mxu0 0.0
    %1485 = vmatpush2.msra.mxu0 0.0
    %1486 = vmatprep.subr.mxu0 0.0
    %1487 = vmatpush2.msra.mxu0 0.0
    %1488 = vmatprep.subr.mxu0 0.0
    %1489 = vmatpush2.msra.mxu0 0.0
    %1490 = vmatprep.subr.mxu0 0.0
    %1491 = vmatpush2.msra.mxu0 0.0
    %1492 = vmatprep.subr.mxu0 0.0
    %1493 = vmatpush2.msra.mxu0 0.0
    %1494 = vmatprep.subr.mxu0 0.0
    %1495 = vmatpush2.msra.mxu0 0.0
    %1496 = vmatprep.subr.mxu0 0.0
    %1497 = vmatpush2.msra.mxu0 0.0
    %1498 = vmatprep.subr.mxu0 0.0
    %1499 = vmatpush2.msra.mxu0 0.0
    %1500 = vmatprep.subr.mxu0 0.0
    %1501 = vmatpush2.msra.mxu0 0.0
    %1502 = vmatprep.subr.mxu0 0.0
    %1503 = vmatpush2.msra.mxu0 0.0
    %1504 = vmatprep.subr.mxu0 0.0
    %1505 = vmatpush2.msra.mxu0 0.0
    %1506 = vmatprep.subr.mxu0 0.0
    %1507 = vmatpush2.msra.mxu0 0.0
    %1508 = vmatprep.mubr.f32.mxu0 0.0
    %1509 = vmatmul.mubr.f32.gmra.mxu0 %v1439
    %v1510 = vpop.f32.mrf.mxu0
    %v1511 = vadd.f32 %v1436, %v1510
    %v1512 = vpop.f32.mrf.mxu0
    %1513 = vmatprep.mubr.f32.mxu0 0.0
    %1514 = vmatmul.mubr.f32.gmra.mxu0 %v1442
    %v1515 = vpop.f32.mrf.mxu0
    %v1516 = vadd.f32 %v1436, %v1515
    %v1517 = vpop.f32.mrf.mxu0
    %1518 = vdwg.mxu0
    %v1519 = vmul.f32 %v1511, 0.35355338
    %v1520 = vmul.f32 %v1516, 0.35355338
    %v1521 = vcombine.low %v109, %v117
    %v1522 = vcombine.low %v110, %v111
    %v1523 = vcombine.low %v118, %v112
    %1528 = vrot.lane.b32.xlu0 %v1426, 96
    %v1529 = vpop.permute.xlu0 %1528
    %1530 = vrot.lane.b32.xlu0 %v1427, 96
    %v1531 = vpop.permute.xlu0 %1530
    %1532 = vrot.lane.b32.xlu0 %v1428, 96
    %v1533 = vpop.permute.xlu0 %1532
    %1534 = vrot.lane.b32.xlu0 %v1429, 96
    %v1535 = vpop.permute.xlu0 %1534
    %1540 = vrot.lane.b32.xlu0 %v1436, 96
    %v1541 = vpop.permute.xlu0 %1540
    %v1543 = vsel %vm137, %v1521, 0
    %v1545 = vsel %vm137, %v1522, 0
    %v1547 = vsel %vm137, %v1523, 0
    %1549 = vmatprep.subr.mxu0 0.0
    %1550 = vmatpush1.msra.mxu0 0.0
    %1551 = vmatprep.subr.mxu0 0.0
    %1552 = vmatpush1.msra.mxu0 0.0
    %1553 = vmatprep.subr.mxu0 0.0
    %1554 = vmatpush1.msra.mxu0 0.0
    %1555 = vmatprep.subr.mxu0 0.0
    %1556 = vmatpush1.msra.mxu0 0.0
    %1557 = vmatprep.subr.mxu0 0.0
    %1558 = vmatpush1.msra.mxu0 0.0
    %1559 = vmatprep.subr.mxu0 0.0
    %1560 = vmatpush1.msra.mxu0 0.0
    %1561 = vmatprep.subr.mxu0 0.0
    %1562 = vmatpush1.msra.mxu0 0.0
    %1563 = vmatprep.subr.mxu0 0.0
    %1564 = vmatpush1.msra.mxu0 0.0
    %1565 = vmatprep.subr.mxu0 0.0
    %1566 = vmatpush1.msra.mxu0 0.0
    %1567 = vmatprep.subr.mxu0 0.0
    %1568 = vmatpush1.msra.mxu0 0.0
    %1569 = vmatprep.subr.mxu0 0.0
    %1570 = vmatpush1.msra.mxu0 0.0
    %1571 = vmatprep.subr.mxu0 0.0
    %1572 = vmatpush1.msra.mxu0 0.0
    %1573 = vmatprep.subr.mxu0 0.0
    %1574 = vmatpush1.msra.mxu0 %v1535
    %1575 = vmatprep.subr.mxu0 0.0
    %1576 = vmatpush1.msra.mxu0 %v1533
    %1577 = vmatprep.subr.mxu0 0.0
    %1578 = vmatpush1.msra.mxu0 %v1531
    %1579 = vmatprep.subr.mxu0 0.0
    %1580 = vmatpush1.msra.mxu0 %v1529
    %1581 = vmatprep.subr.mxu0 0.0
    %1582 = vmatpush2.msra.mxu0 0.0
    %1583 = vmatprep.subr.mxu0 0.0
    %1584 = vmatpush2.msra.mxu0 0.0
    %1585 = vmatprep.subr.mxu0 0.0
    %1586 = vmatpush2.msra.mxu0 0.0
    %1587 = vmatprep.subr.mxu0 0.0
    %1588 = vmatpush2.msra.mxu0 0.0
    %1589 = vmatprep.subr.mxu0 0.0
    %1590 = vmatpush2.msra.mxu0 0.0
    %1591 = vmatprep.subr.mxu0 0.0
    %1592 = vmatpush2.msra.mxu0 0.0
    %1593 = vmatprep.subr.mxu0 0.0
    %1594 = vmatpush2.msra.mxu0 0.0
    %1595 = vmatprep.subr.mxu0 0.0
    %1596 = vmatpush2.msra.mxu0 0.0
    %1597 = vmatprep.subr.mxu0 0.0
    %1598 = vmatpush2.msra.mxu0 0.0
    %1599 = vmatprep.subr.mxu0 0.0
    %1600 = vmatpush2.msra.mxu0 0.0
    %1601 = vmatprep.subr.mxu0 0.0
    %1602 = vmatpush2.msra.mxu0 0.0
    %1603 = vmatprep.subr.mxu0 0.0
    %1604 = vmatpush2.msra.mxu0 0.0
    %1605 = vmatprep.subr.mxu0 0.0
    %1606 = vmatpush2.msra.mxu0 0.0
    %1607 = vmatprep.subr.mxu0 0.0
    %1608 = vmatpush2.msra.mxu0 0.0
    %1609 = vmatprep.subr.mxu0 0.0
    %1610 = vmatpush2.msra.mxu0 0.0
    %1611 = vmatprep.subr.mxu0 0.0
    %1612 = vmatpush2.msra.mxu0 0.0
    %1613 = vmatprep.mubr.f32.mxu0 0.0
    %1614 = vmatmul.mubr.f32.gmra.mxu0 %v1543
    %v1615 = vpop.f32.mrf.mxu0
    %v1616 = vadd.f32 %v1541, %v1615
    %v1617 = vpop.f32.mrf.mxu0
    %1618 = vmatprep.mubr.f32.mxu0 0.0
    %1619 = vmatmul.mubr.f32.gmra.mxu0 %v1545
    %v1620 = vpop.f32.mrf.mxu0
    %v1621 = vadd.f32 %v1541, %v1620
    %v1622 = vpop.f32.mrf.mxu0
    %1623 = vmatprep.mubr.f32.mxu0 0.0
    %1624 = vmatmul.mubr.f32.gmra.mxu0 %v1547
    %v1625 = vpop.f32.mrf.mxu0
    %v1626 = vadd.f32 %v1541, %v1625
    %v1627 = vpop.f32.mrf.mxu0
    %1628 = vdwg.mxu0
    %s1629 = scalar_lea.vmem %s6, 32
    %v1630 = vld [vmem:[%s1629] sm:$0xff]
    %v1631 = vld [vmem:[%s1629 + $0x8] sm:$0xff]
    %v1632 = vld [vmem:[%s1629 + $0x10] sm:$0xff]
    %v1633 = vld [vmem:[%s1629 + $0x18] sm:$0xff]
    %v1635 = vsel %vm231, %v1519, 0
    %v1638 = vsel %vm231, %v1520, 0
    %v1641 = vsel %vm231, %v1616, 0
    %v1644 = vsel %vm231, %v1621, 0
    %v1647 = vsel %vm231, %v1626, 0
    %1649 = vmatprep.subr.mxu0 0.0
    %1650 = vmatpush1.xpose.msra.mxu0 0.0
    %1651 = vmatprep.subr.mxu0 0.0
    %1652 = vmatpush1.xpose.msra.mxu0 0.0
    %1653 = vmatprep.subr.mxu0 0.0
    %1654 = vmatpush1.xpose.msra.mxu0 0.0
    %1655 = vmatprep.subr.mxu0 0.0
    %1656 = vmatpush1.xpose.msra.mxu0 0.0
    %1657 = vmatprep.subr.mxu0 0.0
    %1658 = vmatpush1.xpose.msra.mxu0 0.0
    %1659 = vmatprep.subr.mxu0 0.0
    %1660 = vmatpush1.xpose.msra.mxu0 0.0
    %1661 = vmatprep.subr.mxu0 0.0
    %1662 = vmatpush1.xpose.msra.mxu0 0.0
    %1663 = vmatprep.subr.mxu0 0.0
    %1664 = vmatpush1.xpose.msra.mxu0 0.0
    %1665 = vmatprep.subr.mxu0 0.0
    %1666 = vmatpush1.xpose.msra.mxu0 0.0
    %1667 = vmatprep.subr.mxu0 0.0
    %1668 = vmatpush1.xpose.msra.mxu0 0.0
    %1669 = vmatprep.subr.mxu0 0.0
    %1670 = vmatpush1.xpose.msra.mxu0 0.0
    %1671 = vmatprep.subr.mxu0 0.0
    %1672 = vmatpush1.xpose.msra.mxu0 0.0
    %1673 = vmatprep.subr.mxu0 0.0
    %1674 = vmatpush1.xpose.msra.mxu0 0.0
    %1675 = vmatprep.subr.mxu0 0.0
    %1676 = vmatpush1.xpose.msra.mxu0 %v1647
    %1677 = vmatprep.subr.mxu0 0.0
    %1678 = vmatpush1.xpose.msra.mxu0 %v1644
    %1679 = vmatprep.subr.mxu0 0.0
    %1680 = vmatpush1.xpose.msra.mxu0 %v1641
    %1681 = vmatprep.subr.mxu0 0.0
    %1682 = vmatpush2.xpose.msra.mxu0 0.0
    %1683 = vmatprep.subr.mxu0 0.0
    %1684 = vmatpush2.xpose.msra.mxu0 0.0
    %1685 = vmatprep.subr.mxu0 0.0
    %1686 = vmatpush2.xpose.msra.mxu0 0.0
    %1687 = vmatprep.subr.mxu0 0.0
    %1688 = vmatpush2.xpose.msra.mxu0 0.0
    %1689 = vmatprep.subr.mxu0 0.0
    %1690 = vmatpush2.xpose.msra.mxu0 0.0
    %1691 = vmatprep.subr.mxu0 0.0
    %1692 = vmatpush2.xpose.msra.mxu0 0.0
    %1693 = vmatprep.subr.mxu0 0.0
    %1694 = vmatpush2.xpose.msra.mxu0 0.0
    %1695 = vmatprep.subr.mxu0 0.0
    %1696 = vmatpush2.xpose.msra.mxu0 0.0
    %1697 = vmatprep.subr.mxu0 0.0
    %1698 = vmatpush2.xpose.msra.mxu0 0.0
    %1699 = vmatprep.subr.mxu0 0.0
    %1700 = vmatpush2.xpose.msra.mxu0 0.0
    %1701 = vmatprep.subr.mxu0 0.0
    %1702 = vmatpush2.xpose.msra.mxu0 0.0
    %1703 = vmatprep.subr.mxu0 0.0
    %1704 = vmatpush2.xpose.msra.mxu0 0.0
    %1705 = vmatprep.subr.mxu0 0.0
    %1706 = vmatpush2.xpose.msra.mxu0 0.0
    %1707 = vmatprep.subr.mxu0 0.0
    %1708 = vmatpush2.xpose.msra.mxu0 0.0
    %1709 = vmatprep.subr.mxu0 0.0
    %1710 = vmatpush2.xpose.msra.mxu0 0.0
    %1711 = vmatprep.subr.mxu0 0.0
    %1712 = vmatpush2.xpose.msra.mxu0 0.0
    %1713 = vmatprep.mubr.f32.mxu0 0.0
    %1714 = vmatmul.mubr.f32.gmra.mxu0 %v1635
    %v1715 = vpop.f32.mrf.mxu0
    %v1716 = vadd.f32 %v121, %v1715
    %v1717 = vpop.f32.mrf.mxu0
    %1718 = vmatprep.mubr.f32.mxu0 0.0
    %1719 = vmatmul.mubr.f32.gmra.mxu0 %v1638
    %v1720 = vpop.f32.mrf.mxu0
    %v1721 = vadd.f32 %v122, %v1720
    %v1722 = vpop.f32.mrf.mxu0
    %1723 = vdwg.mxu0
    %vm1724 = vcmask 195584
    %v1725 = vsel %vm1724, %v1716, -inf
    %1726 = vmax.xlane.f32.xlu0 %v1725
    %v1727 = vpop.xlane.xlu0 %1726
    %v1728 = vsel %vm1724, %v1721, -inf
    %1729 = vmax.xlane.f32.xlu0 %v1728
    %v1730 = vpop.xlane.xlu0 %1729
    %v1731 = vsub.f32 %v1716, %v1727
    %v1732 = vsub.f32 %v1721, %v1730
    %v1733 = vmul.f32 %v1731, 1.442695
    %v1734 = vpow.pop %v1733
    %v1735 = vmul.f32 %v1732, 1.442695
    %v1736 = vpow.pop %v1735
    %v1737 = vsel %vm1724, %v1734, 0.0
    %1738 = vadd.xlane.f32.xlu0 %v1737
    %v1739 = vpop.xlane.xlu0 %1738
    %v1740 = vsel %vm1724, %v1736, 0.0
    %1741 = vadd.xlane.f32.xlu0 %v1740
    %v1742 = vpop.xlane.xlu0 %1741
    %v1743 = vrcp.pop %v1739
    %v1744 = vrcp.pop %v1742
    %v1745 = vmul.f32 %v1739, %v1743
    %v1746 = vmul.f32 %v1742, %v1744
    %v1747 = vsub.f32 2.0, %v1745
    %v1748 = vsub.f32 2.0, %v1746
    %v1749 = vmul.f32 %v1743, %v1747
    %v1750 = vmul.f32 %v1744, %v1748
    %v1751 = vmul.f32 %v1734, %v1749
    %v1752 = vmul.f32 %v1736, %v1750
    %1753 = vrot.lane.b32.xlu0 %v1616, 96
    %v1754 = vpop.permute.xlu0 %1753
    %1755 = vrot.lane.b32.xlu0 %v1621, 96
    %v1756 = vpop.permute.xlu0 %1755
    %1757 = vrot.lane.b32.xlu0 %v1626, 96
    %v1758 = vpop.permute.xlu0 %1757
    %v1763 = vsel %vm1724, %v1751, 0
    %v1766 = vsel %vm1724, %v1752, 0
    %1768 = vmatprep.subr.mxu0 0.0
    %1769 = vmatpush1.msra.mxu0 0.0
    %1770 = vmatprep.subr.mxu0 0.0
    %1771 = vmatpush1.msra.mxu0 0.0
    %1772 = vmatprep.subr.mxu0 0.0
    %1773 = vmatpush1.msra.mxu0 0.0
    %1774 = vmatprep.subr.mxu0 0.0
    %1775 = vmatpush1.msra.mxu0 0.0
    %1776 = vmatprep.subr.mxu0 0.0
    %1777 = vmatpush1.msra.mxu0 0.0
    %1778 = vmatprep.subr.mxu0 0.0
    %1779 = vmatpush1.msra.mxu0 0.0
    %1780 = vmatprep.subr.mxu0 0.0
    %1781 = vmatpush1.msra.mxu0 0.0
    %1782 = vmatprep.subr.mxu0 0.0
    %1783 = vmatpush1.msra.mxu0 0.0
    %1784 = vmatprep.subr.mxu0 0.0
    %1785 = vmatpush1.msra.mxu0 0.0
    %1786 = vmatprep.subr.mxu0 0.0
    %1787 = vmatpush1.msra.mxu0 0.0
    %1788 = vmatprep.subr.mxu0 0.0
    %1789 = vmatpush1.msra.mxu0 0.0
    %1790 = vmatprep.subr.mxu0 0.0
    %1791 = vmatpush1.msra.mxu0 0.0
    %1792 = vmatprep.subr.mxu0 0.0
    %1793 = vmatpush1.msra.mxu0 0.0
    %1794 = vmatprep.subr.mxu0 0.0
    %1795 = vmatpush1.msra.mxu0 %v1758
    %1796 = vmatprep.subr.mxu0 0.0
    %1797 = vmatpush1.msra.mxu0 %v1756
    %1798 = vmatprep.subr.mxu0 0.0
    %1799 = vmatpush1.msra.mxu0 %v1754
    %1800 = vmatprep.subr.mxu0 0.0
    %1801 = vmatpush2.msra.mxu0 0.0
    %1802 = vmatprep.subr.mxu0 0.0
    %1803 = vmatpush2.msra.mxu0 0.0
    %1804 = vmatprep.subr.mxu0 0.0
    %1805 = vmatpush2.msra.mxu0 0.0
    %1806 = vmatprep.subr.mxu0 0.0
    %1807 = vmatpush2.msra.mxu0 0.0
    %1808 = vmatprep.subr.mxu0 0.0
    %1809 = vmatpush2.msra.mxu0 0.0
    %1810 = vmatprep.subr.mxu0 0.0
    %1811 = vmatpush2.msra.mxu0 0.0
    %1812 = vmatprep.subr.mxu0 0.0
    %1813 = vmatpush2.msra.mxu0 0.0
    %1814 = vmatprep.subr.mxu0 0.0
    %1815 = vmatpush2.msra.mxu0 0.0
    %1816 = vmatprep.subr.mxu0 0.0
    %1817 = vmatpush2.msra.mxu0 0.0
    %1818 = vmatprep.subr.mxu0 0.0
    %1819 = vmatpush2.msra.mxu0 0.0
    %1820 = vmatprep.subr.mxu0 0.0
    %1821 = vmatpush2.msra.mxu0 0.0
    %1822 = vmatprep.subr.mxu0 0.0
    %1823 = vmatpush2.msra.mxu0 0.0
    %1824 = vmatprep.subr.mxu0 0.0
    %1825 = vmatpush2.msra.mxu0 0.0
    %1826 = vmatprep.subr.mxu0 0.0
    %1827 = vmatpush2.msra.mxu0 0.0
    %1828 = vmatprep.subr.mxu0 0.0
    %1829 = vmatpush2.msra.mxu0 0.0
    %1830 = vmatprep.subr.mxu0 0.0
    %1831 = vmatpush2.msra.mxu0 0.0
    %1832 = vmatprep.mubr.f32.mxu0 0.0
    %1833 = vmatmul.mubr.f32.gmra.mxu0 %v1763
    %v1834 = vpop.f32.mrf.mxu0
    %v1835 = vadd.f32 0.0, %v1834
    %v1836 = vpop.f32.mrf.mxu0
    %1837 = vmatprep.mubr.f32.mxu0 0.0
    %1838 = vmatmul.mubr.f32.gmra.mxu0 %v1766
    %v1839 = vpop.f32.mrf.mxu0
    %v1840 = vadd.f32 0.0, %v1839
    %v1841 = vpop.f32.mrf.mxu0
    %1842 = vdwg.mxu0
    %1843 = vrot.lane.b32.xlu0 %v1519, 120
    %v1844 = vpop.permute.xlu0 %1843
    %1845 = vrot.lane.b32.xlu0 %v1520, 120
    %v1846 = vpop.permute.xlu0 %1845
    %1847 = vrot.lane.b32.xlu0 %v1616, 120
    %v1848 = vpop.permute.xlu0 %1847
    %1849 = vrot.lane.b32.xlu0 %v1621, 120
    %v1850 = vpop.permute.xlu0 %1849
    %1851 = vrot.lane.b32.xlu0 %v1626, 120
    %v1852 = vpop.permute.xlu0 %1851
    %v1853 = vsel %vm231, %v1844, 0
    %v1855 = vsel %vm231, %v1846, 0
    %v1857 = vsel %vm231, %v1848, 0
    %v1859 = vsel %vm231, %v1850, 0
    %v1861 = vsel %vm231, %v1852, 0
    %1863 = vmatprep.subr.mxu0 0.0
    %1864 = vmatpush1.xpose.msra.mxu0 0.0
    %1865 = vmatprep.subr.mxu0 0.0
    %1866 = vmatpush1.xpose.msra.mxu0 0.0
    %1867 = vmatprep.subr.mxu0 0.0
    %1868 = vmatpush1.xpose.msra.mxu0 0.0
    %1869 = vmatprep.subr.mxu0 0.0
    %1870 = vmatpush1.xpose.msra.mxu0 0.0
    %1871 = vmatprep.subr.mxu0 0.0
    %1872 = vmatpush1.xpose.msra.mxu0 0.0
    %1873 = vmatprep.subr.mxu0 0.0
    %1874 = vmatpush1.xpose.msra.mxu0 0.0
    %1875 = vmatprep.subr.mxu0 0.0
    %1876 = vmatpush1.xpose.msra.mxu0 0.0
    %1877 = vmatprep.subr.mxu0 0.0
    %1878 = vmatpush1.xpose.msra.mxu0 0.0
    %1879 = vmatprep.subr.mxu0 0.0
    %1880 = vmatpush1.xpose.msra.mxu0 0.0
    %1881 = vmatprep.subr.mxu0 0.0
    %1882 = vmatpush1.xpose.msra.mxu0 0.0
    %1883 = vmatprep.subr.mxu0 0.0
    %1884 = vmatpush1.xpose.msra.mxu0 0.0
    %1885 = vmatprep.subr.mxu0 0.0
    %1886 = vmatpush1.xpose.msra.mxu0 0.0
    %1887 = vmatprep.subr.mxu0 0.0
    %1888 = vmatpush1.xpose.msra.mxu0 0.0
    %1889 = vmatprep.subr.mxu0 0.0
    %1890 = vmatpush1.xpose.msra.mxu0 %v1861
    %1891 = vmatprep.subr.mxu0 0.0
    %1892 = vmatpush1.xpose.msra.mxu0 %v1859
    %1893 = vmatprep.subr.mxu0 0.0
    %1894 = vmatpush1.xpose.msra.mxu0 %v1857
    %1895 = vmatprep.subr.mxu0 0.0
    %1896 = vmatpush2.xpose.msra.mxu0 0.0
    %1897 = vmatprep.subr.mxu0 0.0
    %1898 = vmatpush2.xpose.msra.mxu0 0.0
    %1899 = vmatprep.subr.mxu0 0.0
    %1900 = vmatpush2.xpose.msra.mxu0 0.0
    %1901 = vmatprep.subr.mxu0 0.0
    %1902 = vmatpush2.xpose.msra.mxu0 0.0
    %1903 = vmatprep.subr.mxu0 0.0
    %1904 = vmatpush2.xpose.msra.mxu0 0.0
    %1905 = vmatprep.subr.mxu0 0.0
    %1906 = vmatpush2.xpose.msra.mxu0 0.0
    %1907 = vmatprep.subr.mxu0 0.0
    %1908 = vmatpush2.xpose.msra.mxu0 0.0
    %1909 = vmatprep.subr.mxu0 0.0
    %1910 = vmatpush2.xpose.msra.mxu0 0.0
    %1911 = vmatprep.subr.mxu0 0.0
    %1912 = vmatpush2.xpose.msra.mxu0 0.0
    %1913 = vmatprep.subr.mxu0 0.0
    %1914 = vmatpush2.xpose.msra.mxu0 0.0
    %1915 = vmatprep.subr.mxu0 0.0
    %1916 = vmatpush2.xpose.msra.mxu0 0.0
    %1917 = vmatprep.subr.mxu0 0.0
    %1918 = vmatpush2.xpose.msra.mxu0 0.0
    %1919 = vmatprep.subr.mxu0 0.0
    %1920 = vmatpush2.xpose.msra.mxu0 0.0
    %1921 = vmatprep.subr.mxu0 0.0
    %1922 = vmatpush2.xpose.msra.mxu0 0.0
    %1923 = vmatprep.subr.mxu0 0.0
    %1924 = vmatpush2.xpose.msra.mxu0 0.0
    %1925 = vmatprep.subr.mxu0 0.0
    %1926 = vmatpush2.xpose.msra.mxu0 0.0
    %1927 = vmatprep.mubr.f32.mxu0 0.0
    %1928 = vmatmul.mubr.f32.gmra.mxu0 %v1853
    %v1929 = vpop.f32.mrf.mxu0
    %v1930 = vadd.f32 %v121, %v1929
    %v1931 = vpop.f32.mrf.mxu0
    %1932 = vmatprep.mubr.f32.mxu0 0.0
    %1933 = vmatmul.mubr.f32.gmra.mxu0 %v1855
    %v1934 = vpop.f32.mrf.mxu0
    %v1935 = vadd.f32 %v122, %v1934
    %v1936 = vpop.f32.mrf.mxu0
    %1937 = vdwg.mxu0
    %v1938 = vsel %vm1724, %v1930, -inf
    %1939 = vmax.xlane.f32.xlu0 %v1938
    %v1940 = vpop.xlane.xlu0 %1939
    %v1941 = vsel %vm1724, %v1935, -inf
    %1942 = vmax.xlane.f32.xlu0 %v1941
    %v1943 = vpop.xlane.xlu0 %1942
    %v1944 = vsub.f32 %v1930, %v1940
    %v1945 = vsub.f32 %v1935, %v1943
    %v1946 = vmul.f32 %v1944, 1.442695
    %v1947 = vpow.pop %v1946
    %v1948 = vmul.f32 %v1945, 1.442695
    %v1949 = vpow.pop %v1948
    %v1950 = vsel %vm1724, %v1947, 0.0
    %1951 = vadd.xlane.f32.xlu0 %v1950
    %v1952 = vpop.xlane.xlu0 %1951
    %v1953 = vsel %vm1724, %v1949, 0.0
    %1954 = vadd.xlane.f32.xlu0 %v1953
    %v1955 = vpop.xlane.xlu0 %1954
    %v1956 = vrcp.pop %v1952
    %v1957 = vrcp.pop %v1955
    %v1958 = vmul.f32 %v1952, %v1956
    %v1959 = vmul.f32 %v1955, %v1957
    %v1960 = vsub.f32 2.0, %v1958
    %v1961 = vsub.f32 2.0, %v1959
    %v1962 = vmul.f32 %v1956, %v1960
    %v1963 = vmul.f32 %v1957, %v1961
    %v1964 = vmul.f32 %v1947, %v1962
    %v1965 = vmul.f32 %v1949, %v1963
    %1966 = vrot.lane.b32.xlu0 %v1616, 88
    %v1967 = vpop.permute.xlu0 %1966
    %1968 = vrot.lane.b32.xlu0 %v1621, 88
    %v1969 = vpop.permute.xlu0 %1968
    %1970 = vrot.lane.b32.xlu0 %v1626, 88
    %v1971 = vpop.permute.xlu0 %1970
    %v1976 = vsel %vm1724, %v1964, 0
    %v1979 = vsel %vm1724, %v1965, 0
    %1981 = vmatprep.subr.mxu0 0.0
    %1982 = vmatpush1.msra.mxu0 0.0
    %1983 = vmatprep.subr.mxu0 0.0
    %1984 = vmatpush1.msra.mxu0 0.0
    %1985 = vmatprep.subr.mxu0 0.0
    %1986 = vmatpush1.msra.mxu0 0.0
    %1987 = vmatprep.subr.mxu0 0.0
    %1988 = vmatpush1.msra.mxu0 0.0
    %1989 = vmatprep.subr.mxu0 0.0
    %1990 = vmatpush1.msra.mxu0 0.0
    %1991 = vmatprep.subr.mxu0 0.0
    %1992 = vmatpush1.msra.mxu0 0.0
    %1993 = vmatprep.subr.mxu0 0.0
    %1994 = vmatpush1.msra.mxu0 0.0
    %1995 = vmatprep.subr.mxu0 0.0
    %1996 = vmatpush1.msra.mxu0 0.0
    %1997 = vmatprep.subr.mxu0 0.0
    %1998 = vmatpush1.msra.mxu0 0.0
    %1999 = vmatprep.subr.mxu0 0.0
    %2000 = vmatpush1.msra.mxu0 0.0
    %2001 = vmatprep.subr.mxu0 0.0
    %2002 = vmatpush1.msra.mxu0 0.0
    %2003 = vmatprep.subr.mxu0 0.0
    %2004 = vmatpush1.msra.mxu0 0.0
    %2005 = vmatprep.subr.mxu0 0.0
    %2006 = vmatpush1.msra.mxu0 0.0
    %2007 = vmatprep.subr.mxu0 0.0
    %2008 = vmatpush1.msra.mxu0 %v1971
    %2009 = vmatprep.subr.mxu0 0.0
    %2010 = vmatpush1.msra.mxu0 %v1969
    %2011 = vmatprep.subr.mxu0 0.0
    %2012 = vmatpush1.msra.mxu0 %v1967
    %2013 = vmatprep.subr.mxu0 0.0
    %2014 = vmatpush2.msra.mxu0 0.0
    %2015 = vmatprep.subr.mxu0 0.0
    %2016 = vmatpush2.msra.mxu0 0.0
    %2017 = vmatprep.subr.mxu0 0.0
    %2018 = vmatpush2.msra.mxu0 0.0
    %2019 = vmatprep.subr.mxu0 0.0
    %2020 = vmatpush2.msra.mxu0 0.0
    %2021 = vmatprep.subr.mxu0 0.0
    %2022 = vmatpush2.msra.mxu0 0.0
    %2023 = vmatprep.subr.mxu0 0.0
    %2024 = vmatpush2.msra.mxu0 0.0
    %2025 = vmatprep.subr.mxu0 0.0
    %2026 = vmatpush2.msra.mxu0 0.0
    %2027 = vmatprep.subr.mxu0 0.0
    %2028 = vmatpush2.msra.mxu0 0.0
    %2029 = vmatprep.subr.mxu0 0.0
    %2030 = vmatpush2.msra.mxu0 0.0
    %2031 = vmatprep.subr.mxu0 0.0
    %2032 = vmatpush2.msra.mxu0 0.0
    %2033 = vmatprep.subr.mxu0 0.0
    %2034 = vmatpush2.msra.mxu0 0.0
    %2035 = vmatprep.subr.mxu0 0.0
    %2036 = vmatpush2.msra.mxu0 0.0
    %2037 = vmatprep.subr.mxu0 0.0
    %2038 = vmatpush2.msra.mxu0 0.0
    %2039 = vmatprep.subr.mxu0 0.0
    %2040 = vmatpush2.msra.mxu0 0.0
    %2041 = vmatprep.subr.mxu0 0.0
    %2042 = vmatpush2.msra.mxu0 0.0
    %2043 = vmatprep.subr.mxu0 0.0
    %2044 = vmatpush2.msra.mxu0 0.0
    %2045 = vmatprep.mubr.f32.mxu0 0.0
    %2046 = vmatmul.mubr.f32.gmra.mxu0 %v1976
    %v2047 = vpop.f32.mrf.mxu0
    %v2048 = vadd.f32 0.0, %v2047
    %v2049 = vpop.f32.mrf.mxu0
    %2050 = vmatprep.mubr.f32.mxu0 0.0
    %2051 = vmatmul.mubr.f32.gmra.mxu0 %v1979
    %v2052 = vpop.f32.mrf.mxu0
    %v2053 = vadd.f32 0.0, %v2052
    %v2054 = vpop.f32.mrf.mxu0
    %2055 = vdwg.mxu0
    %v2057 = vsel %vm231, %v2048, 0
    %v2060 = vsel %vm231, %v2053, 0
    %2062 = vmatprep.subr.mxu0 0.0
    %2063 = vmatpush1.msra.mxu0 0.0
    %2064 = vmatprep.subr.mxu0 0.0
    %2065 = vmatpush1.msra.mxu0 0.0
    %2066 = vmatprep.subr.mxu0 0.0
    %2067 = vmatpush1.msra.mxu0 0.0
    %2068 = vmatprep.subr.mxu0 0.0
    %2069 = vmatpush1.msra.mxu0 0.0
    %2070 = vmatprep.subr.mxu0 0.0
    %2071 = vmatpush1.msra.mxu0 0.0
    %2072 = vmatprep.subr.mxu0 0.0
    %2073 = vmatpush1.msra.mxu0 0.0
    %2074 = vmatprep.subr.mxu0 0.0
    %2075 = vmatpush1.msra.mxu0 0.0
    %2076 = vmatprep.subr.mxu0 0.0
    %2077 = vmatpush1.msra.mxu0 0.0
    %2078 = vmatprep.subr.mxu0 0.0
    %2079 = vmatpush1.msra.mxu0 0.0
    %2080 = vmatprep.subr.mxu0 0.0
    %2081 = vmatpush1.msra.mxu0 0.0
    %2082 = vmatprep.subr.mxu0 0.0
    %2083 = vmatpush1.msra.mxu0 0.0
    %2084 = vmatprep.subr.mxu0 0.0
    %2085 = vmatpush1.msra.mxu0 0.0
    %2086 = vmatprep.subr.mxu0 0.0
    %2087 = vmatpush1.msra.mxu0 0.0
    %2088 = vmatprep.subr.mxu0 0.0
    %2089 = vmatpush1.msra.mxu0 0.0
    %2090 = vmatprep.subr.mxu0 0.0
    %2091 = vmatpush1.msra.mxu0 0.0
    %2092 = vmatprep.subr.mxu0 0.0
    %2093 = vmatpush1.msra.mxu0 %v1631
    %2094 = vmatprep.subr.mxu0 0.0
    %2095 = vmatpush2.msra.mxu0 0.0
    %2096 = vmatprep.subr.mxu0 0.0
    %2097 = vmatpush2.msra.mxu0 0.0
    %2098 = vmatprep.subr.mxu0 0.0
    %2099 = vmatpush2.msra.mxu0 0.0
    %2100 = vmatprep.subr.mxu0 0.0
    %2101 = vmatpush2.msra.mxu0 0.0
    %2102 = vmatprep.subr.mxu0 0.0
    %2103 = vmatpush2.msra.mxu0 0.0
    %2104 = vmatprep.subr.mxu0 0.0
    %2105 = vmatpush2.msra.mxu0 0.0
    %2106 = vmatprep.subr.mxu0 0.0
    %2107 = vmatpush2.msra.mxu0 0.0
    %2108 = vmatprep.subr.mxu0 0.0
    %2109 = vmatpush2.msra.mxu0 0.0
    %2110 = vmatprep.subr.mxu0 0.0
    %2111 = vmatpush2.msra.mxu0 0.0
    %2112 = vmatprep.subr.mxu0 0.0
    %2113 = vmatpush2.msra.mxu0 0.0
    %2114 = vmatprep.subr.mxu0 0.0
    %2115 = vmatpush2.msra.mxu0 0.0
    %2116 = vmatprep.subr.mxu0 0.0
    %2117 = vmatpush2.msra.mxu0 0.0
    %2118 = vmatprep.subr.mxu0 0.0
    %2119 = vmatpush2.msra.mxu0 0.0
    %2120 = vmatprep.subr.mxu0 0.0
    %2121 = vmatpush2.msra.mxu0 0.0
    %2122 = vmatprep.subr.mxu0 0.0
    %2123 = vmatpush2.msra.mxu0 0.0
    %2124 = vmatprep.subr.mxu0 0.0
    %2125 = vmatpush2.msra.mxu0 0.0
    %2126 = vmatprep.mubr.f32.mxu0 0.0
    %2127 = vmatmul.mubr.f32.gmra.mxu0 %v2057
    %v2128 = vpop.f32.mrf.mxu0
    %v2129 = vadd.f32 0.0, %v2128
    %v2130 = vpop.f32.mrf.mxu0
    %2131 = vmatprep.mubr.f32.mxu0 0.0
    %2132 = vmatmul.mubr.f32.gmra.mxu0 %v2060
    %v2133 = vpop.f32.mrf.mxu0
    %v2134 = vadd.f32 0.0, %v2133
    %v2135 = vpop.f32.mrf.mxu0
    %2136 = vdwg.mxu0
    %v2138 = vsel %vm231, %v1835, 0
    %v2141 = vsel %vm231, %v1840, 0
    %2143 = vmatprep.subr.mxu0 0.0
    %2144 = vmatpush1.msra.mxu0 0.0
    %2145 = vmatprep.subr.mxu0 0.0
    %2146 = vmatpush1.msra.mxu0 0.0
    %2147 = vmatprep.subr.mxu0 0.0
    %2148 = vmatpush1.msra.mxu0 0.0
    %2149 = vmatprep.subr.mxu0 0.0
    %2150 = vmatpush1.msra.mxu0 0.0
    %2151 = vmatprep.subr.mxu0 0.0
    %2152 = vmatpush1.msra.mxu0 0.0
    %2153 = vmatprep.subr.mxu0 0.0
    %2154 = vmatpush1.msra.mxu0 0.0
    %2155 = vmatprep.subr.mxu0 0.0
    %2156 = vmatpush1.msra.mxu0 0.0
    %2157 = vmatprep.subr.mxu0 0.0
    %2158 = vmatpush1.msra.mxu0 0.0
    %2159 = vmatprep.subr.mxu0 0.0
    %2160 = vmatpush1.msra.mxu0 0.0
    %2161 = vmatprep.subr.mxu0 0.0
    %2162 = vmatpush1.msra.mxu0 0.0
    %2163 = vmatprep.subr.mxu0 0.0
    %2164 = vmatpush1.msra.mxu0 0.0
    %2165 = vmatprep.subr.mxu0 0.0
    %2166 = vmatpush1.msra.mxu0 0.0
    %2167 = vmatprep.subr.mxu0 0.0
    %2168 = vmatpush1.msra.mxu0 0.0
    %2169 = vmatprep.subr.mxu0 0.0
    %2170 = vmatpush1.msra.mxu0 0.0
    %2171 = vmatprep.subr.mxu0 0.0
    %2172 = vmatpush1.msra.mxu0 0.0
    %2173 = vmatprep.subr.mxu0 0.0
    %2174 = vmatpush1.msra.mxu0 %v1630
    %2175 = vmatprep.subr.mxu0 0.0
    %2176 = vmatpush2.msra.mxu0 0.0
    %2177 = vmatprep.subr.mxu0 0.0
    %2178 = vmatpush2.msra.mxu0 0.0
    %2179 = vmatprep.subr.mxu0 0.0
    %2180 = vmatpush2.msra.mxu0 0.0
    %2181 = vmatprep.subr.mxu0 0.0
    %2182 = vmatpush2.msra.mxu0 0.0
    %2183 = vmatprep.subr.mxu0 0.0
    %2184 = vmatpush2.msra.mxu0 0.0
    %2185 = vmatprep.subr.mxu0 0.0
    %2186 = vmatpush2.msra.mxu0 0.0
    %2187 = vmatprep.subr.mxu0 0.0
    %2188 = vmatpush2.msra.mxu0 0.0
    %2189 = vmatprep.subr.mxu0 0.0
    %2190 = vmatpush2.msra.mxu0 0.0
    %2191 = vmatprep.subr.mxu0 0.0
    %2192 = vmatpush2.msra.mxu0 0.0
    %2193 = vmatprep.subr.mxu0 0.0
    %2194 = vmatpush2.msra.mxu0 0.0
    %2195 = vmatprep.subr.mxu0 0.0
    %2196 = vmatpush2.msra.mxu0 0.0
    %2197 = vmatprep.subr.mxu0 0.0
    %2198 = vmatpush2.msra.mxu0 0.0
    %2199 = vmatprep.subr.mxu0 0.0
    %2200 = vmatpush2.msra.mxu0 0.0
    %2201 = vmatprep.subr.mxu0 0.0
    %2202 = vmatpush2.msra.mxu0 0.0
    %2203 = vmatprep.subr.mxu0 0.0
    %2204 = vmatpush2.msra.mxu0 0.0
    %2205 = vmatprep.subr.mxu0 0.0
    %2206 = vmatpush2.msra.mxu0 0.0
    %2207 = vmatprep.mubr.f32.mxu0 0.0
    %2208 = vmatmul.mubr.f32.gmra.mxu0 %v2138
    %v2209 = vpop.f32.mrf.mxu0
    %v2210 = vadd.f32 %v2129, %v2209
    %v2211 = vpop.f32.mrf.mxu0
    %2212 = vmatprep.mubr.f32.mxu0 0.0
    %2213 = vmatmul.mubr.f32.gmra.mxu0 %v2141
    %v2214 = vpop.f32.mrf.mxu0
    %v2215 = vadd.f32 %v2134, %v2214
    %v2216 = vpop.f32.mrf.mxu0
    %2217 = vdwg.mxu0
    %2218 = vrot.lane.b32.xlu0 %v1519, 112
    %v2219 = vpop.permute.xlu0 %2218
    %2220 = vrot.lane.b32.xlu0 %v1520, 112
    %v2221 = vpop.permute.xlu0 %2220
    %2222 = vrot.lane.b32.xlu0 %v1616, 112
    %v2223 = vpop.permute.xlu0 %2222
    %2224 = vrot.lane.b32.xlu0 %v1621, 112
    %v2225 = vpop.permute.xlu0 %2224
    %2226 = vrot.lane.b32.xlu0 %v1626, 112
    %v2227 = vpop.permute.xlu0 %2226
    %v2228 = vsel %vm231, %v2219, 0
    %v2230 = vsel %vm231, %v2221, 0
    %v2232 = vsel %vm231, %v2223, 0
    %v2234 = vsel %vm231, %v2225, 0
    %v2236 = vsel %vm231, %v2227, 0
    %2238 = vmatprep.subr.mxu0 0.0
    %2239 = vmatpush1.xpose.msra.mxu0 0.0
    %2240 = vmatprep.subr.mxu0 0.0
    %2241 = vmatpush1.xpose.msra.mxu0 0.0
    %2242 = vmatprep.subr.mxu0 0.0
    %2243 = vmatpush1.xpose.msra.mxu0 0.0
    %2244 = vmatprep.subr.mxu0 0.0
    %2245 = vmatpush1.xpose.msra.mxu0 0.0
    %2246 = vmatprep.subr.mxu0 0.0
    %2247 = vmatpush1.xpose.msra.mxu0 0.0
    %2248 = vmatprep.subr.mxu0 0.0
    %2249 = vmatpush1.xpose.msra.mxu0 0.0
    %2250 = vmatprep.subr.mxu0 0.0
    %2251 = vmatpush1.xpose.msra.mxu0 0.0
    %2252 = vmatprep.subr.mxu0 0.0
    %2253 = vmatpush1.xpose.msra.mxu0 0.0
    %2254 = vmatprep.subr.mxu0 0.0
    %2255 = vmatpush1.xpose.msra.mxu0 0.0
    %2256 = vmatprep.subr.mxu0 0.0
    %2257 = vmatpush1.xpose.msra.mxu0 0.0
    %2258 = vmatprep.subr.mxu0 0.0
    %2259 = vmatpush1.xpose.msra.mxu0 0.0
    %2260 = vmatprep.subr.mxu0 0.0
    %2261 = vmatpush1.xpose.msra.mxu0 0.0
    %2262 = vmatprep.subr.mxu0 0.0
    %2263 = vmatpush1.xpose.msra.mxu0 0.0
    %2264 = vmatprep.subr.mxu0 0.0
    %2265 = vmatpush1.xpose.msra.mxu0 %v2236
    %2266 = vmatprep.subr.mxu0 0.0
    %2267 = vmatpush1.xpose.msra.mxu0 %v2234
    %2268 = vmatprep.subr.mxu0 0.0
    %2269 = vmatpush1.xpose.msra.mxu0 %v2232
    %2270 = vmatprep.subr.mxu0 0.0
    %2271 = vmatpush2.xpose.msra.mxu0 0.0
    %2272 = vmatprep.subr.mxu0 0.0
    %2273 = vmatpush2.xpose.msra.mxu0 0.0
    %2274 = vmatprep.subr.mxu0 0.0
    %2275 = vmatpush2.xpose.msra.mxu0 0.0
    %2276 = vmatprep.subr.mxu0 0.0
    %2277 = vmatpush2.xpose.msra.mxu0 0.0
    %2278 = vmatprep.subr.mxu0 0.0
    %2279 = vmatpush2.xpose.msra.mxu0 0.0
    %2280 = vmatprep.subr.mxu0 0.0
    %2281 = vmatpush2.xpose.msra.mxu0 0.0
    %2282 = vmatprep.subr.mxu0 0.0
    %2283 = vmatpush2.xpose.msra.mxu0 0.0
    %2284 = vmatprep.subr.mxu0 0.0
    %2285 = vmatpush2.xpose.msra.mxu0 0.0
    %2286 = vmatprep.subr.mxu0 0.0
    %2287 = vmatpush2.xpose.msra.mxu0 0.0
    %2288 = vmatprep.subr.mxu0 0.0
    %2289 = vmatpush2.xpose.msra.mxu0 0.0
    %2290 = vmatprep.subr.mxu0 0.0
    %2291 = vmatpush2.xpose.msra.mxu0 0.0
    %2292 = vmatprep.subr.mxu0 0.0
    %2293 = vmatpush2.xpose.msra.mxu0 0.0
    %2294 = vmatprep.subr.mxu0 0.0
    %2295 = vmatpush2.xpose.msra.mxu0 0.0
    %2296 = vmatprep.subr.mxu0 0.0
    %2297 = vmatpush2.xpose.msra.mxu0 0.0
    %2298 = vmatprep.subr.mxu0 0.0
    %2299 = vmatpush2.xpose.msra.mxu0 0.0
    %2300 = vmatprep.subr.mxu0 0.0
    %2301 = vmatpush2.xpose.msra.mxu0 0.0
    %2302 = vmatprep.mubr.f32.mxu0 0.0
    %2303 = vmatmul.mubr.f32.gmra.mxu0 %v2228
    %v2304 = vpop.f32.mrf.mxu0
    %v2305 = vadd.f32 %v121, %v2304
    %v2306 = vpop.f32.mrf.mxu0
    %2307 = vmatprep.mubr.f32.mxu0 0.0
    %2308 = vmatmul.mubr.f32.gmra.mxu0 %v2230
    %v2309 = vpop.f32.mrf.mxu0
    %v2310 = vadd.f32 %v122, %v2309
    %v2311 = vpop.f32.mrf.mxu0
    %2312 = vdwg.mxu0
    %v2313 = vsel %vm1724, %v2305, -inf
    %2314 = vmax.xlane.f32.xlu0 %v2313
    %v2315 = vpop.xlane.xlu0 %2314
    %v2316 = vsel %vm1724, %v2310, -inf
    %2317 = vmax.xlane.f32.xlu0 %v2316
    %v2318 = vpop.xlane.xlu0 %2317
    %v2319 = vsub.f32 %v2305, %v2315
    %v2320 = vsub.f32 %v2310, %v2318
    %v2321 = vmul.f32 %v2319, 1.442695
    %v2322 = vpow.pop %v2321
    %v2323 = vmul.f32 %v2320, 1.442695
    %v2324 = vpow.pop %v2323
    %v2325 = vsel %vm1724, %v2322, 0.0
    %2326 = vadd.xlane.f32.xlu0 %v2325
    %v2327 = vpop.xlane.xlu0 %2326
    %v2328 = vsel %vm1724, %v2324, 0.0
    %2329 = vadd.xlane.f32.xlu0 %v2328
    %v2330 = vpop.xlane.xlu0 %2329
    %v2331 = vrcp.pop %v2327
    %v2332 = vrcp.pop %v2330
    %v2333 = vmul.f32 %v2327, %v2331
    %v2334 = vmul.f32 %v2330, %v2332
    %v2335 = vsub.f32 2.0, %v2333
    %v2336 = vsub.f32 2.0, %v2334
    %v2337 = vmul.f32 %v2331, %v2335
    %v2338 = vmul.f32 %v2332, %v2336
    %v2339 = vmul.f32 %v2322, %v2337
    %v2340 = vmul.f32 %v2324, %v2338
    %2341 = vrot.lane.b32.xlu0 %v1616, 80
    %v2342 = vpop.permute.xlu0 %2341
    %2343 = vrot.lane.b32.xlu0 %v1621, 80
    %v2344 = vpop.permute.xlu0 %2343
    %2345 = vrot.lane.b32.xlu0 %v1626, 80
    %v2346 = vpop.permute.xlu0 %2345
    %v2351 = vsel %vm1724, %v2339, 0
    %v2354 = vsel %vm1724, %v2340, 0
    %2356 = vmatprep.subr.mxu0 0.0
    %2357 = vmatpush1.msra.mxu0 0.0
    %2358 = vmatprep.subr.mxu0 0.0
    %2359 = vmatpush1.msra.mxu0 0.0
    %2360 = vmatprep.subr.mxu0 0.0
    %2361 = vmatpush1.msra.mxu0 0.0
    %2362 = vmatprep.subr.mxu0 0.0
    %2363 = vmatpush1.msra.mxu0 0.0
    %2364 = vmatprep.subr.mxu0 0.0
    %2365 = vmatpush1.msra.mxu0 0.0
    %2366 = vmatprep.subr.mxu0 0.0
    %2367 = vmatpush1.msra.mxu0 0.0
    %2368 = vmatprep.subr.mxu0 0.0
    %2369 = vmatpush1.msra.mxu0 0.0
    %2370 = vmatprep.subr.mxu0 0.0
    %2371 = vmatpush1.msra.mxu0 0.0
    %2372 = vmatprep.subr.mxu0 0.0
    %2373 = vmatpush1.msra.mxu0 0.0
    %2374 = vmatprep.subr.mxu0 0.0
    %2375 = vmatpush1.msra.mxu0 0.0
    %2376 = vmatprep.subr.mxu0 0.0
    %2377 = vmatpush1.msra.mxu0 0.0
    %2378 = vmatprep.subr.mxu0 0.0
    %2379 = vmatpush1.msra.mxu0 0.0
    %2380 = vmatprep.subr.mxu0 0.0
    %2381 = vmatpush1.msra.mxu0 0.0
    %2382 = vmatprep.subr.mxu0 0.0
    %2383 = vmatpush1.msra.mxu0 %v2346
    %2384 = vmatprep.subr.mxu0 0.0
    %2385 = vmatpush1.msra.mxu0 %v2344
    %2386 = vmatprep.subr.mxu0 0.0
    %2387 = vmatpush1.msra.mxu0 %v2342
    %2388 = vmatprep.subr.mxu0 0.0
    %2389 = vmatpush2.msra.mxu0 0.0
    %2390 = vmatprep.subr.mxu0 0.0
    %2391 = vmatpush2.msra.mxu0 0.0
    %2392 = vmatprep.subr.mxu0 0.0
    %2393 = vmatpush2.msra.mxu0 0.0
    %2394 = vmatprep.subr.mxu0 0.0
    %2395 = vmatpush2.msra.mxu0 0.0
    %2396 = vmatprep.subr.mxu0 0.0
    %2397 = vmatpush2.msra.mxu0 0.0
    %2398 = vmatprep.subr.mxu0 0.0
    %2399 = vmatpush2.msra.mxu0 0.0
    %2400 = vmatprep.subr.mxu0 0.0
    %2401 = vmatpush2.msra.mxu0 0.0
    %2402 = vmatprep.subr.mxu0 0.0
    %2403 = vmatpush2.msra.mxu0 0.0
    %2404 = vmatprep.subr.mxu0 0.0
    %2405 = vmatpush2.msra.mxu0 0.0
    %2406 = vmatprep.subr.mxu0 0.0
    %2407 = vmatpush2.msra.mxu0 0.0
    %2408 = vmatprep.subr.mxu0 0.0
    %2409 = vmatpush2.msra.mxu0 0.0
    %2410 = vmatprep.subr.mxu0 0.0
    %2411 = vmatpush2.msra.mxu0 0.0
    %2412 = vmatprep.subr.mxu0 0.0
    %2413 = vmatpush2.msra.mxu0 0.0
    %2414 = vmatprep.subr.mxu0 0.0
    %2415 = vmatpush2.msra.mxu0 0.0
    %2416 = vmatprep.subr.mxu0 0.0
    %2417 = vmatpush2.msra.mxu0 0.0
    %2418 = vmatprep.subr.mxu0 0.0
    %2419 = vmatpush2.msra.mxu0 0.0
    %2420 = vmatprep.mubr.f32.mxu0 0.0
    %2421 = vmatmul.mubr.f32.gmra.mxu0 %v2351
    %v2422 = vpop.f32.mrf.mxu0
    %v2423 = vadd.f32 0.0, %v2422
    %v2424 = vpop.f32.mrf.mxu0
    %2425 = vmatprep.mubr.f32.mxu0 0.0
    %2426 = vmatmul.mubr.f32.gmra.mxu0 %v2354
    %v2427 = vpop.f32.mrf.mxu0
    %v2428 = vadd.f32 0.0, %v2427
    %v2429 = vpop.f32.mrf.mxu0
    %2430 = vdwg.mxu0
    %v2432 = vsel %vm231, %v2423, 0
    %v2435 = vsel %vm231, %v2428, 0
    %2437 = vmatprep.subr.mxu0 0.0
    %2438 = vmatpush1.msra.mxu0 0.0
    %2439 = vmatprep.subr.mxu0 0.0
    %2440 = vmatpush1.msra.mxu0 0.0
    %2441 = vmatprep.subr.mxu0 0.0
    %2442 = vmatpush1.msra.mxu0 0.0
    %2443 = vmatprep.subr.mxu0 0.0
    %2444 = vmatpush1.msra.mxu0 0.0
    %2445 = vmatprep.subr.mxu0 0.0
    %2446 = vmatpush1.msra.mxu0 0.0
    %2447 = vmatprep.subr.mxu0 0.0
    %2448 = vmatpush1.msra.mxu0 0.0
    %2449 = vmatprep.subr.mxu0 0.0
    %2450 = vmatpush1.msra.mxu0 0.0
    %2451 = vmatprep.subr.mxu0 0.0
    %2452 = vmatpush1.msra.mxu0 0.0
    %2453 = vmatprep.subr.mxu0 0.0
    %2454 = vmatpush1.msra.mxu0 0.0
    %2455 = vmatprep.subr.mxu0 0.0
    %2456 = vmatpush1.msra.mxu0 0.0
    %2457 = vmatprep.subr.mxu0 0.0
    %2458 = vmatpush1.msra.mxu0 0.0
    %2459 = vmatprep.subr.mxu0 0.0
    %2460 = vmatpush1.msra.mxu0 0.0
    %2461 = vmatprep.subr.mxu0 0.0
    %2462 = vmatpush1.msra.mxu0 0.0
    %2463 = vmatprep.subr.mxu0 0.0
    %2464 = vmatpush1.msra.mxu0 0.0
    %2465 = vmatprep.subr.mxu0 0.0
    %2466 = vmatpush1.msra.mxu0 0.0
    %2467 = vmatprep.subr.mxu0 0.0
    %2468 = vmatpush1.msra.mxu0 %v1632
    %2469 = vmatprep.subr.mxu0 0.0
    %2470 = vmatpush2.msra.mxu0 0.0
    %2471 = vmatprep.subr.mxu0 0.0
    %2472 = vmatpush2.msra.mxu0 0.0
    %2473 = vmatprep.subr.mxu0 0.0
    %2474 = vmatpush2.msra.mxu0 0.0
    %2475 = vmatprep.subr.mxu0 0.0
    %2476 = vmatpush2.msra.mxu0 0.0
    %2477 = vmatprep.subr.mxu0 0.0
    %2478 = vmatpush2.msra.mxu0 0.0
    %2479 = vmatprep.subr.mxu0 0.0
    %2480 = vmatpush2.msra.mxu0 0.0
    %2481 = vmatprep.subr.mxu0 0.0
    %2482 = vmatpush2.msra.mxu0 0.0
    %2483 = vmatprep.subr.mxu0 0.0
    %2484 = vmatpush2.msra.mxu0 0.0
    %2485 = vmatprep.subr.mxu0 0.0
    %2486 = vmatpush2.msra.mxu0 0.0
    %2487 = vmatprep.subr.mxu0 0.0
    %2488 = vmatpush2.msra.mxu0 0.0
    %2489 = vmatprep.subr.mxu0 0.0
    %2490 = vmatpush2.msra.mxu0 0.0
    %2491 = vmatprep.subr.mxu0 0.0
    %2492 = vmatpush2.msra.mxu0 0.0
    %2493 = vmatprep.subr.mxu0 0.0
    %2494 = vmatpush2.msra.mxu0 0.0
    %2495 = vmatprep.subr.mxu0 0.0
    %2496 = vmatpush2.msra.mxu0 0.0
    %2497 = vmatprep.subr.mxu0 0.0
    %2498 = vmatpush2.msra.mxu0 0.0
    %2499 = vmatprep.subr.mxu0 0.0
    %2500 = vmatpush2.msra.mxu0 0.0
    %2501 = vmatprep.mubr.f32.mxu0 0.0
    %2502 = vmatmul.mubr.f32.gmra.mxu0 %v2432
    %v2503 = vpop.f32.mrf.mxu0
    %v2504 = vadd.f32 0.0, %v2503
    %v2505 = vpop.f32.mrf.mxu0
    %2506 = vmatprep.mubr.f32.mxu0 0.0
    %2507 = vmatmul.mubr.f32.gmra.mxu0 %v2435
    %v2508 = vpop.f32.mrf.mxu0
    %v2509 = vadd.f32 0.0, %v2508
    %v2510 = vpop.f32.mrf.mxu0
    %2511 = vdwg.mxu0
    %v2512 = vadd.f32 %v2210, %v2504
    %v2513 = vadd.f32 %v2215, %v2509
    %2514 = vrot.lane.b32.xlu0 %v1519, 104
    %v2515 = vpop.permute.xlu0 %2514
    %2516 = vrot.lane.b32.xlu0 %v1520, 104
    %v2517 = vpop.permute.xlu0 %2516
    %2518 = vrot.lane.b32.xlu0 %v1616, 104
    %v2519 = vpop.permute.xlu0 %2518
    %2520 = vrot.lane.b32.xlu0 %v1621, 104
    %v2521 = vpop.permute.xlu0 %2520
    %2522 = vrot.lane.b32.xlu0 %v1626, 104
    %v2523 = vpop.permute.xlu0 %2522
    %v2524 = vsel %vm231, %v2515, 0
    %v2526 = vsel %vm231, %v2517, 0
    %v2528 = vsel %vm231, %v2519, 0
    %v2530 = vsel %vm231, %v2521, 0
    %v2532 = vsel %vm231, %v2523, 0
    %2534 = vmatprep.subr.mxu0 0.0
    %2535 = vmatpush1.xpose.msra.mxu0 0.0
    %2536 = vmatprep.subr.mxu0 0.0
    %2537 = vmatpush1.xpose.msra.mxu0 0.0
    %2538 = vmatprep.subr.mxu0 0.0
    %2539 = vmatpush1.xpose.msra.mxu0 0.0
    %2540 = vmatprep.subr.mxu0 0.0
    %2541 = vmatpush1.xpose.msra.mxu0 0.0
    %2542 = vmatprep.subr.mxu0 0.0
    %2543 = vmatpush1.xpose.msra.mxu0 0.0
    %2544 = vmatprep.subr.mxu0 0.0
    %2545 = vmatpush1.xpose.msra.mxu0 0.0
    %2546 = vmatprep.subr.mxu0 0.0
    %2547 = vmatpush1.xpose.msra.mxu0 0.0
    %2548 = vmatprep.subr.mxu0 0.0
    %2549 = vmatpush1.xpose.msra.mxu0 0.0
    %2550 = vmatprep.subr.mxu0 0.0
    %2551 = vmatpush1.xpose.msra.mxu0 0.0
    %2552 = vmatprep.subr.mxu0 0.0
    %2553 = vmatpush1.xpose.msra.mxu0 0.0
    %2554 = vmatprep.subr.mxu0 0.0
    %2555 = vmatpush1.xpose.msra.mxu0 0.0
    %2556 = vmatprep.subr.mxu0 0.0
    %2557 = vmatpush1.xpose.msra.mxu0 0.0
    %2558 = vmatprep.subr.mxu0 0.0
    %2559 = vmatpush1.xpose.msra.mxu0 0.0
    %2560 = vmatprep.subr.mxu0 0.0
    %2561 = vmatpush1.xpose.msra.mxu0 %v2532
    %2562 = vmatprep.subr.mxu0 0.0
    %2563 = vmatpush1.xpose.msra.mxu0 %v2530
    %2564 = vmatprep.subr.mxu0 0.0
    %2565 = vmatpush1.xpose.msra.mxu0 %v2528
    %2566 = vmatprep.subr.mxu0 0.0
    %2567 = vmatpush2.xpose.msra.mxu0 0.0
    %2568 = vmatprep.subr.mxu0 0.0
    %2569 = vmatpush2.xpose.msra.mxu0 0.0
    %2570 = vmatprep.subr.mxu0 0.0
    %2571 = vmatpush2.xpose.msra.mxu0 0.0
    %2572 = vmatprep.subr.mxu0 0.0
    %2573 = vmatpush2.xpose.msra.mxu0 0.0
    %2574 = vmatprep.subr.mxu0 0.0
    %2575 = vmatpush2.xpose.msra.mxu0 0.0
    %2576 = vmatprep.subr.mxu0 0.0
    %2577 = vmatpush2.xpose.msra.mxu0 0.0
    %2578 = vmatprep.subr.mxu0 0.0
    %2579 = vmatpush2.xpose.msra.mxu0 0.0
    %2580 = vmatprep.subr.mxu0 0.0
    %2581 = vmatpush2.xpose.msra.mxu0 0.0
    %2582 = vmatprep.subr.mxu0 0.0
    %2583 = vmatpush2.xpose.msra.mxu0 0.0
    %2584 = vmatprep.subr.mxu0 0.0
    %2585 = vmatpush2.xpose.msra.mxu0 0.0
    %2586 = vmatprep.subr.mxu0 0.0
    %2587 = vmatpush2.xpose.msra.mxu0 0.0
    %2588 = vmatprep.subr.mxu0 0.0
    %2589 = vmatpush2.xpose.msra.mxu0 0.0
    %2590 = vmatprep.subr.mxu0 0.0
    %2591 = vmatpush2.xpose.msra.mxu0 0.0
    %2592 = vmatprep.subr.mxu0 0.0
    %2593 = vmatpush2.xpose.msra.mxu0 0.0
    %2594 = vmatprep.subr.mxu0 0.0
    %2595 = vmatpush2.xpose.msra.mxu0 0.0
    %2596 = vmatprep.subr.mxu0 0.0
    %2597 = vmatpush2.xpose.msra.mxu0 0.0
    %2598 = vmatprep.mubr.f32.mxu0 0.0
    %2599 = vmatmul.mubr.f32.gmra.mxu0 %v2524
    %v2600 = vpop.f32.mrf.mxu0
    %v2601 = vadd.f32 %v121, %v2600
    %v2602 = vpop.f32.mrf.mxu0
    %2603 = vmatprep.mubr.f32.mxu0 0.0
    %2604 = vmatmul.mubr.f32.gmra.mxu0 %v2526
    %v2605 = vpop.f32.mrf.mxu0
    %v2606 = vadd.f32 %v122, %v2605
    %v2607 = vpop.f32.mrf.mxu0
    %2608 = vdwg.mxu0
    %v2609 = vsel %vm1724, %v2601, -inf
    %2610 = vmax.xlane.f32.xlu0 %v2609
    %v2611 = vpop.xlane.xlu0 %2610
    %v2612 = vsel %vm1724, %v2606, -inf
    %2613 = vmax.xlane.f32.xlu0 %v2612
    %v2614 = vpop.xlane.xlu0 %2613
    %v2615 = vsub.f32 %v2601, %v2611
    %v2616 = vsub.f32 %v2606, %v2614
    %v2617 = vmul.f32 %v2615, 1.442695
    %v2618 = vpow.pop %v2617
    %v2619 = vmul.f32 %v2616, 1.442695
    %v2620 = vpow.pop %v2619
    %v2621 = vsel %vm1724, %v2618, 0.0
    %2622 = vadd.xlane.f32.xlu0 %v2621
    %v2623 = vpop.xlane.xlu0 %2622
    %v2624 = vsel %vm1724, %v2620, 0.0
    %2625 = vadd.xlane.f32.xlu0 %v2624
    %v2626 = vpop.xlane.xlu0 %2625
    %v2627 = vrcp.pop %v2623
    %v2628 = vrcp.pop %v2626
    %v2629 = vmul.f32 %v2623, %v2627
    %v2630 = vmul.f32 %v2626, %v2628
    %v2631 = vsub.f32 2.0, %v2629
    %v2632 = vsub.f32 2.0, %v2630
    %v2633 = vmul.f32 %v2627, %v2631
    %v2634 = vmul.f32 %v2628, %v2632
    %v2635 = vmul.f32 %v2618, %v2633
    %v2636 = vmul.f32 %v2620, %v2634
    %2637 = vrot.lane.b32.xlu0 %v1616, 72
    %v2638 = vpop.permute.xlu0 %2637
    %2639 = vrot.lane.b32.xlu0 %v1621, 72
    %v2640 = vpop.permute.xlu0 %2639
    %2641 = vrot.lane.b32.xlu0 %v1626, 72
    %v2642 = vpop.permute.xlu0 %2641
    %v2647 = vsel %vm1724, %v2635, 0
    %v2650 = vsel %vm1724, %v2636, 0
    %2652 = vmatprep.subr.mxu0 0.0
    %2653 = vmatpush1.msra.mxu0 0.0
    %2654 = vmatprep.subr.mxu0 0.0
    %2655 = vmatpush1.msra.mxu0 0.0
    %2656 = vmatprep.subr.mxu0 0.0
    %2657 = vmatpush1.msra.mxu0 0.0
    %2658 = vmatprep.subr.mxu0 0.0
    %2659 = vmatpush1.msra.mxu0 0.0
    %2660 = vmatprep.subr.mxu0 0.0
    %2661 = vmatpush1.msra.mxu0 0.0
    %2662 = vmatprep.subr.mxu0 0.0
    %2663 = vmatpush1.msra.mxu0 0.0
    %2664 = vmatprep.subr.mxu0 0.0
    %2665 = vmatpush1.msra.mxu0 0.0
    %2666 = vmatprep.subr.mxu0 0.0
    %2667 = vmatpush1.msra.mxu0 0.0
    %2668 = vmatprep.subr.mxu0 0.0
    %2669 = vmatpush1.msra.mxu0 0.0
    %2670 = vmatprep.subr.mxu0 0.0
    %2671 = vmatpush1.msra.mxu0 0.0
    %2672 = vmatprep.subr.mxu0 0.0
    %2673 = vmatpush1.msra.mxu0 0.0
    %2674 = vmatprep.subr.mxu0 0.0
    %2675 = vmatpush1.msra.mxu0 0.0
    %2676 = vmatprep.subr.mxu0 0.0
    %2677 = vmatpush1.msra.mxu0 0.0
    %2678 = vmatprep.subr.mxu0 0.0
    %2679 = vmatpush1.msra.mxu0 %v2642
    %2680 = vmatprep.subr.mxu0 0.0
    %2681 = vmatpush1.msra.mxu0 %v2640
    %2682 = vmatprep.subr.mxu0 0.0
    %2683 = vmatpush1.msra.mxu0 %v2638
    %2684 = vmatprep.subr.mxu0 0.0
    %2685 = vmatpush2.msra.mxu0 0.0
    %2686 = vmatprep.subr.mxu0 0.0
    %2687 = vmatpush2.msra.mxu0 0.0
    %2688 = vmatprep.subr.mxu0 0.0
    %2689 = vmatpush2.msra.mxu0 0.0
    %2690 = vmatprep.subr.mxu0 0.0
    %2691 = vmatpush2.msra.mxu0 0.0
    %2692 = vmatprep.subr.mxu0 0.0
    %2693 = vmatpush2.msra.mxu0 0.0
    %2694 = vmatprep.subr.mxu0 0.0
    %2695 = vmatpush2.msra.mxu0 0.0
    %2696 = vmatprep.subr.mxu0 0.0
    %2697 = vmatpush2.msra.mxu0 0.0
    %2698 = vmatprep.subr.mxu0 0.0
    %2699 = vmatpush2.msra.mxu0 0.0
    %2700 = vmatprep.subr.mxu0 0.0
    %2701 = vmatpush2.msra.mxu0 0.0
    %2702 = vmatprep.subr.mxu0 0.0
    %2703 = vmatpush2.msra.mxu0 0.0
    %2704 = vmatprep.subr.mxu0 0.0
    %2705 = vmatpush2.msra.mxu0 0.0
    %2706 = vmatprep.subr.mxu0 0.0
    %2707 = vmatpush2.msra.mxu0 0.0
    %2708 = vmatprep.subr.mxu0 0.0
    %2709 = vmatpush2.msra.mxu0 0.0
    %2710 = vmatprep.subr.mxu0 0.0
    %2711 = vmatpush2.msra.mxu0 0.0
    %2712 = vmatprep.subr.mxu0 0.0
    %2713 = vmatpush2.msra.mxu0 0.0
    %2714 = vmatprep.subr.mxu0 0.0
    %2715 = vmatpush2.msra.mxu0 0.0
    %2716 = vmatprep.mubr.f32.mxu0 0.0
    %2717 = vmatmul.mubr.f32.gmra.mxu0 %v2647
    %v2718 = vpop.f32.mrf.mxu0
    %v2719 = vadd.f32 0.0, %v2718
    %v2720 = vpop.f32.mrf.mxu0
    %2721 = vmatprep.mubr.f32.mxu0 0.0
    %2722 = vmatmul.mubr.f32.gmra.mxu0 %v2650
    %v2723 = vpop.f32.mrf.mxu0
    %v2724 = vadd.f32 0.0, %v2723
    %v2725 = vpop.f32.mrf.mxu0
    %2726 = vdwg.mxu0
    %v2728 = vsel %vm231, %v2719, 0
    %v2731 = vsel %vm231, %v2724, 0
    %2733 = vmatprep.subr.mxu0 0.0
    %2734 = vmatpush1.msra.mxu0 0.0
    %2735 = vmatprep.subr.mxu0 0.0
    %2736 = vmatpush1.msra.mxu0 0.0
    %2737 = vmatprep.subr.mxu0 0.0
    %2738 = vmatpush1.msra.mxu0 0.0
    %2739 = vmatprep.subr.mxu0 0.0
    %2740 = vmatpush1.msra.mxu0 0.0
    %2741 = vmatprep.subr.mxu0 0.0
    %2742 = vmatpush1.msra.mxu0 0.0
    %2743 = vmatprep.subr.mxu0 0.0
    %2744 = vmatpush1.msra.mxu0 0.0
    %2745 = vmatprep.subr.mxu0 0.0
    %2746 = vmatpush1.msra.mxu0 0.0
    %2747 = vmatprep.subr.mxu0 0.0
    %2748 = vmatpush1.msra.mxu0 0.0
    %2749 = vmatprep.subr.mxu0 0.0
    %2750 = vmatpush1.msra.mxu0 0.0
    %2751 = vmatprep.subr.mxu0 0.0
    %2752 = vmatpush1.msra.mxu0 0.0
    %2753 = vmatprep.subr.mxu0 0.0
    %2754 = vmatpush1.msra.mxu0 0.0
    %2755 = vmatprep.subr.mxu0 0.0
    %2756 = vmatpush1.msra.mxu0 0.0
    %2757 = vmatprep.subr.mxu0 0.0
    %2758 = vmatpush1.msra.mxu0 0.0
    %2759 = vmatprep.subr.mxu0 0.0
    %2760 = vmatpush1.msra.mxu0 0.0
    %2761 = vmatprep.subr.mxu0 0.0
    %2762 = vmatpush1.msra.mxu0 0.0
    %2763 = vmatprep.subr.mxu0 0.0
    %2764 = vmatpush1.msra.mxu0 %v1633
    %2765 = vmatprep.subr.mxu0 0.0
    %2766 = vmatpush2.msra.mxu0 0.0
    %2767 = vmatprep.subr.mxu0 0.0
    %2768 = vmatpush2.msra.mxu0 0.0
    %2769 = vmatprep.subr.mxu0 0.0
    %2770 = vmatpush2.msra.mxu0 0.0
    %2771 = vmatprep.subr.mxu0 0.0
    %2772 = vmatpush2.msra.mxu0 0.0
    %2773 = vmatprep.subr.mxu0 0.0
    %2774 = vmatpush2.msra.mxu0 0.0
    %2775 = vmatprep.subr.mxu0 0.0
    %2776 = vmatpush2.msra.mxu0 0.0
    %2777 = vmatprep.subr.mxu0 0.0
    %2778 = vmatpush2.msra.mxu0 0.0
    %2779 = vmatprep.subr.mxu0 0.0
    %2780 = vmatpush2.msra.mxu0 0.0
    %2781 = vmatprep.subr.mxu0 0.0
    %2782 = vmatpush2.msra.mxu0 0.0
    %2783 = vmatprep.subr.mxu0 0.0
    %2784 = vmatpush2.msra.mxu0 0.0
    %2785 = vmatprep.subr.mxu0 0.0
    %2786 = vmatpush2.msra.mxu0 0.0
    %2787 = vmatprep.subr.mxu0 0.0
    %2788 = vmatpush2.msra.mxu0 0.0
    %2789 = vmatprep.subr.mxu0 0.0
    %2790 = vmatpush2.msra.mxu0 0.0
    %2791 = vmatprep.subr.mxu0 0.0
    %2792 = vmatpush2.msra.mxu0 0.0
    %2793 = vmatprep.subr.mxu0 0.0
    %2794 = vmatpush2.msra.mxu0 0.0
    %2795 = vmatprep.subr.mxu0 0.0
    %2796 = vmatpush2.msra.mxu0 0.0
    %2797 = vmatprep.mubr.f32.mxu0 0.0
    %2798 = vmatmul.mubr.f32.gmra.mxu0 %v2728
    %v2799 = vpop.f32.mrf.mxu0
    %v2800 = vadd.f32 0.0, %v2799
    %v2801 = vpop.f32.mrf.mxu0
    %2802 = vmatprep.mubr.f32.mxu0 0.0
    %2803 = vmatmul.mubr.f32.gmra.mxu0 %v2731
    %v2804 = vpop.f32.mrf.mxu0
    %v2805 = vadd.f32 0.0, %v2804
    %v2806 = vpop.f32.mrf.mxu0
    %2807 = vdwg.mxu0
    %v2808 = vadd.f32 %v2512, %v2800
    %v2809 = vadd.f32 %v2513, %v2805
    %v2810 = vlaneseq
    %v2811 = vshrl.u32 %v2810, 7
    %v2812 = vsub.s32 1, %v2811
    %v2813 = vrot.slane %v123, %v2812
    %v2814 = vadd.f32 %v2808, %v2813
    %v2815 = vadd.f32 %v2809, %v2813
    %v2816 = vadd.f32 %v1423, %v2814
    %v2817 = vadd.f32 %v1424, %v2815
    %v2818 = vsel %vm137, %v2816, 0.0
    %2819 = vadd.xlane.f32.xlu0 %v2818
    %v2820 = vpop.xlane.xlu0 %2819
    %v2821 = vsel %vm137, %v2817, 0.0
    %2822 = vadd.xlane.f32.xlu0 %v2821
    %v2823 = vpop.xlane.xlu0 %2822
    %v2824 = vmul.f32 %v2820, 0.03125
    %v2825 = vmul.f32 %v2823, 0.03125
    %v2826 = vsub.f32 %v2816, %v2824
    %v2827 = vsub.f32 %v2817, %v2825
    %v2828 = vmul.f32 %v2826, %v2826
    %v2829 = vmul.f32 %v2827, %v2827
    %v2830 = vsel %vm137, %v2828, 0.0
    %2831 = vadd.xlane.f32.xlu0 %v2830
    %v2832 = vpop.xlane.xlu0 %2831
    %v2833 = vsel %vm137, %v2829, 0.0
    %2834 = vadd.xlane.f32.xlu0 %v2833
    %v2835 = vpop.xlane.xlu0 %2834
    %v2836 = vmul.f32 %v2832, 0.03125
    %v2837 = vmul.f32 %v2835, 0.03125
    %v2838 = vadd.f32 %v2836, 1e-05
    %v2839 = vadd.f32 %v2837, 1e-05
    %v2840 = vrsqrt.pop %v2838
    %v2841 = vrsqrt.pop %v2839
    %v2842 = vmul.f32 %v2826, %v2840
    %v2843 = vmul.f32 %v2827, %v2841
    %v2844 = vlaneseq
    %v2845 = vshrl.u32 %v2844, 7
    %v2846 = vsub.s32 5, %v2845
    %v2847 = vrot.slane %v123, %v2846
    %v2848 = vmul.f32 %v2842, %v2847
    %v2849 = vmul.f32 %v2843, %v2847
    %v2850 = vlaneseq
    %v2851 = vshrl.u32 %v2850, 7
    %v2852 = vsub.s32 6, %v2851
    %v2853 = vrot.slane %v123, %v2852
    %v2854 = vadd.f32 %v2848, %v2853
    %v2855 = vadd.f32 %v2849, %v2853
    %v2856 = vld [vmem:[%s7] sm:$0xff]
    %v2857 = vld [vmem:[%s7 + $0x8] sm:$0xff]
    %v2858 = vld [vmem:[%s7 + $0x10] sm:$0xff]
    %v2859 = vld [vmem:[%s7 + $0x18] sm:$0xff]
    %v2861 = vlaneseq
    %v2862 = vshrl.u32 %v2861, 7
    %v2863 = vsub.s32 0, %v2862
    %v2864 = vrot.slane %v125, %v2863
    %v2867 = vsel %vm137, %v2854, 0
    %v2870 = vsel %vm137, %v2855, 0
    %2872 = vmatprep.subr.mxu0 0.0
    %2873 = vmatpush1.msra.mxu0 0.0
    %2874 = vmatprep.subr.mxu0 0.0
    %2875 = vmatpush1.msra.mxu0 0.0
    %2876 = vmatprep.subr.mxu0 0.0
    %2877 = vmatpush1.msra.mxu0 0.0
    %2878 = vmatprep.subr.mxu0 0.0
    %2879 = vmatpush1.msra.mxu0 0.0
    %2880 = vmatprep.subr.mxu0 0.0
    %2881 = vmatpush1.msra.mxu0 0.0
    %2882 = vmatprep.subr.mxu0 0.0
    %2883 = vmatpush1.msra.mxu0 0.0
    %2884 = vmatprep.subr.mxu0 0.0
    %2885 = vmatpush1.msra.mxu0 0.0
    %2886 = vmatprep.subr.mxu0 0.0
    %2887 = vmatpush1.msra.mxu0 0.0
    %2888 = vmatprep.subr.mxu0 0.0
    %2889 = vmatpush1.msra.mxu0 0.0
    %2890 = vmatprep.subr.mxu0 0.0
    %2891 = vmatpush1.msra.mxu0 0.0
    %2892 = vmatprep.subr.mxu0 0.0
    %2893 = vmatpush1.msra.mxu0 0.0
    %2894 = vmatprep.subr.mxu0 0.0
    %2895 = vmatpush1.msra.mxu0 0.0
    %2896 = vmatprep.subr.mxu0 0.0
    %2897 = vmatpush1.msra.mxu0 %v2859
    %2898 = vmatprep.subr.mxu0 0.0
    %2899 = vmatpush1.msra.mxu0 %v2858
    %2900 = vmatprep.subr.mxu0 0.0
    %2901 = vmatpush1.msra.mxu0 %v2857
    %2902 = vmatprep.subr.mxu0 0.0
    %2903 = vmatpush1.msra.mxu0 %v2856
    %2904 = vmatprep.subr.mxu0 0.0
    %2905 = vmatpush2.msra.mxu0 0.0
    %2906 = vmatprep.subr.mxu0 0.0
    %2907 = vmatpush2.msra.mxu0 0.0
    %2908 = vmatprep.subr.mxu0 0.0
    %2909 = vmatpush2.msra.mxu0 0.0
    %2910 = vmatprep.subr.mxu0 0.0
    %2911 = vmatpush2.msra.mxu0 0.0
    %2912 = vmatprep.subr.mxu0 0.0
    %2913 = vmatpush2.msra.mxu0 0.0
    %2914 = vmatprep.subr.mxu0 0.0
    %2915 = vmatpush2.msra.mxu0 0.0
    %2916 = vmatprep.subr.mxu0 0.0
    %2917 = vmatpush2.msra.mxu0 0.0
    %2918 = vmatprep.subr.mxu0 0.0
    %2919 = vmatpush2.msra.mxu0 0.0
    %2920 = vmatprep.subr.mxu0 0.0
    %2921 = vmatpush2.msra.mxu0 0.0
    %2922 = vmatprep.subr.mxu0 0.0
    %2923 = vmatpush2.msra.mxu0 0.0
    %2924 = vmatprep.subr.mxu0 0.0
    %2925 = vmatpush2.msra.mxu0 0.0
    %2926 = vmatprep.subr.mxu0 0.0
    %2927 = vmatpush2.msra.mxu0 0.0
    %2928 = vmatprep.subr.mxu0 0.0
    %2929 = vmatpush2.msra.mxu0 0.0
    %2930 = vmatprep.subr.mxu0 0.0
    %2931 = vmatpush2.msra.mxu0 0.0
    %2932 = vmatprep.subr.mxu0 0.0
    %2933 = vmatpush2.msra.mxu0 0.0
    %2934 = vmatprep.subr.mxu0 0.0
    %2935 = vmatpush2.msra.mxu0 0.0
    %2936 = vmatprep.mubr.f32.mxu0 0.0
    %2937 = vmatmul.mubr.f32.gmra.mxu0 %v2867
    %v2938 = vpop.f32.mrf.mxu0
    %v2939 = vadd.f32 %v2864, %v2938
    %v2940 = vpop.f32.mrf.mxu0
    %2941 = vmatprep.mubr.f32.mxu0 0.0
    %2942 = vmatmul.mubr.f32.gmra.mxu0 %v2870
    %v2943 = vpop.f32.mrf.mxu0
    %v2944 = vadd.f32 %v2864, %v2943
    %v2945 = vpop.f32.mrf.mxu0
    %2946 = vdwg.mxu0
    %v2947 = vmax.f32 %v2939, 0.0
    %v2948 = vmax.f32 %v2944, 0.0
    %v2949 = vld [vmem:[%s9] sm:$0xff]
    %v2950 = vld [vmem:[%s9 + $0x8] sm:$0xff]
    %v2951 = vld [vmem:[%s9 + $0x10] sm:$0xff]
    %v2952 = vld [vmem:[%s9 + $0x18] sm:$0xff]
    %v2953 = vld [vmem:[%s9 + $0x20] sm:$0xff]
    %v2954 = vld [vmem:[%s9 + $0x28] sm:$0xff]
    %v2955 = vld [vmem:[%s9 + $0x30] sm:$0xff]
    %v2956 = vld [vmem:[%s9 + $0x38] sm:$0xff]
    %v2957 = vlaneseq
    %v2958 = vshrl.u32 %v2957, 7
    %v2959 = vsub.s32 2, %v2958
    %v2960 = vrot.slane %v123, %v2959
    %vm2961 = vcmask 523264
    %v2963 = vsel %vm2961, %v2947, 0
    %v2966 = vsel %vm2961, %v2948, 0
    %2968 = vmatprep.subr.mxu0 0.0
    %2969 = vmatpush1.msra.mxu0 0.0
    %2970 = vmatprep.subr.mxu0 0.0
    %2971 = vmatpush1.msra.mxu0 0.0
    %2972 = vmatprep.subr.mxu0 0.0
    %2973 = vmatpush1.msra.mxu0 0.0
    %2974 = vmatprep.subr.mxu0 0.0
    %2975 = vmatpush1.msra.mxu0 0.0
    %2976 = vmatprep.subr.mxu0 0.0
    %2977 = vmatpush1.msra.mxu0 0.0
    %2978 = vmatprep.subr.mxu0 0.0
    %2979 = vmatpush1.msra.mxu0 0.0
    %2980 = vmatprep.subr.mxu0 0.0
    %2981 = vmatpush1.msra.mxu0 0.0
    %2982 = vmatprep.subr.mxu0 0.0
    %2983 = vmatpush1.msra.mxu0 0.0
    %2984 = vmatprep.subr.mxu0 0.0
    %2985 = vmatpush1.msra.mxu0 %v2956
    %2986 = vmatprep.subr.mxu0 0.0
    %2987 = vmatpush1.msra.mxu0 %v2955
    %2988 = vmatprep.subr.mxu0 0.0
    %2989 = vmatpush1.msra.mxu0 %v2954
    %2990 = vmatprep.subr.mxu0 0.0
    %2991 = vmatpush1.msra.mxu0 %v2953
    %2992 = vmatprep.subr.mxu0 0.0
    %2993 = vmatpush1.msra.mxu0 %v2952
    %2994 = vmatprep.subr.mxu0 0.0
    %2995 = vmatpush1.msra.mxu0 %v2951
    %2996 = vmatprep.subr.mxu0 0.0
    %2997 = vmatpush1.msra.mxu0 %v2950
    %2998 = vmatprep.subr.mxu0 0.0
    %2999 = vmatpush1.msra.mxu0 %v2949
    %3000 = vmatprep.subr.mxu0 0.0
    %3001 = vmatpush2.msra.mxu0 0.0
    %3002 = vmatprep.subr.mxu0 0.0
    %3003 = vmatpush2.msra.mxu0 0.0
    %3004 = vmatprep.subr.mxu0 0.0
    %3005 = vmatpush2.msra.mxu0 0.0
    %3006 = vmatprep.subr.mxu0 0.0
    %3007 = vmatpush2.msra.mxu0 0.0
    %3008 = vmatprep.subr.mxu0 0.0
    %3009 = vmatpush2.msra.mxu0 0.0
    %3010 = vmatprep.subr.mxu0 0.0
    %3011 = vmatpush2.msra.mxu0 0.0
    %3012 = vmatprep.subr.mxu0 0.0
    %3013 = vmatpush2.msra.mxu0 0.0
    %3014 = vmatprep.subr.mxu0 0.0
    %3015 = vmatpush2.msra.mxu0 0.0
    %3016 = vmatprep.subr.mxu0 0.0
    %3017 = vmatpush2.msra.mxu0 0.0
    %3018 = vmatprep.subr.mxu0 0.0
    %3019 = vmatpush2.msra.mxu0 0.0
    %3020 = vmatprep.subr.mxu0 0.0
    %3021 = vmatpush2.msra.mxu0 0.0
    %3022 = vmatprep.subr.mxu0 0.0
    %3023 = vmatpush2.msra.mxu0 0.0
    %3024 = vmatprep.subr.mxu0 0.0
    %3025 = vmatpush2.msra.mxu0 0.0
    %3026 = vmatprep.subr.mxu0 0.0
    %3027 = vmatpush2.msra.mxu0 0.0
    %3028 = vmatprep.subr.mxu0 0.0
    %3029 = vmatpush2.msra.mxu0 0.0
    %3030 = vmatprep.subr.mxu0 0.0
    %3031 = vmatpush2.msra.mxu0 0.0
    %3032 = vmatprep.mubr.f32.mxu0 0.0
    %3033 = vmatmul.mubr.f32.gmra.mxu0 %v2963
    %v3034 = vpop.f32.mrf.mxu0
    %v3035 = vadd.f32 %v2960, %v3034
    %v3036 = vpop.f32.mrf.mxu0
    %3037 = vmatprep.mubr.f32.mxu0 0.0
    %3038 = vmatmul.mubr.f32.gmra.mxu0 %v2966
    %v3039 = vpop.f32.mrf.mxu0
    %v3040 = vadd.f32 %v2960, %v3039
    %v3041 = vpop.f32.mrf.mxu0
    %3042 = vdwg.mxu0
    %v3043 = vadd.f32 %v2854, %v3035
    %v3044 = vadd.f32 %v2855, %v3040
    %v3045 = vsel %vm137, %v3043, 0.0
    %3046 = vadd.xlane.f32.xlu0 %v3045
    %v3047 = vpop.xlane.xlu0 %3046
    %v3048 = vsel %vm137, %v3044, 0.0
    %3049 = vadd.xlane.f32.xlu0 %v3048
    %v3050 = vpop.xlane.xlu0 %3049
    %v3051 = vmul.f32 %v3047, 0.03125
    %v3052 = vmul.f32 %v3050, 0.03125
    %v3053 = vsub.f32 %v3043, %v3051
    %v3054 = vsub.f32 %v3044, %v3052
    %v3055 = vmul.f32 %v3053, %v3053
    %v3056 = vmul.f32 %v3054, %v3054
    %v3057 = vsel %vm137, %v3055, 0.0
    %3058 = vadd.xlane.f32.xlu0 %v3057
    %v3059 = vpop.xlane.xlu0 %3058
    %v3060 = vsel %vm137, %v3056, 0.0
    %3061 = vadd.xlane.f32.xlu0 %v3060
    %v3062 = vpop.xlane.xlu0 %3061
    %v3063 = vmul.f32 %v3059, 0.03125
    %v3064 = vmul.f32 %v3062, 0.03125
    %v3065 = vadd.f32 %v3063, 1e-05
    %v3066 = vadd.f32 %v3064, 1e-05
    %v3067 = vrsqrt.pop %v3065
    %v3068 = vrsqrt.pop %v3066
    %v3069 = vmul.f32 %v3053, %v3067
    %v3070 = vmul.f32 %v3054, %v3068
    %v3071 = vlaneseq
    %v3072 = vshrl.u32 %v3071, 7
    %v3073 = vsub.s32 7, %v3072
    %v3074 = vrot.slane %v123, %v3073
    %v3075 = vmul.f32 %v3069, %v3074
    %v3076 = vmul.f32 %v3070, %v3074
    %v3077 = vlaneseq
    %v3078 = vshrl.u32 %v3077, 7
    %v3079 = vsub.s32 0, %v3078
    %v3080 = vrot.slane %v124, %v3079
    %v3081 = vadd.f32 %v3075, %v3080
    %v3082 = vadd.f32 %v3076, %v3080
    %3083 = vst.msk [vmem:[#allocation11] sm:$0xff] %vm137, %v3081
    %3084 = vst.msk [vmem:[#allocation11 + $0x8] sm:$0xff] %vm137, %v3082
    // Predicated region
    $region66: #{tpu_custom_call.1} parent=1 // pred_check
      _
    $region67: #{tpu_custom_call.1} parent=1 // pred_check_branch
      %3086 = sbr.rel (0) target = $region69
    $region68: #{tpu_custom_call.1} parent=1 // pred_region
      %s3088 = ssub.s32 256, 256
      %3089 = vsyncadd [#allocation4], %s3088
      %s3090 = sshll.u32 [#allocation11], 4
      %s3091 = int_to_ptr.vmem [resolvable:$true] %s3090
      %3096 = dma.vmem_to_hbm [thread:$0]  %s3091, 256, %s11, [#allocation4], 128, 128, 8
    $region69: #{tpu_custom_call.1} parent=1 // pred_fallthru
      _
    // Predicated region
    $region70: #{tpu_custom_call.1} parent=1 // pred_check
      _
    $region71: #{tpu_custom_call.1} parent=1 // pred_check_branch
      %3098 = sbr.rel (0) target = $region73
    $region72: #{tpu_custom_call.1} parent=1 // pred_region
      %3099 = dma.done [#allocation4], 256
    $region73: #{tpu_custom_call.1} parent=1 // pred_fallthru
      _
    %3100 = vsyncpa [#allocation3], 1
    %3101 = vsyncpa [#allocation6], 1
    %3102 = vsyncpa [#allocation9], 1
    %3103 = vsyncpa [#allocation4], 1

</llo_original>
